<compile_context>
chip_gen: v6e
topology: v6e:2x2x1
jax: 0.10.0
libtpu: 0.0.40
codegen_flags: <defaults>
</compile_context>

<pallas_src>
import functools

import jax
import jax.numpy as jnp
from jax import lax
from jax.experimental import pallas as pl
from jax.experimental.pallas import tpu as pltpu


def _round_up(x, m):
    return (x + m - 1) // m * m


def bilstm_kernel(emb_ref, len_ref,
                  wih_f_ref, b_f_ref,
                  wih_b_ref, b_b_ref,
                  whh_ref,              # block-diagonal (2*Hp, 8*Hp) bf16
                  wout_ref, bout_ref,
                  out_ref,
                  xg_f_ref, xg_b_ref,   # (T*Bp, 4*Hp) f32 scratch per direction
                  *, seq_len, num_labels, unroll):
    """emb_ref: (T*Bp, Ep) bf16, time-major.  out_ref: (Bp, Lp) f32."""
    T = seq_len
    TB, _ = emb_ref.shape
    Bp = TB // T
    Hp = whh_ref.shape[0] // 2

    # ---- hoisted input projections: one bf16 MXU GEMM per direction, each
    # written with a single whole-slab store (no per-t stash loop). ----------
    x2d = emb_ref[...]                                            # (T*Bp, Ep) bf16
    xg_f_ref[...] = (jnp.dot(x2d, wih_f_ref[...],
                             preferred_element_type=jnp.float32) + b_f_ref[...])
    xg_b_ref[...] = (jnp.dot(x2d, wih_b_ref[...],
                             preferred_element_type=jnp.float32) + b_b_ref[...])

    last_t = len_ref[...] - 1                                     # (Bp, 1) int32
    zeros = jnp.zeros((Bp, Hp), jnp.float32)

    def gates_to_hc(g, c):
        # Each gate block is a full 128-lane tile (Hp = 128*k): no masked ops.
        i = jax.nn.sigmoid(g[:, 0:Hp])
        f = jax.nn.sigmoid(g[:, Hp:2 * Hp])
        gg = jnp.tanh(g[:, 2 * Hp:3 * Hp])
        o = jax.nn.sigmoid(g[:, 3 * Hp:4 * Hp])
        c_new = f * c + i * gg
        h_new = o * jnp.tanh(c_new)
        return h_new, c_new

    # ---- fused bidirectional recurrence (fwd at t, bwd at T-1-t) -----------
    # One block-diagonal h@W_hh matmul per step covers both directions.
    def step(t, carry):
        h_f, c_f, sel_f, h_b, c_b = carry
        off_f = pl.multiple_of(t * Bp, 8)
        off_b = pl.multiple_of((T - 1 - t) * Bp, 8)
        h_cat = jnp.concatenate([h_f, h_b], axis=-1).astype(jnp.bfloat16)
        g = jnp.dot(h_cat, whh_ref[...],
                    preferred_element_type=jnp.float32)           # (Bp, 8*Hp)
        g_f = xg_f_ref[pl.ds(off_f, Bp), :] + g[:, :4 * Hp]
        g_b = xg_b_ref[pl.ds(off_b, Bp), :] + g[:, 4 * Hp:]
        h_f, c_f = gates_to_hc(g_f, c_f)
        h_b, c_b = gates_to_hc(g_b, c_b)
        sel_f = jnp.where(last_t == t, h_f, sel_f)   # fw hidden at t == len-1
        return h_f, c_f, sel_f, h_b, c_b

    _, _, fw_sel, bw_sel, _ = lax.fori_loop(
        0, T, step, (zeros, zeros, zeros, zeros, zeros), unroll=unroll)
    # bw_sel is the backward hidden after processing t == 0 (final bwd state),
    # matching bi_fetch on an un-packed padded sequence.

    # ---- output projection: single bf16 MXU matmul --------------------------
    feats = jnp.concatenate([fw_sel, bw_sel], axis=-1).astype(jnp.bfloat16)
    logits = (jnp.dot(feats, wout_ref[...],
                      preferred_element_type=jnp.float32) + bout_ref[...])

    # ---- log_softmax masked to the real label count (f32, so -1e30 is safe) -
    col = lax.broadcasted_iota(jnp.int32, logits.shape, 1)
    logits = jnp.where(col < num_labels, logits, jnp.float32(-1e30))
    m = jnp.max(logits, axis=-1, keepdims=True)
    lse = m + jnp.log(jnp.sum(jnp.exp(logits - m), axis=-1, keepdims=True))
    out_ref[...] = logits - lse                                    # (Bp, Lp)


def bilstm_forward(inputs, lengths, params):
    """inputs: (B, T) int32 token ids, lengths: (B,) int32 true lengths."""
    B, T = inputs.shape
    E = params["embedding"].shape[1]
    H = params["w_hh_f"].shape[0]
    L = params["b_out"].shape[-1]

    Bp = _round_up(max(B, 8), 8)     # sublane-dense batch
    Ep = _round_up(E, 128)           # lane-dense embedding dim
    Hp = _round_up(H, 128)           # each gate block = full 128-lane tile(s)
    Lp = _round_up(L, 128)           # lane-dense output store

    f32, bf16 = jnp.float32, jnp.bfloat16

    def pad_gate_w(w, in_dim, in_pad):           # (in_dim, 4H) -> (in_pad, 4*Hp)
        w4 = w.reshape(in_dim, 4, H)
        out = jnp.zeros((in_pad, 4, Hp), f32).at[:in_dim, :, :H].set(w4)
        return out.reshape(in_pad, 4 * Hp)

    def pad_gate_b(b):                           # (1, 4H) -> (1, 4*Hp)
        b4 = b.reshape(1, 4, H)
        out = jnp.zeros((1, 4, Hp), f32).at[:, :, :H].set(b4)
        return out.reshape(1, 4 * Hp)

    wih_f = pad_gate_w(params["w_ih_f"], E, Ep).astype(bf16)
    wih_b = pad_gate_w(params["w_ih_b"], E, Ep).astype(bf16)
    b_f = pad_gate_b(params["b_f"])
    b_b = pad_gate_b(params["b_b"])

    # Block-diagonal recurrent weight: one (2*Hp, 8*Hp) bf16 matmul per step
    # serves both directions (zero off-diagonal blocks are free on the MXU at
    # Bp << MXU row width).
    whh_cat = jnp.zeros((2 * Hp, 8 * Hp), f32)
    whh_cat = whh_cat.at[:Hp, :4 * Hp].set(pad_gate_w(params["w_hh_f"], H, Hp))
    whh_cat = whh_cat.at[Hp:, 4 * Hp:].set(pad_gate_w(params["w_hh_b"], H, Hp))
    whh_cat = whh_cat.astype(bf16)

    w_out = jnp.zeros((2 * Hp, Lp), f32)
    w_out = w_out.at[:H, :L].set(params["w_out"][:H])
    w_out = w_out.at[Hp:Hp + H, :L].set(params["w_out"][H:])
    w_out = w_out.astype(bf16)
    b_out = jnp.zeros((1, Lp), f32).at[:, :L].set(params["b_out"])

    # Embedding lookup (glue gather) in bf16 + pad to dense tiles, time-major.
    # TODO(synk): for large B*T*E, express the time-major view via a BlockSpec
    # index_map over double-buffered T-chunks instead of materializing the
    # transposed copy in HBM.
    emb = jnp.take(params["embedding"].astype(bf16), inputs, axis=0)  # (B,T,E)
    emb_p = jnp.zeros((Bp, T, Ep), bf16).at[:B, :, :E].set(emb)
    emb_tm = jnp.transpose(emb_p, (1, 0, 2)).reshape(T * Bp, Ep)

    len_p = jnp.ones((Bp,), jnp.int32).at[:B].set(lengths.astype(jnp.int32))
    len_p = len_p.reshape(Bp, 1)

    # Cap full unroll when the per-step live set (g + gate temps for both
    # directions) would exceed the vreg budget.
    step_vregs = 2 * (Bp // 8) * (8 * Hp // 128)
    unroll = True if step_vregs <= 32 else 4

    vmem = pl.BlockSpec(memory_space=pltpu.MemorySpace.VMEM)
    kernel = functools.partial(bilstm_kernel, seq_len=T, num_labels=L,
                               unroll=unroll)
    out = pl.pallas_call(
        kernel,
        out_shape=jax.ShapeDtypeStruct((Bp, Lp), f32),
        in_specs=[vmem] * 9,
        out_specs=vmem,
        scratch_shapes=[pltpu.VMEM((T * Bp, 4 * Hp), f32),
                        pltpu.VMEM((T * Bp, 4 * Hp), f32)],
        compiler_params=pltpu.CompilerParams(
            vmem_limit_bytes=32 * 1024 * 1024),
    )(emb_tm, len_p,
      wih_f, b_f,
      wih_b, b_b,
      whh_cat,
      w_out, b_out)
    return out[:B, :L]


def reference_forward(inputs, lengths, params):
    """Pure-JAX f32 mirror of the PyTorch forward (num_layers=1, bidirectional)."""
    emb = jnp.take(params["embedding"], inputs, axis=0)
    B, T, E = emb.shape
    H = params["w_hh_f"].shape[0]

    def cell(x, h, c, wih, whh, b):
        g = x @ wih + h @ whh + b
        i = jax.nn.sigmoid(g[:, :H]); f = jax.nn.sigmoid(g[:, H:2 * H])
        gg = jnp.tanh(g[:, 2 * H:3 * H]); o = jax.nn.sigmoid(g[:, 3 * H:])
        c = f * c + i * gg
        return o * jnp.tanh(c), c

    h = c = jnp.zeros((B, H), jnp.float32)
    fw_outs = []
    for t in range(T):
        h, c = cell(emb[:, t], h, c, params["w_ih_f"], params["w_hh_f"], params["b_f"])
        fw_outs.append(h)
    fw_outs = jnp.stack(fw_outs, axis=1)
    h = c = jnp.zeros((B, H), jnp.float32)
    for t in range(T - 1, -1, -1):
        h, c = cell(emb[:, t], h, c, params["w_ih_b"], params["w_hh_b"], params["b_b"])
    fw_sel = fw_outs[jnp.arange(B), lengths - 1]
    feats = jnp.concatenate([fw_sel, h], axis=1)
    logits = feats @ params["w_out"] + params["b_out"]
    return jax.nn.log_softmax(logits, axis=-1)


def init_params(key, vocab, emb_dim, hidden, num_labels):
    ks = jax.random.split(key, 9)
    s = 0.1
    # TODO(synk): pretrained-embedding load (load_predtrained_emb_avg) replaced
    # with deterministic random init — no checkpoint files in this synthetic setup.
    return {
        "embedding": s * jax.random.normal(ks[0], (vocab, emb_dim), jnp.float32),
        "w_ih_f": s * jax.random.normal(ks[1], (emb_dim, 4 * hidden), jnp.float32),
        "w_hh_f": s * jax.random.normal(ks[2], (hidden, 4 * hidden), jnp.float32),
        "b_f":    s * jax.random.normal(ks[3], (1, 4 * hidden), jnp.float32),
        "w_ih_b": s * jax.random.normal(ks[4], (emb_dim, 4 * hidden), jnp.float32),
        "w_hh_b": s * jax.random.normal(ks[5], (hidden, 4 * hidden), jnp.float32),
        "b_b":    s * jax.random.normal(ks[6], (1, 4 * hidden), jnp.float32),
        "w_out":  s * jax.random.normal(ks[7], (2 * hidden, num_labels), jnp.float32),
        "b_out":  s * jax.random.normal(ks[8], (1, num_labels), jnp.float32),
    }


if __name__ == "__main__":
    VOCAB, EMB, HID, LABELS = 20, 32, 32, 4
    B, T = 2, 8

    key = jax.random.PRNGKey(0)
    k_in, k_p = jax.random.split(key)
    inputs = jax.random.randint(k_in, (B, T), 0, VOCAB, dtype=jnp.int32)
    lengths = jnp.array([5, 8], dtype=jnp.int32)
    params = init_params(k_p, VOCAB, EMB, HID, LABELS)

    out = bilstm_forward(inputs, lengths, params)
    out = jax.block_until_ready(out)

    ref = reference_forward(inputs, lengths, params)
    assert out.shape == (B, LABELS)
    assert jnp.allclose(out, ref, rtol=1e-2, atol=1e-2), "mismatch vs JAX reference"
    print("KERNEL_OK")
</pallas_src>

<mosaic_0001>
module attributes {stable_mosaic.version = 11 : i64} {
  func.func @bilstm_kernel(%arg0: memref<64x128xbf16, #tpu.memory_space<vmem>>, %arg1: memref<8x1xi32, #tpu.memory_space<vmem>>, %arg2: memref<128x512xbf16, #tpu.memory_space<vmem>>, %arg3: memref<1x512xf32, #tpu.memory_space<vmem>>, %arg4: memref<128x512xbf16, #tpu.memory_space<vmem>>, %arg5: memref<1x512xf32, #tpu.memory_space<vmem>>, %arg6: memref<256x1024xbf16, #tpu.memory_space<vmem>>, %arg7: memref<256x128xbf16, #tpu.memory_space<vmem>>, %arg8: memref<1x128xf32, #tpu.memory_space<vmem>>, %arg9: memref<8x128xf32, #tpu.memory_space<vmem>>, %arg10: memref<64x512xf32, #tpu.memory_space<vmem>>, %arg11: memref<64x512xf32, #tpu.memory_space<vmem>>) attributes {dimension_semantics = [], scalar_prefetch = 0 : i64, scratch_operands = 2 : i64, tpu.core_type = #tpu.core_type<tc>} {
    %c0 = arith.constant 0 : index
    %c0_0 = arith.constant 0 : index
    %0 = vector.load %arg0[%c0, %c0_0] : memref<64x128xbf16, #tpu.memory_space<vmem>>, vector<64x128xbf16>
    %c0_1 = arith.constant 0 : index
    %c0_2 = arith.constant 0 : index
    %1 = vector.load %arg2[%c0_1, %c0_2] : memref<128x512xbf16, #tpu.memory_space<vmem>>, vector<128x512xbf16>
    %cst = arith.constant dense<0.000000e+00> : vector<64x512xf32>
    %2 = tpu.matmul %0, %1, %cst {dimension_numbers = #tpu.dot_dimension_numbers<[1], [0], [0], [1], [0, 0, 1, 1], [], []>} : vector<64x128xbf16>, vector<128x512xbf16>, vector<64x512xf32> -> vector<64x512xf32>
    %c0_3 = arith.constant 0 : index
    %c0_4 = arith.constant 0 : index
    %3 = vector.load %arg3[%c0_3, %c0_4] : memref<1x512xf32, #tpu.memory_space<vmem>>, vector<1x512xf32>
    %4 = vector.broadcast %3 : vector<1x512xf32> to vector<64x512xf32>
    %5 = arith.addf %2, %4 : vector<64x512xf32>
    %c0_5 = arith.constant 0 : index
    %c0_6 = arith.constant 0 : index
    %6 = vector.load %arg10[%c0_5, %c0_6] : memref<64x512xf32, #tpu.memory_space<vmem>>, vector<64x512xf32>
    tpu.vector_store %arg10[%c0_5, %c0_6], %5 {strides = array<i32>} : memref<64x512xf32, #tpu.memory_space<vmem>>, vector<64x512xf32>,
    %c0_7 = arith.constant 0 : index
    %c0_8 = arith.constant 0 : index
    %7 = vector.load %arg4[%c0_7, %c0_8] : memref<128x512xbf16, #tpu.memory_space<vmem>>, vector<128x512xbf16>
    %cst_9 = arith.constant dense<0.000000e+00> : vector<64x512xf32>
    %8 = tpu.matmul %0, %7, %cst_9 {dimension_numbers = #tpu.dot_dimension_numbers<[1], [0], [0], [1], [0, 0, 1, 1], [], []>} : vector<64x128xbf16>, vector<128x512xbf16>, vector<64x512xf32> -> vector<64x512xf32>
    %c0_10 = arith.constant 0 : index
    %c0_11 = arith.constant 0 : index
    %9 = vector.load %arg5[%c0_10, %c0_11] : memref<1x512xf32, #tpu.memory_space<vmem>>, vector<1x512xf32>
    %10 = vector.broadcast %9 : vector<1x512xf32> to vector<64x512xf32>
    %11 = arith.addf %8, %10 : vector<64x512xf32>
    %c0_12 = arith.constant 0 : index
    %c0_13 = arith.constant 0 : index
    %12 = vector.load %arg11[%c0_12, %c0_13] : memref<64x512xf32, #tpu.memory_space<vmem>>, vector<64x512xf32>
    tpu.vector_store %arg11[%c0_12, %c0_13], %11 {strides = array<i32>} : memref<64x512xf32, #tpu.memory_space<vmem>>, vector<64x512xf32>,
    %c0_14 = arith.constant 0 : index
    %c0_15 = arith.constant 0 : index
    %13 = vector.load %arg1[%c0_14, %c0_15] : memref<8x1xi32, #tpu.memory_space<vmem>>, vector<8x1xi32>
    %c1_i32 = arith.constant 1 : i32
    %14 = vector.broadcast %c1_i32 : i32 to vector<8x1xi32>
    %15 = arith.subi %13, %14 : vector<8x1xi32>
    %cst_16 = arith.constant 0.000000e+00 : f32
    %16 = vector.broadcast %cst_16 : f32 to vector<8x128xf32>
    %c0_i32 = arith.constant 0 : i32
    %c8_i32 = arith.constant 8 : i32
    %17 = arith.muli %c0_i32, %c8_i32 : i32
    %18 = tpu.assume_multiple %17, 8 : i32
    %c7_i32 = arith.constant 7 : i32
    %19 = arith.subi %c7_i32, %c0_i32 : i32
    %c8_i32_17 = arith.constant 8 : i32
    %20 = arith.muli %19, %c8_i32_17 : i32
    %21 = tpu.assume_multiple %20, 8 : i32
    %22 = tpu.concatenate %16, %16 in 1 : vector<8x128xf32>, vector<8x128xf32> -> vector<8x256xf32>
    %23 = arith.truncf %22 : vector<8x256xf32> to vector<8x256xbf16>
    %c0_18 = arith.constant 0 : index
    %c0_19 = arith.constant 0 : index
    %24 = vector.load %arg6[%c0_18, %c0_19] : memref<256x1024xbf16, #tpu.memory_space<vmem>>, vector<256x1024xbf16>
    %cst_20 = arith.constant dense<0.000000e+00> : vector<8x1024xf32>
    %25 = tpu.matmul %23, %24, %cst_20 {dimension_numbers = #tpu.dot_dimension_numbers<[1], [0], [0], [1], [0, 0, 1, 1], [], []>} : vector<8x256xbf16>, vector<256x1024xbf16>, vector<8x1024xf32> -> vector<8x1024xf32>
    %26 = arith.index_cast %18 : i32 to index
    %c0_21 = arith.constant 0 : index
    %27 = vector.load %arg10[%26, %c0_21] : memref<64x512xf32, #tpu.memory_space<vmem>>, vector<8x512xf32>
    %28 = vector.extract_strided_slice %25 {offsets = [0, 0], sizes = [8, 512], strides = [1, 1]} : vector<8x1024xf32> to vector<8x512xf32>
    %29 = arith.addf %27, %28 : vector<8x512xf32>
    %30 = arith.index_cast %21 : i32 to index
    %c0_22 = arith.constant 0 : index
    %31 = vector.load %arg11[%30, %c0_22] : memref<64x512xf32, #tpu.memory_space<vmem>>, vector<8x512xf32>
    %32 = vector.extract_strided_slice %25 {offsets = [0, 512], sizes = [8, 512], strides = [1, 1]} : vector<8x1024xf32> to vector<8x512xf32>
    %33 = arith.addf %31, %32 : vector<8x512xf32>
    %34 = vector.extract_strided_slice %29 {offsets = [0, 0], sizes = [8, 128], strides = [1, 1]} : vector<8x512xf32> to vector<8x128xf32>
    %35 = arith.negf %34 : vector<8x128xf32>
    %36 = math.exp %35 : vector<8x128xf32>
    %cst_23 = arith.constant 1.000000e+00 : f32
    %37 = vector.broadcast %cst_23 : f32 to vector<8x128xf32>
    %38 = arith.addf %37, %36 : vector<8x128xf32>
    %39 = arith.divf %37, %38 : vector<8x128xf32>
    %40 = vector.extract_strided_slice %29 {offsets = [0, 128], sizes = [8, 128], strides = [1, 1]} : vector<8x512xf32> to vector<8x128xf32>
    %41 = arith.negf %40 : vector<8x128xf32>
    %42 = math.exp %41 : vector<8x128xf32>
    %cst_24 = arith.constant 1.000000e+00 : f32
    %43 = vector.broadcast %cst_24 : f32 to vector<8x128xf32>
    %44 = arith.addf %43, %42 : vector<8x128xf32>
    %45 = arith.divf %43, %44 : vector<8x128xf32>
    %46 = vector.extract_strided_slice %29 {offsets = [0, 256], sizes = [8, 128], strides = [1, 1]} : vector<8x512xf32> to vector<8x128xf32>
    %47 = math.tanh %46 : vector<8x128xf32>
    %48 = vector.extract_strided_slice %29 {offsets = [0, 384], sizes = [8, 128], strides = [1, 1]} : vector<8x512xf32> to vector<8x128xf32>
    %49 = arith.negf %48 : vector<8x128xf32>
    %50 = math.exp %49 : vector<8x128xf32>
    %cst_25 = arith.constant 1.000000e+00 : f32
    %51 = vector.broadcast %cst_25 : f32 to vector<8x128xf32>
    %52 = arith.addf %51, %50 : vector<8x128xf32>
    %53 = arith.divf %51, %52 : vector<8x128xf32>
    %54 = arith.mulf %45, %16 : vector<8x128xf32>
    %55 = arith.mulf %39, %47 : vector<8x128xf32>
    %56 = arith.addf %54, %55 : vector<8x128xf32>
    %57 = math.tanh %56 : vector<8x128xf32>
    %58 = arith.mulf %53, %57 : vector<8x128xf32>
    %59 = vector.extract_strided_slice %33 {offsets = [0, 0], sizes = [8, 128], strides = [1, 1]} : vector<8x512xf32> to vector<8x128xf32>
    %60 = arith.negf %59 : vector<8x128xf32>
    %61 = math.exp %60 : vector<8x128xf32>
    %cst_26 = arith.constant 1.000000e+00 : f32
    %62 = vector.broadcast %cst_26 : f32 to vector<8x128xf32>
    %63 = arith.addf %62, %61 : vector<8x128xf32>
    %64 = arith.divf %62, %63 : vector<8x128xf32>
    %65 = vector.extract_strided_slice %33 {offsets = [0, 128], sizes = [8, 128], strides = [1, 1]} : vector<8x512xf32> to vector<8x128xf32>
    %66 = arith.negf %65 : vector<8x128xf32>
    %67 = math.exp %66 : vector<8x128xf32>
    %cst_27 = arith.constant 1.000000e+00 : f32
    %68 = vector.broadcast %cst_27 : f32 to vector<8x128xf32>
    %69 = arith.addf %68, %67 : vector<8x128xf32>
    %70 = arith.divf %68, %69 : vector<8x128xf32>
    %71 = vector.extract_strided_slice %33 {offsets = [0, 256], sizes = [8, 128], strides = [1, 1]} : vector<8x512xf32> to vector<8x128xf32>
    %72 = math.tanh %71 : vector<8x128xf32>
    %73 = vector.extract_strided_slice %33 {offsets = [0, 384], sizes = [8, 128], strides = [1, 1]} : vector<8x512xf32> to vector<8x128xf32>
    %74 = arith.negf %73 : vector<8x128xf32>
    %75 = math.exp %74 : vector<8x128xf32>
    %cst_28 = arith.constant 1.000000e+00 : f32
    %76 = vector.broadcast %cst_28 : f32 to vector<8x128xf32>
    %77 = arith.addf %76, %75 : vector<8x128xf32>
    %78 = arith.divf %76, %77 : vector<8x128xf32>
    %79 = arith.mulf %70, %16 : vector<8x128xf32>
    %80 = arith.mulf %64, %72 : vector<8x128xf32>
    %81 = arith.addf %79, %80 : vector<8x128xf32>
    %82 = math.tanh %81 : vector<8x128xf32>
    %83 = arith.mulf %78, %82 : vector<8x128xf32>
    %84 = vector.broadcast %c0_i32 : i32 to vector<8x1xi32>
    %85 = arith.cmpi eq, %15, %84 : vector<8x1xi32>
    %86 = vector.shape_cast %85 : vector<8x1xi1> to vector<8x1xi1>
    %87 = vector.broadcast %86 : vector<8x1xi1> to vector<8x128xi1>
    %88 = arith.select %87, %58, %16 : vector<8x128xi1>, vector<8x128xf32>
    %c1_i32_29 = arith.constant 1 : i32
    %c8_i32_30 = arith.constant 8 : i32
    %89 = arith.muli %c1_i32_29, %c8_i32_30 : i32
    %90 = tpu.assume_multiple %89, 8 : i32
    %c7_i32_31 = arith.constant 7 : i32
    %91 = arith.subi %c7_i32_31, %c1_i32_29 : i32
    %c8_i32_32 = arith.constant 8 : i32
    %92 = arith.muli %91, %c8_i32_32 : i32
    %93 = tpu.assume_multiple %92, 8 : i32
    %94 = tpu.concatenate %58, %83 in 1 : vector<8x128xf32>, vector<8x128xf32> -> vector<8x256xf32>
    %95 = arith.truncf %94 : vector<8x256xf32> to vector<8x256xbf16>
    %c0_33 = arith.constant 0 : index
    %c0_34 = arith.constant 0 : index
    %96 = vector.load %arg6[%c0_33, %c0_34] : memref<256x1024xbf16, #tpu.memory_space<vmem>>, vector<256x1024xbf16>
    %cst_35 = arith.constant dense<0.000000e+00> : vector<8x1024xf32>
    %97 = tpu.matmul %95, %96, %cst_35 {dimension_numbers = #tpu.dot_dimension_numbers<[1], [0], [0], [1], [0, 0, 1, 1], [], []>} : vector<8x256xbf16>, vector<256x1024xbf16>, vector<8x1024xf32> -> vector<8x1024xf32>
    %98 = arith.index_cast %90 : i32 to index
    %c0_36 = arith.constant 0 : index
    %99 = vector.load %arg10[%98, %c0_36] : memref<64x512xf32, #tpu.memory_space<vmem>>, vector<8x512xf32>
    %100 = vector.extract_strided_slice %97 {offsets = [0, 0], sizes = [8, 512], strides = [1, 1]} : vector<8x1024xf32> to vector<8x512xf32>
    %101 = arith.addf %99, %100 : vector<8x512xf32>
    %102 = arith.index_cast %93 : i32 to index
    %c0_37 = arith.constant 0 : index
    %103 = vector.load %arg11[%102, %c0_37] : memref<64x512xf32, #tpu.memory_space<vmem>>, vector<8x512xf32>
    %104 = vector.extract_strided_slice %97 {offsets = [0, 512], sizes = [8, 512], strides = [1, 1]} : vector<8x1024xf32> to vector<8x512xf32>
    %105 = arith.addf %103, %104 : vector<8x512xf32>
    %106 = vector.extract_strided_slice %101 {offsets = [0, 0], sizes = [8, 128], strides = [1, 1]} : vector<8x512xf32> to vector<8x128xf32>
    %107 = arith.negf %106 : vector<8x128xf32>
    %108 = math.exp %107 : vector<8x128xf32>
    %cst_38 = arith.constant 1.000000e+00 : f32
    %109 = vector.broadcast %cst_38 : f32 to vector<8x128xf32>
    %110 = arith.addf %109, %108 : vector<8x128xf32>
    %111 = arith.divf %109, %110 : vector<8x128xf32>
    %112 = vector.extract_strided_slice %101 {offsets = [0, 128], sizes = [8, 128], strides = [1, 1]} : vector<8x512xf32> to vector<8x128xf32>
    %113 = arith.negf %112 : vector<8x128xf32>
    %114 = math.exp %113 : vector<8x128xf32>
    %cst_39 = arith.constant 1.000000e+00 : f32
    %115 = vector.broadcast %cst_39 : f32 to vector<8x128xf32>
    %116 = arith.addf %115, %114 : vector<8x128xf32>
    %117 = arith.divf %115, %116 : vector<8x128xf32>
    %118 = vector.extract_strided_slice %101 {offsets = [0, 256], sizes = [8, 128], strides = [1, 1]} : vector<8x512xf32> to vector<8x128xf32>
    %119 = math.tanh %118 : vector<8x128xf32>
    %120 = vector.extract_strided_slice %101 {offsets = [0, 384], sizes = [8, 128], strides = [1, 1]} : vector<8x512xf32> to vector<8x128xf32>
    %121 = arith.negf %120 : vector<8x128xf32>
    %122 = math.exp %121 : vector<8x128xf32>
    %cst_40 = arith.constant 1.000000e+00 : f32
    %123 = vector.broadcast %cst_40 : f32 to vector<8x128xf32>
    %124 = arith.addf %123, %122 : vector<8x128xf32>
    %125 = arith.divf %123, %124 : vector<8x128xf32>
    %126 = arith.mulf %117, %56 : vector<8x128xf32>
    %127 = arith.mulf %111, %119 : vector<8x128xf32>
    %128 = arith.addf %126, %127 : vector<8x128xf32>
    %129 = math.tanh %128 : vector<8x128xf32>
    %130 = arith.mulf %125, %129 : vector<8x128xf32>
    %131 = vector.extract_strided_slice %105 {offsets = [0, 0], sizes = [8, 128], strides = [1, 1]} : vector<8x512xf32> to vector<8x128xf32>
    %132 = arith.negf %131 : vector<8x128xf32>
    %133 = math.exp %132 : vector<8x128xf32>
    %cst_41 = arith.constant 1.000000e+00 : f32
    %134 = vector.broadcast %cst_41 : f32 to vector<8x128xf32>
    %135 = arith.addf %134, %133 : vector<8x128xf32>
    %136 = arith.divf %134, %135 : vector<8x128xf32>
    %137 = vector.extract_strided_slice %105 {offsets = [0, 128], sizes = [8, 128], strides = [1, 1]} : vector<8x512xf32> to vector<8x128xf32>
    %138 = arith.negf %137 : vector<8x128xf32>
    %139 = math.exp %138 : vector<8x128xf32>
    %cst_42 = arith.constant 1.000000e+00 : f32
    %140 = vector.broadcast %cst_42 : f32 to vector<8x128xf32>
    %141 = arith.addf %140, %139 : vector<8x128xf32>
    %142 = arith.divf %140, %141 : vector<8x128xf32>
    %143 = vector.extract_strided_slice %105 {offsets = [0, 256], sizes = [8, 128], strides = [1, 1]} : vector<8x512xf32> to vector<8x128xf32>
    %144 = math.tanh %143 : vector<8x128xf32>
    %145 = vector.extract_strided_slice %105 {offsets = [0, 384], sizes = [8, 128], strides = [1, 1]} : vector<8x512xf32> to vector<8x128xf32>
    %146 = arith.negf %145 : vector<8x128xf32>
    %147 = math.exp %146 : vector<8x128xf32>
    %cst_43 = arith.constant 1.000000e+00 : f32
    %148 = vector.broadcast %cst_43 : f32 to vector<8x128xf32>
    %149 = arith.addf %148, %147 : vector<8x128xf32>
    %150 = arith.divf %148, %149 : vector<8x128xf32>
    %151 = arith.mulf %142, %81 : vector<8x128xf32>
    %152 = arith.mulf %136, %144 : vector<8x128xf32>
    %153 = arith.addf %151, %152 : vector<8x128xf32>
    %154 = math.tanh %153 : vector<8x128xf32>
    %155 = arith.mulf %150, %154 : vector<8x128xf32>
    %156 = vector.broadcast %c1_i32_29 : i32 to vector<8x1xi32>
    %157 = arith.cmpi eq, %15, %156 : vector<8x1xi32>
    %158 = vector.shape_cast %157 : vector<8x1xi1> to vector<8x1xi1>
    %159 = vector.broadcast %158 : vector<8x1xi1> to vector<8x128xi1>
    %160 = arith.select %159, %130, %88 : vector<8x128xi1>, vector<8x128xf32>
    %c2_i32 = arith.constant 2 : i32
    %c8_i32_44 = arith.constant 8 : i32
    %161 = arith.muli %c2_i32, %c8_i32_44 : i32
    %162 = tpu.assume_multiple %161, 8 : i32
    %c7_i32_45 = arith.constant 7 : i32
    %163 = arith.subi %c7_i32_45, %c2_i32 : i32
    %c8_i32_46 = arith.constant 8 : i32
    %164 = arith.muli %163, %c8_i32_46 : i32
    %165 = tpu.assume_multiple %164, 8 : i32
    %166 = tpu.concatenate %130, %155 in 1 : vector<8x128xf32>, vector<8x128xf32> -> vector<8x256xf32>
    %167 = arith.truncf %166 : vector<8x256xf32> to vector<8x256xbf16>
    %c0_47 = arith.constant 0 : index
    %c0_48 = arith.constant 0 : index
    %168 = vector.load %arg6[%c0_47, %c0_48] : memref<256x1024xbf16, #tpu.memory_space<vmem>>, vector<256x1024xbf16>
    %cst_49 = arith.constant dense<0.000000e+00> : vector<8x1024xf32>
    %169 = tpu.matmul %167, %168, %cst_49 {dimension_numbers = #tpu.dot_dimension_numbers<[1], [0], [0], [1], [0, 0, 1, 1], [], []>} : vector<8x256xbf16>, vector<256x1024xbf16>, vector<8x1024xf32> -> vector<8x1024xf32>
    %170 = arith.index_cast %162 : i32 to index
    %c0_50 = arith.constant 0 : index
    %171 = vector.load %arg10[%170, %c0_50] : memref<64x512xf32, #tpu.memory_space<vmem>>, vector<8x512xf32>
    %172 = vector.extract_strided_slice %169 {offsets = [0, 0], sizes = [8, 512], strides = [1, 1]} : vector<8x1024xf32> to vector<8x512xf32>
    %173 = arith.addf %171, %172 : vector<8x512xf32>
    %174 = arith.index_cast %165 : i32 to index
    %c0_51 = arith.constant 0 : index
    %175 = vector.load %arg11[%174, %c0_51] : memref<64x512xf32, #tpu.memory_space<vmem>>, vector<8x512xf32>
    %176 = vector.extract_strided_slice %169 {offsets = [0, 512], sizes = [8, 512], strides = [1, 1]} : vector<8x1024xf32> to vector<8x512xf32>
    %177 = arith.addf %175, %176 : vector<8x512xf32>
    %178 = vector.extract_strided_slice %173 {offsets = [0, 0], sizes = [8, 128], strides = [1, 1]} : vector<8x512xf32> to vector<8x128xf32>
    %179 = arith.negf %178 : vector<8x128xf32>
    %180 = math.exp %179 : vector<8x128xf32>
    %cst_52 = arith.constant 1.000000e+00 : f32
    %181 = vector.broadcast %cst_52 : f32 to vector<8x128xf32>
    %182 = arith.addf %181, %180 : vector<8x128xf32>
    %183 = arith.divf %181, %182 : vector<8x128xf32>
    %184 = vector.extract_strided_slice %173 {offsets = [0, 128], sizes = [8, 128], strides = [1, 1]} : vector<8x512xf32> to vector<8x128xf32>
    %185 = arith.negf %184 : vector<8x128xf32>
    %186 = math.exp %185 : vector<8x128xf32>
    %cst_53 = arith.constant 1.000000e+00 : f32
    %187 = vector.broadcast %cst_53 : f32 to vector<8x128xf32>
    %188 = arith.addf %187, %186 : vector<8x128xf32>
    %189 = arith.divf %187, %188 : vector<8x128xf32>
    %190 = vector.extract_strided_slice %173 {offsets = [0, 256], sizes = [8, 128], strides = [1, 1]} : vector<8x512xf32> to vector<8x128xf32>
    %191 = math.tanh %190 : vector<8x128xf32>
    %192 = vector.extract_strided_slice %173 {offsets = [0, 384], sizes = [8, 128], strides = [1, 1]} : vector<8x512xf32> to vector<8x128xf32>
    %193 = arith.negf %192 : vector<8x128xf32>
    %194 = math.exp %193 : vector<8x128xf32>
    %cst_54 = arith.constant 1.000000e+00 : f32
    %195 = vector.broadcast %cst_54 : f32 to vector<8x128xf32>
    %196 = arith.addf %195, %194 : vector<8x128xf32>
    %197 = arith.divf %195, %196 : vector<8x128xf32>
    %198 = arith.mulf %189, %128 : vector<8x128xf32>
    %199 = arith.mulf %183, %191 : vector<8x128xf32>
    %200 = arith.addf %198, %199 : vector<8x128xf32>
    %201 = math.tanh %200 : vector<8x128xf32>
    %202 = arith.mulf %197, %201 : vector<8x128xf32>
    %203 = vector.extract_strided_slice %177 {offsets = [0, 0], sizes = [8, 128], strides = [1, 1]} : vector<8x512xf32> to vector<8x128xf32>
    %204 = arith.negf %203 : vector<8x128xf32>
    %205 = math.exp %204 : vector<8x128xf32>
    %cst_55 = arith.constant 1.000000e+00 : f32
    %206 = vector.broadcast %cst_55 : f32 to vector<8x128xf32>
    %207 = arith.addf %206, %205 : vector<8x128xf32>
    %208 = arith.divf %206, %207 : vector<8x128xf32>
    %209 = vector.extract_strided_slice %177 {offsets = [0, 128], sizes = [8, 128], strides = [1, 1]} : vector<8x512xf32> to vector<8x128xf32>
    %210 = arith.negf %209 : vector<8x128xf32>
    %211 = math.exp %210 : vector<8x128xf32>
    %cst_56 = arith.constant 1.000000e+00 : f32
    %212 = vector.broadcast %cst_56 : f32 to vector<8x128xf32>
    %213 = arith.addf %212, %211 : vector<8x128xf32>
    %214 = arith.divf %212, %213 : vector<8x128xf32>
    %215 = vector.extract_strided_slice %177 {offsets = [0, 256], sizes = [8, 128], strides = [1, 1]} : vector<8x512xf32> to vector<8x128xf32>
    %216 = math.tanh %215 : vector<8x128xf32>
    %217 = vector.extract_strided_slice %177 {offsets = [0, 384], sizes = [8, 128], strides = [1, 1]} : vector<8x512xf32> to vector<8x128xf32>
    %218 = arith.negf %217 : vector<8x128xf32>
    %219 = math.exp %218 : vector<8x128xf32>
    %cst_57 = arith.constant 1.000000e+00 : f32
    %220 = vector.broadcast %cst_57 : f32 to vector<8x128xf32>
    %221 = arith.addf %220, %219 : vector<8x128xf32>
    %222 = arith.divf %220, %221 : vector<8x128xf32>
    %223 = arith.mulf %214, %153 : vector<8x128xf32>
    %224 = arith.mulf %208, %216 : vector<8x128xf32>
    %225 = arith.addf %223, %224 : vector<8x128xf32>
    %226 = math.tanh %225 : vector<8x128xf32>
    %227 = arith.mulf %222, %226 : vector<8x128xf32>
    %228 = vector.broadcast %c2_i32 : i32 to vector<8x1xi32>
    %229 = arith.cmpi eq, %15, %228 : vector<8x1xi32>
    %230 = vector.shape_cast %229 : vector<8x1xi1> to vector<8x1xi1>
    %231 = vector.broadcast %230 : vector<8x1xi1> to vector<8x128xi1>
    %232 = arith.select %231, %202, %160 : vector<8x128xi1>, vector<8x128xf32>
    %c3_i32 = arith.constant 3 : i32
    %c8_i32_58 = arith.constant 8 : i32
    %233 = arith.muli %c3_i32, %c8_i32_58 : i32
    %234 = tpu.assume_multiple %233, 8 : i32
    %c7_i32_59 = arith.constant 7 : i32
    %235 = arith.subi %c7_i32_59, %c3_i32 : i32
    %c8_i32_60 = arith.constant 8 : i32
    %236 = arith.muli %235, %c8_i32_60 : i32
    %237 = tpu.assume_multiple %236, 8 : i32
    %238 = tpu.concatenate %202, %227 in 1 : vector<8x128xf32>, vector<8x128xf32> -> vector<8x256xf32>
    %239 = arith.truncf %238 : vector<8x256xf32> to vector<8x256xbf16>
    %c0_61 = arith.constant 0 : index
    %c0_62 = arith.constant 0 : index
    %240 = vector.load %arg6[%c0_61, %c0_62] : memref<256x1024xbf16, #tpu.memory_space<vmem>>, vector<256x1024xbf16>
    %cst_63 = arith.constant dense<0.000000e+00> : vector<8x1024xf32>
    %241 = tpu.matmul %239, %240, %cst_63 {dimension_numbers = #tpu.dot_dimension_numbers<[1], [0], [0], [1], [0, 0, 1, 1], [], []>} : vector<8x256xbf16>, vector<256x1024xbf16>, vector<8x1024xf32> -> vector<8x1024xf32>
    %242 = arith.index_cast %234 : i32 to index
    %c0_64 = arith.constant 0 : index
    %243 = vector.load %arg10[%242, %c0_64] : memref<64x512xf32, #tpu.memory_space<vmem>>, vector<8x512xf32>
    %244 = vector.extract_strided_slice %241 {offsets = [0, 0], sizes = [8, 512], strides = [1, 1]} : vector<8x1024xf32> to vector<8x512xf32>
    %245 = arith.addf %243, %244 : vector<8x512xf32>
    %246 = arith.index_cast %237 : i32 to index
    %c0_65 = arith.constant 0 : index
    %247 = vector.load %arg11[%246, %c0_65] : memref<64x512xf32, #tpu.memory_space<vmem>>, vector<8x512xf32>
    %248 = vector.extract_strided_slice %241 {offsets = [0, 512], sizes = [8, 512], strides = [1, 1]} : vector<8x1024xf32> to vector<8x512xf32>
    %249 = arith.addf %247, %248 : vector<8x512xf32>
    %250 = vector.extract_strided_slice %245 {offsets = [0, 0], sizes = [8, 128], strides = [1, 1]} : vector<8x512xf32> to vector<8x128xf32>
    %251 = arith.negf %250 : vector<8x128xf32>
    %252 = math.exp %251 : vector<8x128xf32>
    %cst_66 = arith.constant 1.000000e+00 : f32
    %253 = vector.broadcast %cst_66 : f32 to vector<8x128xf32>
    %254 = arith.addf %253, %252 : vector<8x128xf32>
    %255 = arith.divf %253, %254 : vector<8x128xf32>
    %256 = vector.extract_strided_slice %245 {offsets = [0, 128], sizes = [8, 128], strides = [1, 1]} : vector<8x512xf32> to vector<8x128xf32>
    %257 = arith.negf %256 : vector<8x128xf32>
    %258 = math.exp %257 : vector<8x128xf32>
    %cst_67 = arith.constant 1.000000e+00 : f32
    %259 = vector.broadcast %cst_67 : f32 to vector<8x128xf32>
    %260 = arith.addf %259, %258 : vector<8x128xf32>
    %261 = arith.divf %259, %260 : vector<8x128xf32>
    %262 = vector.extract_strided_slice %245 {offsets = [0, 256], sizes = [8, 128], strides = [1, 1]} : vector<8x512xf32> to vector<8x128xf32>
    %263 = math.tanh %262 : vector<8x128xf32>
    %264 = vector.extract_strided_slice %245 {offsets = [0, 384], sizes = [8, 128], strides = [1, 1]} : vector<8x512xf32> to vector<8x128xf32>
    %265 = arith.negf %264 : vector<8x128xf32>
    %266 = math.exp %265 : vector<8x128xf32>
    %cst_68 = arith.constant 1.000000e+00 : f32
    %267 = vector.broadcast %cst_68 : f32 to vector<8x128xf32>
    %268 = arith.addf %267, %266 : vector<8x128xf32>
    %269 = arith.divf %267, %268 : vector<8x128xf32>
    %270 = arith.mulf %261, %200 : vector<8x128xf32>
    %271 = arith.mulf %255, %263 : vector<8x128xf32>
    %272 = arith.addf %270, %271 : vector<8x128xf32>
    %273 = math.tanh %272 : vector<8x128xf32>
    %274 = arith.mulf %269, %273 : vector<8x128xf32>
    %275 = vector.extract_strided_slice %249 {offsets = [0, 0], sizes = [8, 128], strides = [1, 1]} : vector<8x512xf32> to vector<8x128xf32>
    %276 = arith.negf %275 : vector<8x128xf32>
    %277 = math.exp %276 : vector<8x128xf32>
    %cst_69 = arith.constant 1.000000e+00 : f32
    %278 = vector.broadcast %cst_69 : f32 to vector<8x128xf32>
    %279 = arith.addf %278, %277 : vector<8x128xf32>
    %280 = arith.divf %278, %279 : vector<8x128xf32>
    %281 = vector.extract_strided_slice %249 {offsets = [0, 128], sizes = [8, 128], strides = [1, 1]} : vector<8x512xf32> to vector<8x128xf32>
    %282 = arith.negf %281 : vector<8x128xf32>
    %283 = math.exp %282 : vector<8x128xf32>
    %cst_70 = arith.constant 1.000000e+00 : f32
    %284 = vector.broadcast %cst_70 : f32 to vector<8x128xf32>
    %285 = arith.addf %284, %283 : vector<8x128xf32>
    %286 = arith.divf %284, %285 : vector<8x128xf32>
    %287 = vector.extract_strided_slice %249 {offsets = [0, 256], sizes = [8, 128], strides = [1, 1]} : vector<8x512xf32> to vector<8x128xf32>
    %288 = math.tanh %287 : vector<8x128xf32>
    %289 = vector.extract_strided_slice %249 {offsets = [0, 384], sizes = [8, 128], strides = [1, 1]} : vector<8x512xf32> to vector<8x128xf32>
    %290 = arith.negf %289 : vector<8x128xf32>
    %291 = math.exp %290 : vector<8x128xf32>
    %cst_71 = arith.constant 1.000000e+00 : f32
    %292 = vector.broadcast %cst_71 : f32 to vector<8x128xf32>
    %293 = arith.addf %292, %291 : vector<8x128xf32>
    %294 = arith.divf %292, %293 : vector<8x128xf32>
    %295 = arith.mulf %286, %225 : vector<8x128xf32>
    %296 = arith.mulf %280, %288 : vector<8x128xf32>
    %297 = arith.addf %295, %296 : vector<8x128xf32>
    %298 = math.tanh %297 : vector<8x128xf32>
    %299 = arith.mulf %294, %298 : vector<8x128xf32>
    %300 = vector.broadcast %c3_i32 : i32 to vector<8x1xi32>
    %301 = arith.cmpi eq, %15, %300 : vector<8x1xi32>
    %302 = vector.shape_cast %301 : vector<8x1xi1> to vector<8x1xi1>
    %303 = vector.broadcast %302 : vector<8x1xi1> to vector<8x128xi1>
    %304 = arith.select %303, %274, %232 : vector<8x128xi1>, vector<8x128xf32>
    %c4_i32 = arith.constant 4 : i32
    %c8_i32_72 = arith.constant 8 : i32
    %305 = arith.muli %c4_i32, %c8_i32_72 : i32
    %306 = tpu.assume_multiple %305, 8 : i32
    %c7_i32_73 = arith.constant 7 : i32
    %307 = arith.subi %c7_i32_73, %c4_i32 : i32
    %c8_i32_74 = arith.constant 8 : i32
    %308 = arith.muli %307, %c8_i32_74 : i32
    %309 = tpu.assume_multiple %308, 8 : i32
    %310 = tpu.concatenate %274, %299 in 1 : vector<8x128xf32>, vector<8x128xf32> -> vector<8x256xf32>
    %311 = arith.truncf %310 : vector<8x256xf32> to vector<8x256xbf16>
    %c0_75 = arith.constant 0 : index
    %c0_76 = arith.constant 0 : index
    %312 = vector.load %arg6[%c0_75, %c0_76] : memref<256x1024xbf16, #tpu.memory_space<vmem>>, vector<256x1024xbf16>
    %cst_77 = arith.constant dense<0.000000e+00> : vector<8x1024xf32>
    %313 = tpu.matmul %311, %312, %cst_77 {dimension_numbers = #tpu.dot_dimension_numbers<[1], [0], [0], [1], [0, 0, 1, 1], [], []>} : vector<8x256xbf16>, vector<256x1024xbf16>, vector<8x1024xf32> -> vector<8x1024xf32>
    %314 = arith.index_cast %306 : i32 to index
    %c0_78 = arith.constant 0 : index
    %315 = vector.load %arg10[%314, %c0_78] : memref<64x512xf32, #tpu.memory_space<vmem>>, vector<8x512xf32>
    %316 = vector.extract_strided_slice %313 {offsets = [0, 0], sizes = [8, 512], strides = [1, 1]} : vector<8x1024xf32> to vector<8x512xf32>
    %317 = arith.addf %315, %316 : vector<8x512xf32>
    %318 = arith.index_cast %309 : i32 to index
    %c0_79 = arith.constant 0 : index
    %319 = vector.load %arg11[%318, %c0_79] : memref<64x512xf32, #tpu.memory_space<vmem>>, vector<8x512xf32>
    %320 = vector.extract_strided_slice %313 {offsets = [0, 512], sizes = [8, 512], strides = [1, 1]} : vector<8x1024xf32> to vector<8x512xf32>
    %321 = arith.addf %319, %320 : vector<8x512xf32>
    %322 = vector.extract_strided_slice %317 {offsets = [0, 0], sizes = [8, 128], strides = [1, 1]} : vector<8x512xf32> to vector<8x128xf32>
    %323 = arith.negf %322 : vector<8x128xf32>
    %324 = math.exp %323 : vector<8x128xf32>
    %cst_80 = arith.constant 1.000000e+00 : f32
    %325 = vector.broadcast %cst_80 : f32 to vector<8x128xf32>
    %326 = arith.addf %325, %324 : vector<8x128xf32>
    %327 = arith.divf %325, %326 : vector<8x128xf32>
    %328 = vector.extract_strided_slice %317 {offsets = [0, 128], sizes = [8, 128], strides = [1, 1]} : vector<8x512xf32> to vector<8x128xf32>
    %329 = arith.negf %328 : vector<8x128xf32>
    %330 = math.exp %329 : vector<8x128xf32>
    %cst_81 = arith.constant 1.000000e+00 : f32
    %331 = vector.broadcast %cst_81 : f32 to vector<8x128xf32>
    %332 = arith.addf %331, %330 : vector<8x128xf32>
    %333 = arith.divf %331, %332 : vector<8x128xf32>
    %334 = vector.extract_strided_slice %317 {offsets = [0, 256], sizes = [8, 128], strides = [1, 1]} : vector<8x512xf32> to vector<8x128xf32>
    %335 = math.tanh %334 : vector<8x128xf32>
    %336 = vector.extract_strided_slice %317 {offsets = [0, 384], sizes = [8, 128], strides = [1, 1]} : vector<8x512xf32> to vector<8x128xf32>
    %337 = arith.negf %336 : vector<8x128xf32>
    %338 = math.exp %337 : vector<8x128xf32>
    %cst_82 = arith.constant 1.000000e+00 : f32
    %339 = vector.broadcast %cst_82 : f32 to vector<8x128xf32>
    %340 = arith.addf %339, %338 : vector<8x128xf32>
    %341 = arith.divf %339, %340 : vector<8x128xf32>
    %342 = arith.mulf %333, %272 : vector<8x128xf32>
    %343 = arith.mulf %327, %335 : vector<8x128xf32>
    %344 = arith.addf %342, %343 : vector<8x128xf32>
    %345 = math.tanh %344 : vector<8x128xf32>
    %346 = arith.mulf %341, %345 : vector<8x128xf32>
    %347 = vector.extract_strided_slice %321 {offsets = [0, 0], sizes = [8, 128], strides = [1, 1]} : vector<8x512xf32> to vector<8x128xf32>
    %348 = arith.negf %347 : vector<8x128xf32>
    %349 = math.exp %348 : vector<8x128xf32>
    %cst_83 = arith.constant 1.000000e+00 : f32
    %350 = vector.broadcast %cst_83 : f32 to vector<8x128xf32>
    %351 = arith.addf %350, %349 : vector<8x128xf32>
    %352 = arith.divf %350, %351 : vector<8x128xf32>
    %353 = vector.extract_strided_slice %321 {offsets = [0, 128], sizes = [8, 128], strides = [1, 1]} : vector<8x512xf32> to vector<8x128xf32>
    %354 = arith.negf %353 : vector<8x128xf32>
    %355 = math.exp %354 : vector<8x128xf32>
    %cst_84 = arith.constant 1.000000e+00 : f32
    %356 = vector.broadcast %cst_84 : f32 to vector<8x128xf32>
    %357 = arith.addf %356, %355 : vector<8x128xf32>
    %358 = arith.divf %356, %357 : vector<8x128xf32>
    %359 = vector.extract_strided_slice %321 {offsets = [0, 256], sizes = [8, 128], strides = [1, 1]} : vector<8x512xf32> to vector<8x128xf32>
    %360 = math.tanh %359 : vector<8x128xf32>
    %361 = vector.extract_strided_slice %321 {offsets = [0, 384], sizes = [8, 128], strides = [1, 1]} : vector<8x512xf32> to vector<8x128xf32>
    %362 = arith.negf %361 : vector<8x128xf32>
    %363 = math.exp %362 : vector<8x128xf32>
    %cst_85 = arith.constant 1.000000e+00 : f32
    %364 = vector.broadcast %cst_85 : f32 to vector<8x128xf32>
    %365 = arith.addf %364, %363 : vector<8x128xf32>
    %366 = arith.divf %364, %365 : vector<8x128xf32>
    %367 = arith.mulf %358, %297 : vector<8x128xf32>
    %368 = arith.mulf %352, %360 : vector<8x128xf32>
    %369 = arith.addf %367, %368 : vector<8x128xf32>
    %370 = math.tanh %369 : vector<8x128xf32>
    %371 = arith.mulf %366, %370 : vector<8x128xf32>
    %372 = vector.broadcast %c4_i32 : i32 to vector<8x1xi32>
    %373 = arith.cmpi eq, %15, %372 : vector<8x1xi32>
    %374 = vector.shape_cast %373 : vector<8x1xi1> to vector<8x1xi1>
    %375 = vector.broadcast %374 : vector<8x1xi1> to vector<8x128xi1>
    %376 = arith.select %375, %346, %304 : vector<8x128xi1>, vector<8x128xf32>
    %c5_i32 = arith.constant 5 : i32
    %c8_i32_86 = arith.constant 8 : i32
    %377 = arith.muli %c5_i32, %c8_i32_86 : i32
    %378 = tpu.assume_multiple %377, 8 : i32
    %c7_i32_87 = arith.constant 7 : i32
    %379 = arith.subi %c7_i32_87, %c5_i32 : i32
    %c8_i32_88 = arith.constant 8 : i32
    %380 = arith.muli %379, %c8_i32_88 : i32
    %381 = tpu.assume_multiple %380, 8 : i32
    %382 = tpu.concatenate %346, %371 in 1 : vector<8x128xf32>, vector<8x128xf32> -> vector<8x256xf32>
    %383 = arith.truncf %382 : vector<8x256xf32> to vector<8x256xbf16>
    %c0_89 = arith.constant 0 : index
    %c0_90 = arith.constant 0 : index
    %384 = vector.load %arg6[%c0_89, %c0_90] : memref<256x1024xbf16, #tpu.memory_space<vmem>>, vector<256x1024xbf16>
    %cst_91 = arith.constant dense<0.000000e+00> : vector<8x1024xf32>
    %385 = tpu.matmul %383, %384, %cst_91 {dimension_numbers = #tpu.dot_dimension_numbers<[1], [0], [0], [1], [0, 0, 1, 1], [], []>} : vector<8x256xbf16>, vector<256x1024xbf16>, vector<8x1024xf32> -> vector<8x1024xf32>
    %386 = arith.index_cast %378 : i32 to index
    %c0_92 = arith.constant 0 : index
    %387 = vector.load %arg10[%386, %c0_92] : memref<64x512xf32, #tpu.memory_space<vmem>>, vector<8x512xf32>
    %388 = vector.extract_strided_slice %385 {offsets = [0, 0], sizes = [8, 512], strides = [1, 1]} : vector<8x1024xf32> to vector<8x512xf32>
    %389 = arith.addf %387, %388 : vector<8x512xf32>
    %390 = arith.index_cast %381 : i32 to index
    %c0_93 = arith.constant 0 : index
    %391 = vector.load %arg11[%390, %c0_93] : memref<64x512xf32, #tpu.memory_space<vmem>>, vector<8x512xf32>
    %392 = vector.extract_strided_slice %385 {offsets = [0, 512], sizes = [8, 512], strides = [1, 1]} : vector<8x1024xf32> to vector<8x512xf32>
    %393 = arith.addf %391, %392 : vector<8x512xf32>
    %394 = vector.extract_strided_slice %389 {offsets = [0, 0], sizes = [8, 128], strides = [1, 1]} : vector<8x512xf32> to vector<8x128xf32>
    %395 = arith.negf %394 : vector<8x128xf32>
    %396 = math.exp %395 : vector<8x128xf32>
    %cst_94 = arith.constant 1.000000e+00 : f32
    %397 = vector.broadcast %cst_94 : f32 to vector<8x128xf32>
    %398 = arith.addf %397, %396 : vector<8x128xf32>
    %399 = arith.divf %397, %398 : vector<8x128xf32>
    %400 = vector.extract_strided_slice %389 {offsets = [0, 128], sizes = [8, 128], strides = [1, 1]} : vector<8x512xf32> to vector<8x128xf32>
    %401 = arith.negf %400 : vector<8x128xf32>
    %402 = math.exp %401 : vector<8x128xf32>
    %cst_95 = arith.constant 1.000000e+00 : f32
    %403 = vector.broadcast %cst_95 : f32 to vector<8x128xf32>
    %404 = arith.addf %403, %402 : vector<8x128xf32>
    %405 = arith.divf %403, %404 : vector<8x128xf32>
    %406 = vector.extract_strided_slice %389 {offsets = [0, 256], sizes = [8, 128], strides = [1, 1]} : vector<8x512xf32> to vector<8x128xf32>
    %407 = math.tanh %406 : vector<8x128xf32>
    %408 = vector.extract_strided_slice %389 {offsets = [0, 384], sizes = [8, 128], strides = [1, 1]} : vector<8x512xf32> to vector<8x128xf32>
    %409 = arith.negf %408 : vector<8x128xf32>
    %410 = math.exp %409 : vector<8x128xf32>
    %cst_96 = arith.constant 1.000000e+00 : f32
    %411 = vector.broadcast %cst_96 : f32 to vector<8x128xf32>
    %412 = arith.addf %411, %410 : vector<8x128xf32>
    %413 = arith.divf %411, %412 : vector<8x128xf32>
    %414 = arith.mulf %405, %344 : vector<8x128xf32>
    %415 = arith.mulf %399, %407 : vector<8x128xf32>
    %416 = arith.addf %414, %415 : vector<8x128xf32>
    %417 = math.tanh %416 : vector<8x128xf32>
    %418 = arith.mulf %413, %417 : vector<8x128xf32>
    %419 = vector.extract_strided_slice %393 {offsets = [0, 0], sizes = [8, 128], strides = [1, 1]} : vector<8x512xf32> to vector<8x128xf32>
    %420 = arith.negf %419 : vector<8x128xf32>
    %421 = math.exp %420 : vector<8x128xf32>
    %cst_97 = arith.constant 1.000000e+00 : f32
    %422 = vector.broadcast %cst_97 : f32 to vector<8x128xf32>
    %423 = arith.addf %422, %421 : vector<8x128xf32>
    %424 = arith.divf %422, %423 : vector<8x128xf32>
    %425 = vector.extract_strided_slice %393 {offsets = [0, 128], sizes = [8, 128], strides = [1, 1]} : vector<8x512xf32> to vector<8x128xf32>
    %426 = arith.negf %425 : vector<8x128xf32>
    %427 = math.exp %426 : vector<8x128xf32>
    %cst_98 = arith.constant 1.000000e+00 : f32
    %428 = vector.broadcast %cst_98 : f32 to vector<8x128xf32>
    %429 = arith.addf %428, %427 : vector<8x128xf32>
    %430 = arith.divf %428, %429 : vector<8x128xf32>
    %431 = vector.extract_strided_slice %393 {offsets = [0, 256], sizes = [8, 128], strides = [1, 1]} : vector<8x512xf32> to vector<8x128xf32>
    %432 = math.tanh %431 : vector<8x128xf32>
    %433 = vector.extract_strided_slice %393 {offsets = [0, 384], sizes = [8, 128], strides = [1, 1]} : vector<8x512xf32> to vector<8x128xf32>
    %434 = arith.negf %433 : vector<8x128xf32>
    %435 = math.exp %434 : vector<8x128xf32>
    %cst_99 = arith.constant 1.000000e+00 : f32
    %436 = vector.broadcast %cst_99 : f32 to vector<8x128xf32>
    %437 = arith.addf %436, %435 : vector<8x128xf32>
    %438 = arith.divf %436, %437 : vector<8x128xf32>
    %439 = arith.mulf %430, %369 : vector<8x128xf32>
    %440 = arith.mulf %424, %432 : vector<8x128xf32>
    %441 = arith.addf %439, %440 : vector<8x128xf32>
    %442 = math.tanh %441 : vector<8x128xf32>
    %443 = arith.mulf %438, %442 : vector<8x128xf32>
    %444 = vector.broadcast %c5_i32 : i32 to vector<8x1xi32>
    %445 = arith.cmpi eq, %15, %444 : vector<8x1xi32>
    %446 = vector.shape_cast %445 : vector<8x1xi1> to vector<8x1xi1>
    %447 = vector.broadcast %446 : vector<8x1xi1> to vector<8x128xi1>
    %448 = arith.select %447, %418, %376 : vector<8x128xi1>, vector<8x128xf32>
    %c6_i32 = arith.constant 6 : i32
    %c8_i32_100 = arith.constant 8 : i32
    %449 = arith.muli %c6_i32, %c8_i32_100 : i32
    %450 = tpu.assume_multiple %449, 8 : i32
    %c7_i32_101 = arith.constant 7 : i32
    %451 = arith.subi %c7_i32_101, %c6_i32 : i32
    %c8_i32_102 = arith.constant 8 : i32
    %452 = arith.muli %451, %c8_i32_102 : i32
    %453 = tpu.assume_multiple %452, 8 : i32
    %454 = tpu.concatenate %418, %443 in 1 : vector<8x128xf32>, vector<8x128xf32> -> vector<8x256xf32>
    %455 = arith.truncf %454 : vector<8x256xf32> to vector<8x256xbf16>
    %c0_103 = arith.constant 0 : index
    %c0_104 = arith.constant 0 : index
    %456 = vector.load %arg6[%c0_103, %c0_104] : memref<256x1024xbf16, #tpu.memory_space<vmem>>, vector<256x1024xbf16>
    %cst_105 = arith.constant dense<0.000000e+00> : vector<8x1024xf32>
    %457 = tpu.matmul %455, %456, %cst_105 {dimension_numbers = #tpu.dot_dimension_numbers<[1], [0], [0], [1], [0, 0, 1, 1], [], []>} : vector<8x256xbf16>, vector<256x1024xbf16>, vector<8x1024xf32> -> vector<8x1024xf32>
    %458 = arith.index_cast %450 : i32 to index
    %c0_106 = arith.constant 0 : index
    %459 = vector.load %arg10[%458, %c0_106] : memref<64x512xf32, #tpu.memory_space<vmem>>, vector<8x512xf32>
    %460 = vector.extract_strided_slice %457 {offsets = [0, 0], sizes = [8, 512], strides = [1, 1]} : vector<8x1024xf32> to vector<8x512xf32>
    %461 = arith.addf %459, %460 : vector<8x512xf32>
    %462 = arith.index_cast %453 : i32 to index
    %c0_107 = arith.constant 0 : index
    %463 = vector.load %arg11[%462, %c0_107] : memref<64x512xf32, #tpu.memory_space<vmem>>, vector<8x512xf32>
    %464 = vector.extract_strided_slice %457 {offsets = [0, 512], sizes = [8, 512], strides = [1, 1]} : vector<8x1024xf32> to vector<8x512xf32>
    %465 = arith.addf %463, %464 : vector<8x512xf32>
    %466 = vector.extract_strided_slice %461 {offsets = [0, 0], sizes = [8, 128], strides = [1, 1]} : vector<8x512xf32> to vector<8x128xf32>
    %467 = arith.negf %466 : vector<8x128xf32>
    %468 = math.exp %467 : vector<8x128xf32>
    %cst_108 = arith.constant 1.000000e+00 : f32
    %469 = vector.broadcast %cst_108 : f32 to vector<8x128xf32>
    %470 = arith.addf %469, %468 : vector<8x128xf32>
    %471 = arith.divf %469, %470 : vector<8x128xf32>
    %472 = vector.extract_strided_slice %461 {offsets = [0, 128], sizes = [8, 128], strides = [1, 1]} : vector<8x512xf32> to vector<8x128xf32>
    %473 = arith.negf %472 : vector<8x128xf32>
    %474 = math.exp %473 : vector<8x128xf32>
    %cst_109 = arith.constant 1.000000e+00 : f32
    %475 = vector.broadcast %cst_109 : f32 to vector<8x128xf32>
    %476 = arith.addf %475, %474 : vector<8x128xf32>
    %477 = arith.divf %475, %476 : vector<8x128xf32>
    %478 = vector.extract_strided_slice %461 {offsets = [0, 256], sizes = [8, 128], strides = [1, 1]} : vector<8x512xf32> to vector<8x128xf32>
    %479 = math.tanh %478 : vector<8x128xf32>
    %480 = vector.extract_strided_slice %461 {offsets = [0, 384], sizes = [8, 128], strides = [1, 1]} : vector<8x512xf32> to vector<8x128xf32>
    %481 = arith.negf %480 : vector<8x128xf32>
    %482 = math.exp %481 : vector<8x128xf32>
    %cst_110 = arith.constant 1.000000e+00 : f32
    %483 = vector.broadcast %cst_110 : f32 to vector<8x128xf32>
    %484 = arith.addf %483, %482 : vector<8x128xf32>
    %485 = arith.divf %483, %484 : vector<8x128xf32>
    %486 = arith.mulf %477, %416 : vector<8x128xf32>
    %487 = arith.mulf %471, %479 : vector<8x128xf32>
    %488 = arith.addf %486, %487 : vector<8x128xf32>
    %489 = math.tanh %488 : vector<8x128xf32>
    %490 = arith.mulf %485, %489 : vector<8x128xf32>
    %491 = vector.extract_strided_slice %465 {offsets = [0, 0], sizes = [8, 128], strides = [1, 1]} : vector<8x512xf32> to vector<8x128xf32>
    %492 = arith.negf %491 : vector<8x128xf32>
    %493 = math.exp %492 : vector<8x128xf32>
    %cst_111 = arith.constant 1.000000e+00 : f32
    %494 = vector.broadcast %cst_111 : f32 to vector<8x128xf32>
    %495 = arith.addf %494, %493 : vector<8x128xf32>
    %496 = arith.divf %494, %495 : vector<8x128xf32>
    %497 = vector.extract_strided_slice %465 {offsets = [0, 128], sizes = [8, 128], strides = [1, 1]} : vector<8x512xf32> to vector<8x128xf32>
    %498 = arith.negf %497 : vector<8x128xf32>
    %499 = math.exp %498 : vector<8x128xf32>
    %cst_112 = arith.constant 1.000000e+00 : f32
    %500 = vector.broadcast %cst_112 : f32 to vector<8x128xf32>
    %501 = arith.addf %500, %499 : vector<8x128xf32>
    %502 = arith.divf %500, %501 : vector<8x128xf32>
    %503 = vector.extract_strided_slice %465 {offsets = [0, 256], sizes = [8, 128], strides = [1, 1]} : vector<8x512xf32> to vector<8x128xf32>
    %504 = math.tanh %503 : vector<8x128xf32>
    %505 = vector.extract_strided_slice %465 {offsets = [0, 384], sizes = [8, 128], strides = [1, 1]} : vector<8x512xf32> to vector<8x128xf32>
    %506 = arith.negf %505 : vector<8x128xf32>
    %507 = math.exp %506 : vector<8x128xf32>
    %cst_113 = arith.constant 1.000000e+00 : f32
    %508 = vector.broadcast %cst_113 : f32 to vector<8x128xf32>
    %509 = arith.addf %508, %507 : vector<8x128xf32>
    %510 = arith.divf %508, %509 : vector<8x128xf32>
    %511 = arith.mulf %502, %441 : vector<8x128xf32>
    %512 = arith.mulf %496, %504 : vector<8x128xf32>
    %513 = arith.addf %511, %512 : vector<8x128xf32>
    %514 = math.tanh %513 : vector<8x128xf32>
    %515 = arith.mulf %510, %514 : vector<8x128xf32>
    %516 = vector.broadcast %c6_i32 : i32 to vector<8x1xi32>
    %517 = arith.cmpi eq, %15, %516 : vector<8x1xi32>
    %518 = vector.shape_cast %517 : vector<8x1xi1> to vector<8x1xi1>
    %519 = vector.broadcast %518 : vector<8x1xi1> to vector<8x128xi1>
    %520 = arith.select %519, %490, %448 : vector<8x128xi1>, vector<8x128xf32>
    %c7_i32_114 = arith.constant 7 : i32
    %c8_i32_115 = arith.constant 8 : i32
    %521 = arith.muli %c7_i32_114, %c8_i32_115 : i32
    %522 = tpu.assume_multiple %521, 8 : i32
    %c7_i32_116 = arith.constant 7 : i32
    %523 = arith.subi %c7_i32_116, %c7_i32_114 : i32
    %c8_i32_117 = arith.constant 8 : i32
    %524 = arith.muli %523, %c8_i32_117 : i32
    %525 = tpu.assume_multiple %524, 8 : i32
    %526 = tpu.concatenate %490, %515 in 1 : vector<8x128xf32>, vector<8x128xf32> -> vector<8x256xf32>
    %527 = arith.truncf %526 : vector<8x256xf32> to vector<8x256xbf16>
    %c0_118 = arith.constant 0 : index
    %c0_119 = arith.constant 0 : index
    %528 = vector.load %arg6[%c0_118, %c0_119] : memref<256x1024xbf16, #tpu.memory_space<vmem>>, vector<256x1024xbf16>
    %cst_120 = arith.constant dense<0.000000e+00> : vector<8x1024xf32>
    %529 = tpu.matmul %527, %528, %cst_120 {dimension_numbers = #tpu.dot_dimension_numbers<[1], [0], [0], [1], [0, 0, 1, 1], [], []>} : vector<8x256xbf16>, vector<256x1024xbf16>, vector<8x1024xf32> -> vector<8x1024xf32>
    %530 = arith.index_cast %522 : i32 to index
    %c0_121 = arith.constant 0 : index
    %531 = vector.load %arg10[%530, %c0_121] : memref<64x512xf32, #tpu.memory_space<vmem>>, vector<8x512xf32>
    %532 = vector.extract_strided_slice %529 {offsets = [0, 0], sizes = [8, 512], strides = [1, 1]} : vector<8x1024xf32> to vector<8x512xf32>
    %533 = arith.addf %531, %532 : vector<8x512xf32>
    %534 = arith.index_cast %525 : i32 to index
    %c0_122 = arith.constant 0 : index
    %535 = vector.load %arg11[%534, %c0_122] : memref<64x512xf32, #tpu.memory_space<vmem>>, vector<8x512xf32>
    %536 = vector.extract_strided_slice %529 {offsets = [0, 512], sizes = [8, 512], strides = [1, 1]} : vector<8x1024xf32> to vector<8x512xf32>
    %537 = arith.addf %535, %536 : vector<8x512xf32>
    %538 = vector.extract_strided_slice %533 {offsets = [0, 0], sizes = [8, 128], strides = [1, 1]} : vector<8x512xf32> to vector<8x128xf32>
    %539 = arith.negf %538 : vector<8x128xf32>
    %540 = math.exp %539 : vector<8x128xf32>
    %cst_123 = arith.constant 1.000000e+00 : f32
    %541 = vector.broadcast %cst_123 : f32 to vector<8x128xf32>
    %542 = arith.addf %541, %540 : vector<8x128xf32>
    %543 = arith.divf %541, %542 : vector<8x128xf32>
    %544 = vector.extract_strided_slice %533 {offsets = [0, 128], sizes = [8, 128], strides = [1, 1]} : vector<8x512xf32> to vector<8x128xf32>
    %545 = arith.negf %544 : vector<8x128xf32>
    %546 = math.exp %545 : vector<8x128xf32>
    %cst_124 = arith.constant 1.000000e+00 : f32
    %547 = vector.broadcast %cst_124 : f32 to vector<8x128xf32>
    %548 = arith.addf %547, %546 : vector<8x128xf32>
    %549 = arith.divf %547, %548 : vector<8x128xf32>
    %550 = vector.extract_strided_slice %533 {offsets = [0, 256], sizes = [8, 128], strides = [1, 1]} : vector<8x512xf32> to vector<8x128xf32>
    %551 = math.tanh %550 : vector<8x128xf32>
    %552 = vector.extract_strided_slice %533 {offsets = [0, 384], sizes = [8, 128], strides = [1, 1]} : vector<8x512xf32> to vector<8x128xf32>
    %553 = arith.negf %552 : vector<8x128xf32>
    %554 = math.exp %553 : vector<8x128xf32>
    %cst_125 = arith.constant 1.000000e+00 : f32
    %555 = vector.broadcast %cst_125 : f32 to vector<8x128xf32>
    %556 = arith.addf %555, %554 : vector<8x128xf32>
    %557 = arith.divf %555, %556 : vector<8x128xf32>
    %558 = arith.mulf %549, %488 : vector<8x128xf32>
    %559 = arith.mulf %543, %551 : vector<8x128xf32>
    %560 = arith.addf %558, %559 : vector<8x128xf32>
    %561 = math.tanh %560 : vector<8x128xf32>
    %562 = arith.mulf %557, %561 : vector<8x128xf32>
    %563 = vector.extract_strided_slice %537 {offsets = [0, 0], sizes = [8, 128], strides = [1, 1]} : vector<8x512xf32> to vector<8x128xf32>
    %564 = arith.negf %563 : vector<8x128xf32>
    %565 = math.exp %564 : vector<8x128xf32>
    %cst_126 = arith.constant 1.000000e+00 : f32
    %566 = vector.broadcast %cst_126 : f32 to vector<8x128xf32>
    %567 = arith.addf %566, %565 : vector<8x128xf32>
    %568 = arith.divf %566, %567 : vector<8x128xf32>
    %569 = vector.extract_strided_slice %537 {offsets = [0, 128], sizes = [8, 128], strides = [1, 1]} : vector<8x512xf32> to vector<8x128xf32>
    %570 = arith.negf %569 : vector<8x128xf32>
    %571 = math.exp %570 : vector<8x128xf32>
    %cst_127 = arith.constant 1.000000e+00 : f32
    %572 = vector.broadcast %cst_127 : f32 to vector<8x128xf32>
    %573 = arith.addf %572, %571 : vector<8x128xf32>
    %574 = arith.divf %572, %573 : vector<8x128xf32>
    %575 = vector.extract_strided_slice %537 {offsets = [0, 256], sizes = [8, 128], strides = [1, 1]} : vector<8x512xf32> to vector<8x128xf32>
    %576 = math.tanh %575 : vector<8x128xf32>
    %577 = vector.extract_strided_slice %537 {offsets = [0, 384], sizes = [8, 128], strides = [1, 1]} : vector<8x512xf32> to vector<8x128xf32>
    %578 = arith.negf %577 : vector<8x128xf32>
    %579 = math.exp %578 : vector<8x128xf32>
    %cst_128 = arith.constant 1.000000e+00 : f32
    %580 = vector.broadcast %cst_128 : f32 to vector<8x128xf32>
    %581 = arith.addf %580, %579 : vector<8x128xf32>
    %582 = arith.divf %580, %581 : vector<8x128xf32>
    %583 = arith.mulf %574, %513 : vector<8x128xf32>
    %584 = arith.mulf %568, %576 : vector<8x128xf32>
    %585 = arith.addf %583, %584 : vector<8x128xf32>
    %586 = math.tanh %585 : vector<8x128xf32>
    %587 = arith.mulf %582, %586 : vector<8x128xf32>
    %588 = vector.broadcast %c7_i32_114 : i32 to vector<8x1xi32>
    %589 = arith.cmpi eq, %15, %588 : vector<8x1xi32>
    %590 = vector.shape_cast %589 : vector<8x1xi1> to vector<8x1xi1>
    %591 = vector.broadcast %590 : vector<8x1xi1> to vector<8x128xi1>
    %592 = arith.select %591, %562, %520 : vector<8x128xi1>, vector<8x128xf32>
    %c8_i32_129 = arith.constant 8 : i32
    %593 = tpu.concatenate %592, %587 in 1 : vector<8x128xf32>, vector<8x128xf32> -> vector<8x256xf32>
    %594 = arith.truncf %593 : vector<8x256xf32> to vector<8x256xbf16>
    %c0_130 = arith.constant 0 : index
    %c0_131 = arith.constant 0 : index
    %595 = vector.load %arg7[%c0_130, %c0_131] : memref<256x128xbf16, #tpu.memory_space<vmem>>, vector<256x128xbf16>
    %cst_132 = arith.constant dense<0.000000e+00> : vector<8x128xf32>
    %596 = tpu.matmul %594, %595, %cst_132 {dimension_numbers = #tpu.dot_dimension_numbers<[1], [0], [0], [1], [0, 0, 1, 1], [], []>} : vector<8x256xbf16>, vector<256x128xbf16>, vector<8x128xf32> -> vector<8x128xf32>
    %c0_133 = arith.constant 0 : index
    %c0_134 = arith.constant 0 : index
    %597 = vector.load %arg8[%c0_133, %c0_134] : memref<1x128xf32, #tpu.memory_space<vmem>>, vector<1x128xf32>
    %598 = vector.broadcast %597 : vector<1x128xf32> to vector<8x128xf32>
    %599 = arith.addf %596, %598 : vector<8x128xf32>
    %600 = tpu.iota {dimensions = array<i32: 1>} : vector<8x128xi32>
    %c4_i32_135 = arith.constant 4 : i32
    %601 = vector.broadcast %c4_i32_135 : i32 to vector<8x128xi32>
    %602 = arith.cmpi slt, %600, %601 : vector<8x128xi32>
    %cst_136 = arith.constant -1.000000e+30 : f32
    %603 = vector.broadcast %cst_136 : f32 to vector<8x128xf32>
    %604 = arith.select %602, %599, %603 : vector<8x128xi1>, vector<8x128xf32>
    %cst_137 = arith.constant dense<0xFF800000> : vector<8xf32>
    %605 = vector.multi_reduction <maximumf>, %604, %cst_137 [1] : vector<8x128xf32> to vector<8xf32>
    %606 = vector.shape_cast %605 : vector<8xf32> to vector<8x1xf32>
    %607 = vector.broadcast %606 : vector<8x1xf32> to vector<8x128xf32>
    %608 = arith.subf %604, %607 : vector<8x128xf32>
    %609 = math.exp %608 : vector<8x128xf32>
    %cst_138 = arith.constant dense<0.000000e+00> : vector<8xf32>
    %610 = vector.multi_reduction <add>, %609, %cst_138 [1] : vector<8x128xf32> to vector<8xf32>
    %611 = vector.shape_cast %610 : vector<8xf32> to vector<8x1xf32>
    %612 = math.log %611 : vector<8x1xf32>
    %613 = arith.addf %606, %612 : vector<8x1xf32>
    %614 = vector.broadcast %613 : vector<8x1xf32> to vector<8x128xf32>
    %615 = arith.subf %604, %614 : vector<8x128xf32>
    %c0_139 = arith.constant 0 : index
    %c0_140 = arith.constant 0 : index
    %616 = vector.load %arg9[%c0_139, %c0_140] : memref<8x128xf32, #tpu.memory_space<vmem>>, vector<8x128xf32>
    tpu.vector_store %arg9[%c0_139, %c0_140], %615 {strides = array<i32>} : memref<8x128xf32, #tpu.memory_space<vmem>>, vector<8x128xf32>,
    return
  }
}

</mosaic_0001>

<llo_original>
// kernel: tpu_custom_call.1
$region0: #{tpu_custom_call.1}
  #allocation0 [shape = 'u32[]', space=smem, size = 0x4, offset = 0x4, fixed_abs, tag = 'smem constant byte address 0x4 - core index']
  #allocation1 [shape = 'u32[144,128]{1,0:T(1,128)}', space=vmem, size = 0x12000, scoped, tag = 'internal scratch']
  #allocation2 [shape = 'f32[64,512]{1,0:T(8,128)}', space=vmem, size = 0x20000, scoped, tag = 'scratch operand']
  #allocation3 [shape = 'f32[64,512]{1,0:T(8,128)}', space=vmem, size = 0x20000, scoped, tag = 'scratch operand']
  %s0 = inlined_call_operand.hbm [shape: bf16[64,128], index: 0, kind: input, shape index: {}]
  %s1 = inlined_call_operand.vmem [shape: s32[8,1], index: 1, kind: input, shape index: {}]
  %s2 = inlined_call_operand.hbm [shape: bf16[128,512], index: 2, kind: input, shape index: {}]
  %s3 = inlined_call_operand.vmem [shape: f32[1,512], index: 3, kind: input, shape index: {}]
  %s4 = inlined_call_operand.hbm [shape: bf16[128,512], index: 4, kind: input, shape index: {}]
  %s5 = inlined_call_operand.vmem [shape: f32[1,512], index: 5, kind: input, shape index: {}]
  %s6 = inlined_call_operand.hbm [shape: bf16[256,1024], index: 6, kind: input, shape index: {}]
  %s7 = inlined_call_operand.hbm [shape: bf16[256,128], index: 7, kind: input, shape index: {}]
  %s8 = inlined_call_operand.vmem [shape: f32[1,128], index: 8, kind: input, shape index: {}]
  %s9 = inlined_call_operand.hbm [shape: f32[8,128], index: 9, kind: output, shape index: {}]
  %s10 = sld [smem:[#allocation0]]
  $region66: #{tpu_custom_call.1} parent=0
    _
  %s12 = ssub.s32 1, %s10
  %s13 = scalar_select 0, %s12, %s10
  $region1: #{tpu_custom_call.1} parent=0
    #allocation4 [shape = 'u8[16384]{0}', space=vmem, size = 0x4000, scoped, tag = 'input window, operand 0, single buffered']
    #allocation5 [shape = 's32[1]{0}', space=sflag, size = 0x4, scoped, tag = 'scoped memory for tpu_custom_call.1']
    #allocation6 [shape = 's32[1]{0}', space=sflag, size = 0x4, scoped, tag = 'scoped memory for tpu_custom_call.1']
    #allocation7 [shape = 'u8[131072]{0}', space=vmem, size = 0x20000, scoped, tag = 'input window, operand 2, single buffered']
    #allocation8 [shape = 's32[1]{0}', space=sflag, size = 0x4, scoped, tag = 'scoped memory for tpu_custom_call.1']
    #allocation9 [shape = 'u8[131072]{0}', space=vmem, size = 0x20000, scoped, tag = 'input window, operand 4, single buffered']
    #allocation10 [shape = 'u8[524288]{0}', space=vmem, size = 0x80000, scoped, tag = 'input window, operand 6, single buffered']
    #allocation11 [shape = 's32[1]{0}', space=sflag, size = 0x4, scoped, tag = 'scoped memory for tpu_custom_call.1']
    #allocation12 [shape = 'u8[65536]{0}', space=vmem, size = 0x10000, scoped, tag = 'input window, operand 7, single buffered']
    #allocation13 [shape = 'u8[4096]{0}', space=vmem, size = 0x1000, scoped, tag = 'output window, operand 0, single buffered']
    %14 = vsyncpa [#allocation5], 0
    %15 = vsyncpa [#allocation8], 0
    %16 = vsyncpa [#allocation11], 0
    %17 = vsyncpa [#allocation6], 0
    // Predicated region
    $region2: #{tpu_custom_call.1} parent=1 // pred_check
      _
    $region3: #{tpu_custom_call.1} parent=1 // pred_check_branch
      %19 = sbr.rel (0) target = $region5
    $region4: #{tpu_custom_call.1} parent=1 // pred_region
      %s21 = ssub.s32 512, 512
      %22 = vsyncadd [#allocation5], %s21
      %s23 = sshll.u32 [#allocation4], 4
      %s24 = int_to_ptr.vmem [resolvable:$true] %s23
      %29 = dma.hbm_to_vmem [thread:$0]  %s0, 512, %s24, [#allocation5], 64, 64, 4
    $region5: #{tpu_custom_call.1} parent=1 // pred_fallthru
      _
    // Predicated region
    $region6: #{tpu_custom_call.1} parent=1 // pred_check
      _
    $region7: #{tpu_custom_call.1} parent=1 // pred_check_branch
      %31 = sbr.rel (0) target = $region9
    $region8: #{tpu_custom_call.1} parent=1 // pred_region
      _
    $region9: #{tpu_custom_call.1} parent=1 // pred_fallthru
      _
    // Predicated region
    $region10: #{tpu_custom_call.1} parent=1 // pred_check
      _
    $region11: #{tpu_custom_call.1} parent=1 // pred_check_branch
      %33 = sbr.rel (0) target = $region13
    $region12: #{tpu_custom_call.1} parent=1 // pred_region
      %s35 = ssub.s32 4096, 4096
      %36 = vsyncadd [#allocation8], %s35
      %s37 = sshll.u32 [#allocation7], 4
      %s38 = int_to_ptr.vmem [resolvable:$true] %s37
      %43 = dma.hbm_to_vmem [thread:$0]  %s2, 4096, %s38, [#allocation8], 256, 256, 16
    $region13: #{tpu_custom_call.1} parent=1 // pred_fallthru
      _
    // Predicated region
    $region14: #{tpu_custom_call.1} parent=1 // pred_check
      _
    $region15: #{tpu_custom_call.1} parent=1 // pred_check_branch
      %45 = sbr.rel (0) target = $region17
    $region16: #{tpu_custom_call.1} parent=1 // pred_region
      _
    $region17: #{tpu_custom_call.1} parent=1 // pred_fallthru
      _
    // Predicated region
    $region18: #{tpu_custom_call.1} parent=1 // pred_check
      _
    $region19: #{tpu_custom_call.1} parent=1 // pred_check_branch
      %47 = sbr.rel (0) target = $region21
    $region20: #{tpu_custom_call.1} parent=1 // pred_region
      %s49 = ssub.s32 4096, 4096
      %50 = vsyncadd [#allocation8], %s49
      %s51 = sshll.u32 [#allocation9], 4
      %s52 = int_to_ptr.vmem [resolvable:$true] %s51
      %57 = dma.hbm_to_vmem [thread:$0]  %s4, 4096, %s52, [#allocation8], 256, 256, 16
    $region21: #{tpu_custom_call.1} parent=1 // pred_fallthru
      _
    // Predicated region
    $region22: #{tpu_custom_call.1} parent=1 // pred_check
      _
    $region23: #{tpu_custom_call.1} parent=1 // pred_check_branch
      %59 = sbr.rel (0) target = $region25
    $region24: #{tpu_custom_call.1} parent=1 // pred_region
      _
    $region25: #{tpu_custom_call.1} parent=1 // pred_fallthru
      _
    // Predicated region
    $region26: #{tpu_custom_call.1} parent=1 // pred_check
      _
    $region27: #{tpu_custom_call.1} parent=1 // pred_check_branch
      %61 = sbr.rel (0) target = $region29
    $region28: #{tpu_custom_call.1} parent=1 // pred_region
      %s63 = ssub.s32 16384, 16384
      %64 = vsyncadd [#allocation11], %s63
      %s65 = sshll.u32 [#allocation10], 4
      %s66 = int_to_ptr.vmem [resolvable:$true] %s65
      %71 = dma.hbm_to_vmem [thread:$0]  %s6, 16384, %s66, [#allocation11], 512, 512, 32
    $region29: #{tpu_custom_call.1} parent=1 // pred_fallthru
      _
    // Predicated region
    $region30: #{tpu_custom_call.1} parent=1 // pred_check
      _
    $region31: #{tpu_custom_call.1} parent=1 // pred_check_branch
      %73 = sbr.rel (0) target = $region33
    $region32: #{tpu_custom_call.1} parent=1 // pred_region
      %s75 = ssub.s32 2048, 2048
      %76 = vsyncadd [#allocation11], %s75
      %s77 = sshll.u32 [#allocation12], 4
      %s78 = int_to_ptr.vmem [resolvable:$true] %s77
      %83 = dma.hbm_to_vmem [thread:$0]  %s7, 2048, %s78, [#allocation11], 64, 64, 4
    $region33: #{tpu_custom_call.1} parent=1 // pred_fallthru
      _
    // Predicated region
    $region34: #{tpu_custom_call.1} parent=1 // pred_check
      _
    $region35: #{tpu_custom_call.1} parent=1 // pred_check_branch
      %85 = sbr.rel (0) target = $region37
    $region36: #{tpu_custom_call.1} parent=1 // pred_region
      _
    $region37: #{tpu_custom_call.1} parent=1 // pred_fallthru
      _
    // Predicated region
    $region38: #{tpu_custom_call.1} parent=1 // pred_check
      _
    $region39: #{tpu_custom_call.1} parent=1 // pred_check_branch
      %87 = sbr.rel (0) target = $region41
    $region40: #{tpu_custom_call.1} parent=1 // pred_region
      %88 = dma.done [#allocation5], 512
    $region41: #{tpu_custom_call.1} parent=1 // pred_fallthru
      _
    // Predicated region
    $region42: #{tpu_custom_call.1} parent=1 // pred_check
      _
    $region43: #{tpu_custom_call.1} parent=1 // pred_check_branch
      %90 = sbr.rel (0) target = $region45
    $region44: #{tpu_custom_call.1} parent=1 // pred_region
      %91 = dma.done [#allocation8], 4096
    $region45: #{tpu_custom_call.1} parent=1 // pred_fallthru
      _
    // Predicated region
    $region46: #{tpu_custom_call.1} parent=1 // pred_check
      _
    $region47: #{tpu_custom_call.1} parent=1 // pred_check_branch
      %93 = sbr.rel (0) target = $region49
    $region48: #{tpu_custom_call.1} parent=1 // pred_region
      %94 = dma.done [#allocation8], 4096
    $region49: #{tpu_custom_call.1} parent=1 // pred_fallthru
      _
    // Predicated region
    $region50: #{tpu_custom_call.1} parent=1 // pred_check
      _
    $region51: #{tpu_custom_call.1} parent=1 // pred_check_branch
      %96 = sbr.rel (0) target = $region53
    $region52: #{tpu_custom_call.1} parent=1 // pred_region
      %97 = dma.done [#allocation11], 16384
    $region53: #{tpu_custom_call.1} parent=1 // pred_fallthru
      _
    // Predicated region
    $region54: #{tpu_custom_call.1} parent=1 // pred_check
      _
    $region55: #{tpu_custom_call.1} parent=1 // pred_check_branch
      %99 = sbr.rel (0) target = $region57
    $region56: #{tpu_custom_call.1} parent=1 // pred_region
      %100 = dma.done [#allocation11], 2048
    $region57: #{tpu_custom_call.1} parent=1 // pred_fallthru
      _
    %v102 = vld [vmem:[#allocation4] sm:$0xf]
    %v103 = vld [vmem:[#allocation4 + $0x4] sm:$0xf]
    %v104 = vld [vmem:[#allocation4 + $0x8] sm:$0xf]
    %v105 = vld [vmem:[#allocation4 + $0xc] sm:$0xf]
    %v106 = vld [vmem:[#allocation4 + $0x10] sm:$0xf]
    %v107 = vld [vmem:[#allocation4 + $0x14] sm:$0xf]
    %v108 = vld [vmem:[#allocation4 + $0x18] sm:$0xf]
    %v109 = vld [vmem:[#allocation4 + $0x1c] sm:$0xf]
    %v110 = vld [vmem:[#allocation7] sm:$0xff]
    %v111 = vld [vmem:[#allocation7 + $0x8] sm:$0xff]
    %v112 = vld [vmem:[#allocation7 + $0x10] sm:$0xff]
    %v113 = vld [vmem:[#allocation7 + $0x18] sm:$0xff]
    %v114 = vld [vmem:[#allocation7 + $0x20] sm:$0xff]
    %v115 = vld [vmem:[#allocation7 + $0x28] sm:$0xff]
    %v116 = vld [vmem:[#allocation7 + $0x30] sm:$0xff]
    %v117 = vld [vmem:[#allocation7 + $0x38] sm:$0xff]
    %v118 = vld [vmem:[#allocation7 + $0x40] sm:$0xff]
    %v119 = vld [vmem:[#allocation7 + $0x48] sm:$0xff]
    %v120 = vld [vmem:[#allocation7 + $0x50] sm:$0xff]
    %v121 = vld [vmem:[#allocation7 + $0x58] sm:$0xff]
    %v122 = vld [vmem:[#allocation7 + $0x60] sm:$0xff]
    %v123 = vld [vmem:[#allocation7 + $0x68] sm:$0xff]
    %v124 = vld [vmem:[#allocation7 + $0x70] sm:$0xff]
    %v125 = vld [vmem:[#allocation7 + $0x78] sm:$0xff]
    %v126 = vld [vmem:[#allocation7 + $0x80] sm:$0xff]
    %v127 = vld [vmem:[#allocation7 + $0x88] sm:$0xff]
    %v128 = vld [vmem:[#allocation7 + $0x90] sm:$0xff]
    %v129 = vld [vmem:[#allocation7 + $0x98] sm:$0xff]
    %v130 = vld [vmem:[#allocation7 + $0xa0] sm:$0xff]
    %v131 = vld [vmem:[#allocation7 + $0xa8] sm:$0xff]
    %v132 = vld [vmem:[#allocation7 + $0xb0] sm:$0xff]
    %v133 = vld [vmem:[#allocation7 + $0xb8] sm:$0xff]
    %v134 = vld [vmem:[#allocation7 + $0xc0] sm:$0xff]
    %v135 = vld [vmem:[#allocation7 + $0xc8] sm:$0xff]
    %v136 = vld [vmem:[#allocation7 + $0xd0] sm:$0xff]
    %v137 = vld [vmem:[#allocation7 + $0xd8] sm:$0xff]
    %v138 = vld [vmem:[#allocation7 + $0xe0] sm:$0xff]
    %v139 = vld [vmem:[#allocation7 + $0xe8] sm:$0xff]
    %v140 = vld [vmem:[#allocation7 + $0xf0] sm:$0xff]
    %v141 = vld [vmem:[#allocation7 + $0xf8] sm:$0xff]
    %v142 = vld [vmem:[%s3] sm:$0xf]
    %v144 = vlaneseq
    %v145 = vshrl.u32 %v144, 7
    %v146 = vsub.s32 0, %v145
    %v147 = vrot.slane %v142, %v146
    %v148 = vlaneseq
    %v149 = vshrl.u32 %v148, 7
    %v150 = vsub.s32 1, %v149
    %v151 = vrot.slane %v142, %v150
    %v152 = vlaneseq
    %v153 = vshrl.u32 %v152, 7
    %v154 = vsub.s32 2, %v153
    %v155 = vrot.slane %v142, %v154
    %v156 = vlaneseq
    %v157 = vshrl.u32 %v156, 7
    %v158 = vsub.s32 3, %v157
    %v159 = vrot.slane %v142, %v158
    %v172 = vunpack.c.l.b16 %v102
    %v173 = vunpack.c.l.b16 %v103
    %v174 = vunpack.c.l.b16 %v104
    %v175 = vunpack.c.l.b16 %v105
    %v176 = vunpack.c.l.b16 %v106
    %v177 = vunpack.c.l.b16 %v107
    %v178 = vunpack.c.l.b16 %v108
    %v179 = vunpack.c.l.b16 %v109
    %v180 = vpack.c.b16 %v173, %v172
    %v181 = vpack.c.b16 %v175, %v174
    %v182 = vpack.c.b16 %v177, %v176
    %v183 = vpack.c.b16 %v179, %v178
    %v220 = vunpack.c.l.b16 %v110
    %v221 = vunpack.c.h.b16 %v110
    %v222 = vunpack.c.l.b16 %v111
    %v223 = vunpack.c.h.b16 %v111
    %v224 = vunpack.c.l.b16 %v112
    %v225 = vunpack.c.h.b16 %v112
    %v226 = vunpack.c.l.b16 %v113
    %v227 = vunpack.c.h.b16 %v113
    %v228 = vunpack.c.l.b16 %v114
    %v229 = vunpack.c.h.b16 %v114
    %v230 = vunpack.c.l.b16 %v115
    %v231 = vunpack.c.h.b16 %v115
    %v232 = vunpack.c.l.b16 %v116
    %v233 = vunpack.c.h.b16 %v116
    %v234 = vunpack.c.l.b16 %v117
    %v235 = vunpack.c.h.b16 %v117
    %v236 = vunpack.c.l.b16 %v118
    %v237 = vunpack.c.h.b16 %v118
    %v238 = vunpack.c.l.b16 %v119
    %v239 = vunpack.c.h.b16 %v119
    %v240 = vunpack.c.l.b16 %v120
    %v241 = vunpack.c.h.b16 %v120
    %v242 = vunpack.c.l.b16 %v121
    %v243 = vunpack.c.h.b16 %v121
    %v244 = vunpack.c.l.b16 %v122
    %v245 = vunpack.c.h.b16 %v122
    %v246 = vunpack.c.l.b16 %v123
    %v247 = vunpack.c.h.b16 %v123
    %v248 = vunpack.c.l.b16 %v124
    %v249 = vunpack.c.h.b16 %v124
    %v250 = vunpack.c.l.b16 %v125
    %v251 = vunpack.c.h.b16 %v125
    %v252 = vunpack.c.l.b16 %v126
    %v253 = vunpack.c.h.b16 %v126
    %v254 = vunpack.c.l.b16 %v127
    %v255 = vunpack.c.h.b16 %v127
    %v256 = vunpack.c.l.b16 %v128
    %v257 = vunpack.c.h.b16 %v128
    %v258 = vunpack.c.l.b16 %v129
    %v259 = vunpack.c.h.b16 %v129
    %v260 = vunpack.c.l.b16 %v130
    %v261 = vunpack.c.h.b16 %v130
    %v262 = vunpack.c.l.b16 %v131
    %v263 = vunpack.c.h.b16 %v131
    %v264 = vunpack.c.l.b16 %v132
    %v265 = vunpack.c.h.b16 %v132
    %v266 = vunpack.c.l.b16 %v133
    %v267 = vunpack.c.h.b16 %v133
    %v268 = vunpack.c.l.b16 %v134
    %v269 = vunpack.c.h.b16 %v134
    %v270 = vunpack.c.l.b16 %v135
    %v271 = vunpack.c.h.b16 %v135
    %v272 = vunpack.c.l.b16 %v136
    %v273 = vunpack.c.h.b16 %v136
    %v274 = vunpack.c.l.b16 %v137
    %v275 = vunpack.c.h.b16 %v137
    %v276 = vunpack.c.l.b16 %v138
    %v277 = vunpack.c.h.b16 %v138
    %v278 = vunpack.c.l.b16 %v139
    %v279 = vunpack.c.h.b16 %v139
    %v280 = vunpack.c.l.b16 %v140
    %v281 = vunpack.c.h.b16 %v140
    %v282 = vunpack.c.l.b16 %v141
    %v283 = vunpack.c.h.b16 %v141
    %v284 = vpack.c.b16 %v224, %v220
    %v285 = vpack.c.b16 %v225, %v221
    %v286 = vpack.c.b16 %v226, %v222
    %v287 = vpack.c.b16 %v227, %v223
    %v288 = vpack.c.b16 %v232, %v228
    %v289 = vpack.c.b16 %v233, %v229
    %v290 = vpack.c.b16 %v234, %v230
    %v291 = vpack.c.b16 %v235, %v231
    %v292 = vpack.c.b16 %v240, %v236
    %v293 = vpack.c.b16 %v241, %v237
    %v294 = vpack.c.b16 %v242, %v238
    %v295 = vpack.c.b16 %v243, %v239
    %v296 = vpack.c.b16 %v248, %v244
    %v297 = vpack.c.b16 %v249, %v245
    %v298 = vpack.c.b16 %v250, %v246
    %v299 = vpack.c.b16 %v251, %v247
    %v300 = vpack.c.b16 %v256, %v252
    %v301 = vpack.c.b16 %v257, %v253
    %v302 = vpack.c.b16 %v258, %v254
    %v303 = vpack.c.b16 %v259, %v255
    %v304 = vpack.c.b16 %v264, %v260
    %v305 = vpack.c.b16 %v265, %v261
    %v306 = vpack.c.b16 %v266, %v262
    %v307 = vpack.c.b16 %v267, %v263
    %v308 = vpack.c.b16 %v272, %v268
    %v309 = vpack.c.b16 %v273, %v269
    %v310 = vpack.c.b16 %v274, %v270
    %v311 = vpack.c.b16 %v275, %v271
    %v312 = vpack.c.b16 %v280, %v276
    %v313 = vpack.c.b16 %v281, %v277
    %v314 = vpack.c.b16 %v282, %v278
    %v315 = vpack.c.b16 %v283, %v279
    %348 = vmatprep.subr.bf16.mxu0 %v313
    %349 = vmatpush1.bf16.msra.mxu0 %v312
    %350 = vmatprep.subr.bf16.mxu0 %v309
    %351 = vmatpush1.bf16.msra.mxu0 %v308
    %352 = vmatprep.subr.bf16.mxu0 %v305
    %353 = vmatpush1.bf16.msra.mxu0 %v304
    %354 = vmatprep.subr.bf16.mxu0 %v301
    %355 = vmatpush1.bf16.msra.mxu0 %v300
    %356 = vmatprep.subr.bf16.mxu0 %v297
    %357 = vmatpush1.bf16.msra.mxu0 %v296
    %358 = vmatprep.subr.bf16.mxu0 %v293
    %359 = vmatpush1.bf16.msra.mxu0 %v292
    %360 = vmatprep.subr.bf16.mxu0 %v289
    %361 = vmatpush1.bf16.msra.mxu0 %v288
    %362 = vmatprep.subr.bf16.mxu0 %v285
    %363 = vmatpush1.bf16.msra.mxu0 %v284
    %364 = vmatprep.subr.bf16.mxu0 0
    %365 = vmatpush2.bf16.msra.mxu0 0
    %366 = vmatprep.subr.bf16.mxu0 0
    %367 = vmatpush2.bf16.msra.mxu0 0
    %368 = vmatprep.subr.bf16.mxu0 0
    %369 = vmatpush2.bf16.msra.mxu0 0
    %370 = vmatprep.subr.bf16.mxu0 0
    %371 = vmatpush2.bf16.msra.mxu0 0
    %372 = vmatprep.subr.bf16.mxu0 0
    %373 = vmatpush2.bf16.msra.mxu0 0
    %374 = vmatprep.subr.bf16.mxu0 0
    %375 = vmatpush2.bf16.msra.mxu0 0
    %376 = vmatprep.subr.bf16.mxu0 0
    %377 = vmatpush2.bf16.msra.mxu0 0
    %378 = vmatprep.subr.bf16.mxu0 0
    %379 = vmatpush2.bf16.msra.mxu0 0
    %380 = vmatprep.mubr.bf16.mxu0 0
    %381 = vmatmul.mubr.bf16.gmra.mxu0 %v180
    %v382 = vpop.f32.mrf.mxu0
    %v383 = vadd.f32 %v147, %v382
    %v384 = vpop.f32.mrf.mxu0
    %v385 = vadd.f32 %v151, %v384
    %v386 = vpop.f32.mrf.mxu0
    %v387 = vadd.f32 %v147, %v386
    %v388 = vpop.f32.mrf.mxu0
    %v389 = vadd.f32 %v151, %v388
    %390 = vmatprep.mubr.bf16.mxu0 0
    %391 = vmatmul.mubr.bf16.gmra.mxu0 %v181
    %v392 = vpop.f32.mrf.mxu0
    %v393 = vadd.f32 %v147, %v392
    %v394 = vpop.f32.mrf.mxu0
    %v395 = vadd.f32 %v151, %v394
    %v396 = vpop.f32.mrf.mxu0
    %v397 = vadd.f32 %v147, %v396
    %v398 = vpop.f32.mrf.mxu0
    %v399 = vadd.f32 %v151, %v398
    %400 = vmatprep.mubr.bf16.mxu0 0
    %401 = vmatmul.mubr.bf16.gmra.mxu0 %v182
    %v402 = vpop.f32.mrf.mxu0
    %v403 = vadd.f32 %v147, %v402
    %v404 = vpop.f32.mrf.mxu0
    %v405 = vadd.f32 %v151, %v404
    %v406 = vpop.f32.mrf.mxu0
    %v407 = vadd.f32 %v147, %v406
    %v408 = vpop.f32.mrf.mxu0
    %v409 = vadd.f32 %v151, %v408
    %410 = vmatprep.mubr.bf16.mxu0 0
    %411 = vmatmul.mubr.bf16.gmra.mxu0 %v183
    %v412 = vpop.f32.mrf.mxu0
    %v413 = vadd.f32 %v147, %v412
    %v414 = vpop.f32.mrf.mxu0
    %v415 = vadd.f32 %v151, %v414
    %v416 = vpop.f32.mrf.mxu0
    %v417 = vadd.f32 %v147, %v416
    %v418 = vpop.f32.mrf.mxu0
    %v419 = vadd.f32 %v151, %v418
    %420 = vdwg.mxu0
    %421 = vmatprep.subr.bf16.mxu0 %v315
    %422 = vmatpush1.bf16.msra.mxu0 %v314
    %423 = vmatprep.subr.bf16.mxu0 %v311
    %424 = vmatpush1.bf16.msra.mxu0 %v310
    %425 = vmatprep.subr.bf16.mxu0 %v307
    %426 = vmatpush1.bf16.msra.mxu0 %v306
    %427 = vmatprep.subr.bf16.mxu0 %v303
    %428 = vmatpush1.bf16.msra.mxu0 %v302
    %429 = vmatprep.subr.bf16.mxu0 %v299
    %430 = vmatpush1.bf16.msra.mxu0 %v298
    %431 = vmatprep.subr.bf16.mxu0 %v295
    %432 = vmatpush1.bf16.msra.mxu0 %v294
    %433 = vmatprep.subr.bf16.mxu0 %v291
    %434 = vmatpush1.bf16.msra.mxu0 %v290
    %435 = vmatprep.subr.bf16.mxu0 %v287
    %436 = vmatpush1.bf16.msra.mxu0 %v286
    %437 = vmatprep.subr.bf16.mxu0 0
    %438 = vmatpush2.bf16.msra.mxu0 0
    %439 = vmatprep.subr.bf16.mxu0 0
    %440 = vmatpush2.bf16.msra.mxu0 0
    %441 = vmatprep.subr.bf16.mxu0 0
    %442 = vmatpush2.bf16.msra.mxu0 0
    %443 = vmatprep.subr.bf16.mxu0 0
    %444 = vmatpush2.bf16.msra.mxu0 0
    %445 = vmatprep.subr.bf16.mxu0 0
    %446 = vmatpush2.bf16.msra.mxu0 0
    %447 = vmatprep.subr.bf16.mxu0 0
    %448 = vmatpush2.bf16.msra.mxu0 0
    %449 = vmatprep.subr.bf16.mxu0 0
    %450 = vmatpush2.bf16.msra.mxu0 0
    %451 = vmatprep.subr.bf16.mxu0 0
    %452 = vmatpush2.bf16.msra.mxu0 0
    %453 = vmatprep.mubr.bf16.mxu0 0
    %454 = vmatmul.mubr.bf16.gmra.mxu0 %v180
    %v455 = vpop.f32.mrf.mxu0
    %v456 = vadd.f32 %v155, %v455
    %v457 = vpop.f32.mrf.mxu0
    %v458 = vadd.f32 %v159, %v457
    %v459 = vpop.f32.mrf.mxu0
    %v460 = vadd.f32 %v155, %v459
    %v461 = vpop.f32.mrf.mxu0
    %v462 = vadd.f32 %v159, %v461
    %463 = vmatprep.mubr.bf16.mxu0 0
    %464 = vmatmul.mubr.bf16.gmra.mxu0 %v181
    %v465 = vpop.f32.mrf.mxu0
    %v466 = vadd.f32 %v155, %v465
    %v467 = vpop.f32.mrf.mxu0
    %v468 = vadd.f32 %v159, %v467
    %v469 = vpop.f32.mrf.mxu0
    %v470 = vadd.f32 %v155, %v469
    %v471 = vpop.f32.mrf.mxu0
    %v472 = vadd.f32 %v159, %v471
    %473 = vmatprep.mubr.bf16.mxu0 0
    %474 = vmatmul.mubr.bf16.gmra.mxu0 %v182
    %v475 = vpop.f32.mrf.mxu0
    %v476 = vadd.f32 %v155, %v475
    %v477 = vpop.f32.mrf.mxu0
    %v478 = vadd.f32 %v159, %v477
    %v479 = vpop.f32.mrf.mxu0
    %v480 = vadd.f32 %v155, %v479
    %v481 = vpop.f32.mrf.mxu0
    %v482 = vadd.f32 %v159, %v481
    %483 = vmatprep.mubr.bf16.mxu0 0
    %484 = vmatmul.mubr.bf16.gmra.mxu0 %v183
    %v485 = vpop.f32.mrf.mxu0
    %v486 = vadd.f32 %v155, %v485
    %v487 = vpop.f32.mrf.mxu0
    %v488 = vadd.f32 %v159, %v487
    %v489 = vpop.f32.mrf.mxu0
    %v490 = vadd.f32 %v155, %v489
    %v491 = vpop.f32.mrf.mxu0
    %v492 = vadd.f32 %v159, %v491
    %493 = vdwg.mxu0
    %494 = vst [vmem:[#allocation2] sm:$0xff] %v383
    %495 = vst [vmem:[#allocation2 + $0x8] sm:$0xff] %v385
    %496 = vst [vmem:[#allocation2 + $0x10] sm:$0xff] %v456
    %497 = vst [vmem:[#allocation2 + $0x18] sm:$0xff] %v458
    %498 = vst [vmem:[#allocation2 + $0x20] sm:$0xff] %v387
    %499 = vst [vmem:[#allocation2 + $0x28] sm:$0xff] %v389
    %500 = vst [vmem:[#allocation2 + $0x30] sm:$0xff] %v460
    %501 = vst [vmem:[#allocation2 + $0x38] sm:$0xff] %v462
    %502 = vst [vmem:[#allocation2 + $0x40] sm:$0xff] %v393
    %503 = vst [vmem:[#allocation2 + $0x48] sm:$0xff] %v395
    %504 = vst [vmem:[#allocation2 + $0x50] sm:$0xff] %v466
    %505 = vst [vmem:[#allocation2 + $0x58] sm:$0xff] %v468
    %506 = vst [vmem:[#allocation2 + $0x60] sm:$0xff] %v397
    %507 = vst [vmem:[#allocation2 + $0x68] sm:$0xff] %v399
    %508 = vst [vmem:[#allocation2 + $0x70] sm:$0xff] %v470
    %509 = vst [vmem:[#allocation2 + $0x78] sm:$0xff] %v472
    %510 = vst [vmem:[#allocation2 + $0x80] sm:$0xff] %v403
    %511 = vst [vmem:[#allocation2 + $0x88] sm:$0xff] %v405
    %512 = vst [vmem:[#allocation2 + $0x90] sm:$0xff] %v476
    %513 = vst [vmem:[#allocation2 + $0x98] sm:$0xff] %v478
    %514 = vst [vmem:[#allocation2 + $0xa0] sm:$0xff] %v407
    %515 = vst [vmem:[#allocation2 + $0xa8] sm:$0xff] %v409
    %516 = vst [vmem:[#allocation2 + $0xb0] sm:$0xff] %v480
    %517 = vst [vmem:[#allocation2 + $0xb8] sm:$0xff] %v482
    %518 = vst [vmem:[#allocation2 + $0xc0] sm:$0xff] %v413
    %519 = vst [vmem:[#allocation2 + $0xc8] sm:$0xff] %v415
    %520 = vst [vmem:[#allocation2 + $0xd0] sm:$0xff] %v486
    %521 = vst [vmem:[#allocation2 + $0xd8] sm:$0xff] %v488
    %522 = vst [vmem:[#allocation2 + $0xe0] sm:$0xff] %v417
    %523 = vst [vmem:[#allocation2 + $0xe8] sm:$0xff] %v419
    %524 = vst [vmem:[#allocation2 + $0xf0] sm:$0xff] %v490
    %525 = vst [vmem:[#allocation2 + $0xf8] sm:$0xff] %v492
    %v526 = vld [vmem:[#allocation9] sm:$0xff]
    %v527 = vld [vmem:[#allocation9 + $0x8] sm:$0xff]
    %v528 = vld [vmem:[#allocation9 + $0x10] sm:$0xff]
    %v529 = vld [vmem:[#allocation9 + $0x18] sm:$0xff]
    %v530 = vld [vmem:[#allocation9 + $0x20] sm:$0xff]
    %v531 = vld [vmem:[#allocation9 + $0x28] sm:$0xff]
    %v532 = vld [vmem:[#allocation9 + $0x30] sm:$0xff]
    %v533 = vld [vmem:[#allocation9 + $0x38] sm:$0xff]
    %v534 = vld [vmem:[#allocation9 + $0x40] sm:$0xff]
    %v535 = vld [vmem:[#allocation9 + $0x48] sm:$0xff]
    %v536 = vld [vmem:[#allocation9 + $0x50] sm:$0xff]
    %v537 = vld [vmem:[#allocation9 + $0x58] sm:$0xff]
    %v538 = vld [vmem:[#allocation9 + $0x60] sm:$0xff]
    %v539 = vld [vmem:[#allocation9 + $0x68] sm:$0xff]
    %v540 = vld [vmem:[#allocation9 + $0x70] sm:$0xff]
    %v541 = vld [vmem:[#allocation9 + $0x78] sm:$0xff]
    %v542 = vld [vmem:[#allocation9 + $0x80] sm:$0xff]
    %v543 = vld [vmem:[#allocation9 + $0x88] sm:$0xff]
    %v544 = vld [vmem:[#allocation9 + $0x90] sm:$0xff]
    %v545 = vld [vmem:[#allocation9 + $0x98] sm:$0xff]
    %v546 = vld [vmem:[#allocation9 + $0xa0] sm:$0xff]
    %v547 = vld [vmem:[#allocation9 + $0xa8] sm:$0xff]
    %v548 = vld [vmem:[#allocation9 + $0xb0] sm:$0xff]
    %v549 = vld [vmem:[#allocation9 + $0xb8] sm:$0xff]
    %v550 = vld [vmem:[#allocation9 + $0xc0] sm:$0xff]
    %v551 = vld [vmem:[#allocation9 + $0xc8] sm:$0xff]
    %v552 = vld [vmem:[#allocation9 + $0xd0] sm:$0xff]
    %v553 = vld [vmem:[#allocation9 + $0xd8] sm:$0xff]
    %v554 = vld [vmem:[#allocation9 + $0xe0] sm:$0xff]
    %v555 = vld [vmem:[#allocation9 + $0xe8] sm:$0xff]
    %v556 = vld [vmem:[#allocation9 + $0xf0] sm:$0xff]
    %v557 = vld [vmem:[#allocation9 + $0xf8] sm:$0xff]
    %v558 = vld [vmem:[%s5] sm:$0xf]
    %v560 = vlaneseq
    %v561 = vshrl.u32 %v560, 7
    %v562 = vsub.s32 0, %v561
    %v563 = vrot.slane %v558, %v562
    %v564 = vlaneseq
    %v565 = vshrl.u32 %v564, 7
    %v566 = vsub.s32 1, %v565
    %v567 = vrot.slane %v558, %v566
    %v568 = vlaneseq
    %v569 = vshrl.u32 %v568, 7
    %v570 = vsub.s32 2, %v569
    %v571 = vrot.slane %v558, %v570
    %v572 = vlaneseq
    %v573 = vshrl.u32 %v572, 7
    %v574 = vsub.s32 3, %v573
    %v575 = vrot.slane %v558, %v574
    %v612 = vunpack.c.l.b16 %v526
    %v613 = vunpack.c.h.b16 %v526
    %v614 = vunpack.c.l.b16 %v527
    %v615 = vunpack.c.h.b16 %v527
    %v616 = vunpack.c.l.b16 %v528
    %v617 = vunpack.c.h.b16 %v528
    %v618 = vunpack.c.l.b16 %v529
    %v619 = vunpack.c.h.b16 %v529
    %v620 = vunpack.c.l.b16 %v530
    %v621 = vunpack.c.h.b16 %v530
    %v622 = vunpack.c.l.b16 %v531
    %v623 = vunpack.c.h.b16 %v531
    %v624 = vunpack.c.l.b16 %v532
    %v625 = vunpack.c.h.b16 %v532
    %v626 = vunpack.c.l.b16 %v533
    %v627 = vunpack.c.h.b16 %v533
    %v628 = vunpack.c.l.b16 %v534
    %v629 = vunpack.c.h.b16 %v534
    %v630 = vunpack.c.l.b16 %v535
    %v631 = vunpack.c.h.b16 %v535
    %v632 = vunpack.c.l.b16 %v536
    %v633 = vunpack.c.h.b16 %v536
    %v634 = vunpack.c.l.b16 %v537
    %v635 = vunpack.c.h.b16 %v537
    %v636 = vunpack.c.l.b16 %v538
    %v637 = vunpack.c.h.b16 %v538
    %v638 = vunpack.c.l.b16 %v539
    %v639 = vunpack.c.h.b16 %v539
    %v640 = vunpack.c.l.b16 %v540
    %v641 = vunpack.c.h.b16 %v540
    %v642 = vunpack.c.l.b16 %v541
    %v643 = vunpack.c.h.b16 %v541
    %v644 = vunpack.c.l.b16 %v542
    %v645 = vunpack.c.h.b16 %v542
    %v646 = vunpack.c.l.b16 %v543
    %v647 = vunpack.c.h.b16 %v543
    %v648 = vunpack.c.l.b16 %v544
    %v649 = vunpack.c.h.b16 %v544
    %v650 = vunpack.c.l.b16 %v545
    %v651 = vunpack.c.h.b16 %v545
    %v652 = vunpack.c.l.b16 %v546
    %v653 = vunpack.c.h.b16 %v546
    %v654 = vunpack.c.l.b16 %v547
    %v655 = vunpack.c.h.b16 %v547
    %v656 = vunpack.c.l.b16 %v548
    %v657 = vunpack.c.h.b16 %v548
    %v658 = vunpack.c.l.b16 %v549
    %v659 = vunpack.c.h.b16 %v549
    %v660 = vunpack.c.l.b16 %v550
    %v661 = vunpack.c.h.b16 %v550
    %v662 = vunpack.c.l.b16 %v551
    %v663 = vunpack.c.h.b16 %v551
    %v664 = vunpack.c.l.b16 %v552
    %v665 = vunpack.c.h.b16 %v552
    %v666 = vunpack.c.l.b16 %v553
    %v667 = vunpack.c.h.b16 %v553
    %v668 = vunpack.c.l.b16 %v554
    %v669 = vunpack.c.h.b16 %v554
    %v670 = vunpack.c.l.b16 %v555
    %v671 = vunpack.c.h.b16 %v555
    %v672 = vunpack.c.l.b16 %v556
    %v673 = vunpack.c.h.b16 %v556
    %v674 = vunpack.c.l.b16 %v557
    %v675 = vunpack.c.h.b16 %v557
    %v676 = vpack.c.b16 %v616, %v612
    %v677 = vpack.c.b16 %v617, %v613
    %v678 = vpack.c.b16 %v618, %v614
    %v679 = vpack.c.b16 %v619, %v615
    %v680 = vpack.c.b16 %v624, %v620
    %v681 = vpack.c.b16 %v625, %v621
    %v682 = vpack.c.b16 %v626, %v622
    %v683 = vpack.c.b16 %v627, %v623
    %v684 = vpack.c.b16 %v632, %v628
    %v685 = vpack.c.b16 %v633, %v629
    %v686 = vpack.c.b16 %v634, %v630
    %v687 = vpack.c.b16 %v635, %v631
    %v688 = vpack.c.b16 %v640, %v636
    %v689 = vpack.c.b16 %v641, %v637
    %v690 = vpack.c.b16 %v642, %v638
    %v691 = vpack.c.b16 %v643, %v639
    %v692 = vpack.c.b16 %v648, %v644
    %v693 = vpack.c.b16 %v649, %v645
    %v694 = vpack.c.b16 %v650, %v646
    %v695 = vpack.c.b16 %v651, %v647
    %v696 = vpack.c.b16 %v656, %v652
    %v697 = vpack.c.b16 %v657, %v653
    %v698 = vpack.c.b16 %v658, %v654
    %v699 = vpack.c.b16 %v659, %v655
    %v700 = vpack.c.b16 %v664, %v660
    %v701 = vpack.c.b16 %v665, %v661
    %v702 = vpack.c.b16 %v666, %v662
    %v703 = vpack.c.b16 %v667, %v663
    %v704 = vpack.c.b16 %v672, %v668
    %v705 = vpack.c.b16 %v673, %v669
    %v706 = vpack.c.b16 %v674, %v670
    %v707 = vpack.c.b16 %v675, %v671
    %740 = vmatprep.subr.bf16.mxu0 %v705
    %741 = vmatpush1.bf16.msra.mxu0 %v704
    %742 = vmatprep.subr.bf16.mxu0 %v701
    %743 = vmatpush1.bf16.msra.mxu0 %v700
    %744 = vmatprep.subr.bf16.mxu0 %v697
    %745 = vmatpush1.bf16.msra.mxu0 %v696
    %746 = vmatprep.subr.bf16.mxu0 %v693
    %747 = vmatpush1.bf16.msra.mxu0 %v692
    %748 = vmatprep.subr.bf16.mxu0 %v689
    %749 = vmatpush1.bf16.msra.mxu0 %v688
    %750 = vmatprep.subr.bf16.mxu0 %v685
    %751 = vmatpush1.bf16.msra.mxu0 %v684
    %752 = vmatprep.subr.bf16.mxu0 %v681
    %753 = vmatpush1.bf16.msra.mxu0 %v680
    %754 = vmatprep.subr.bf16.mxu0 %v677
    %755 = vmatpush1.bf16.msra.mxu0 %v676
    %756 = vmatprep.subr.bf16.mxu0 0
    %757 = vmatpush2.bf16.msra.mxu0 0
    %758 = vmatprep.subr.bf16.mxu0 0
    %759 = vmatpush2.bf16.msra.mxu0 0
    %760 = vmatprep.subr.bf16.mxu0 0
    %761 = vmatpush2.bf16.msra.mxu0 0
    %762 = vmatprep.subr.bf16.mxu0 0
    %763 = vmatpush2.bf16.msra.mxu0 0
    %764 = vmatprep.subr.bf16.mxu0 0
    %765 = vmatpush2.bf16.msra.mxu0 0
    %766 = vmatprep.subr.bf16.mxu0 0
    %767 = vmatpush2.bf16.msra.mxu0 0
    %768 = vmatprep.subr.bf16.mxu0 0
    %769 = vmatpush2.bf16.msra.mxu0 0
    %770 = vmatprep.subr.bf16.mxu0 0
    %771 = vmatpush2.bf16.msra.mxu0 0
    %772 = vmatprep.mubr.bf16.mxu0 0
    %773 = vmatmul.mubr.bf16.gmra.mxu0 %v180
    %v774 = vpop.f32.mrf.mxu0
    %v775 = vadd.f32 %v563, %v774
    %v776 = vpop.f32.mrf.mxu0
    %v777 = vadd.f32 %v567, %v776
    %v778 = vpop.f32.mrf.mxu0
    %v779 = vadd.f32 %v563, %v778
    %v780 = vpop.f32.mrf.mxu0
    %v781 = vadd.f32 %v567, %v780
    %782 = vmatprep.mubr.bf16.mxu0 0
    %783 = vmatmul.mubr.bf16.gmra.mxu0 %v181
    %v784 = vpop.f32.mrf.mxu0
    %v785 = vadd.f32 %v563, %v784
    %v786 = vpop.f32.mrf.mxu0
    %v787 = vadd.f32 %v567, %v786
    %v788 = vpop.f32.mrf.mxu0
    %v789 = vadd.f32 %v563, %v788
    %v790 = vpop.f32.mrf.mxu0
    %v791 = vadd.f32 %v567, %v790
    %792 = vmatprep.mubr.bf16.mxu0 0
    %793 = vmatmul.mubr.bf16.gmra.mxu0 %v182
    %v794 = vpop.f32.mrf.mxu0
    %v795 = vadd.f32 %v563, %v794
    %v796 = vpop.f32.mrf.mxu0
    %v797 = vadd.f32 %v567, %v796
    %v798 = vpop.f32.mrf.mxu0
    %v799 = vadd.f32 %v563, %v798
    %v800 = vpop.f32.mrf.mxu0
    %v801 = vadd.f32 %v567, %v800
    %802 = vmatprep.mubr.bf16.mxu0 0
    %803 = vmatmul.mubr.bf16.gmra.mxu0 %v183
    %v804 = vpop.f32.mrf.mxu0
    %v805 = vadd.f32 %v563, %v804
    %v806 = vpop.f32.mrf.mxu0
    %v807 = vadd.f32 %v567, %v806
    %v808 = vpop.f32.mrf.mxu0
    %v809 = vadd.f32 %v563, %v808
    %v810 = vpop.f32.mrf.mxu0
    %v811 = vadd.f32 %v567, %v810
    %812 = vdwg.mxu0
    %813 = vmatprep.subr.bf16.mxu0 %v707
    %814 = vmatpush1.bf16.msra.mxu0 %v706
    %815 = vmatprep.subr.bf16.mxu0 %v703
    %816 = vmatpush1.bf16.msra.mxu0 %v702
    %817 = vmatprep.subr.bf16.mxu0 %v699
    %818 = vmatpush1.bf16.msra.mxu0 %v698
    %819 = vmatprep.subr.bf16.mxu0 %v695
    %820 = vmatpush1.bf16.msra.mxu0 %v694
    %821 = vmatprep.subr.bf16.mxu0 %v691
    %822 = vmatpush1.bf16.msra.mxu0 %v690
    %823 = vmatprep.subr.bf16.mxu0 %v687
    %824 = vmatpush1.bf16.msra.mxu0 %v686
    %825 = vmatprep.subr.bf16.mxu0 %v683
    %826 = vmatpush1.bf16.msra.mxu0 %v682
    %827 = vmatprep.subr.bf16.mxu0 %v679
    %828 = vmatpush1.bf16.msra.mxu0 %v678
    %829 = vmatprep.subr.bf16.mxu0 0
    %830 = vmatpush2.bf16.msra.mxu0 0
    %831 = vmatprep.subr.bf16.mxu0 0
    %832 = vmatpush2.bf16.msra.mxu0 0
    %833 = vmatprep.subr.bf16.mxu0 0
    %834 = vmatpush2.bf16.msra.mxu0 0
    %835 = vmatprep.subr.bf16.mxu0 0
    %836 = vmatpush2.bf16.msra.mxu0 0
    %837 = vmatprep.subr.bf16.mxu0 0
    %838 = vmatpush2.bf16.msra.mxu0 0
    %839 = vmatprep.subr.bf16.mxu0 0
    %840 = vmatpush2.bf16.msra.mxu0 0
    %841 = vmatprep.subr.bf16.mxu0 0
    %842 = vmatpush2.bf16.msra.mxu0 0
    %843 = vmatprep.subr.bf16.mxu0 0
    %844 = vmatpush2.bf16.msra.mxu0 0
    %845 = vmatprep.mubr.bf16.mxu0 0
    %846 = vmatmul.mubr.bf16.gmra.mxu0 %v180
    %v847 = vpop.f32.mrf.mxu0
    %v848 = vadd.f32 %v571, %v847
    %v849 = vpop.f32.mrf.mxu0
    %v850 = vadd.f32 %v575, %v849
    %v851 = vpop.f32.mrf.mxu0
    %v852 = vadd.f32 %v571, %v851
    %v853 = vpop.f32.mrf.mxu0
    %v854 = vadd.f32 %v575, %v853
    %855 = vmatprep.mubr.bf16.mxu0 0
    %856 = vmatmul.mubr.bf16.gmra.mxu0 %v181
    %v857 = vpop.f32.mrf.mxu0
    %v858 = vadd.f32 %v571, %v857
    %v859 = vpop.f32.mrf.mxu0
    %v860 = vadd.f32 %v575, %v859
    %v861 = vpop.f32.mrf.mxu0
    %v862 = vadd.f32 %v571, %v861
    %v863 = vpop.f32.mrf.mxu0
    %v864 = vadd.f32 %v575, %v863
    %865 = vmatprep.mubr.bf16.mxu0 0
    %866 = vmatmul.mubr.bf16.gmra.mxu0 %v182
    %v867 = vpop.f32.mrf.mxu0
    %v868 = vadd.f32 %v571, %v867
    %v869 = vpop.f32.mrf.mxu0
    %v870 = vadd.f32 %v575, %v869
    %v871 = vpop.f32.mrf.mxu0
    %v872 = vadd.f32 %v571, %v871
    %v873 = vpop.f32.mrf.mxu0
    %v874 = vadd.f32 %v575, %v873
    %875 = vmatprep.mubr.bf16.mxu0 0
    %876 = vmatmul.mubr.bf16.gmra.mxu0 %v183
    %v877 = vpop.f32.mrf.mxu0
    %v878 = vadd.f32 %v571, %v877
    %v879 = vpop.f32.mrf.mxu0
    %v880 = vadd.f32 %v575, %v879
    %v881 = vpop.f32.mrf.mxu0
    %v882 = vadd.f32 %v571, %v881
    %v883 = vpop.f32.mrf.mxu0
    %v884 = vadd.f32 %v575, %v883
    %885 = vdwg.mxu0
    %886 = vst [vmem:[#allocation3] sm:$0xff] %v775
    %887 = vst [vmem:[#allocation3 + $0x8] sm:$0xff] %v777
    %888 = vst [vmem:[#allocation3 + $0x10] sm:$0xff] %v848
    %889 = vst [vmem:[#allocation3 + $0x18] sm:$0xff] %v850
    %890 = vst [vmem:[#allocation3 + $0x20] sm:$0xff] %v779
    %891 = vst [vmem:[#allocation3 + $0x28] sm:$0xff] %v781
    %892 = vst [vmem:[#allocation3 + $0x30] sm:$0xff] %v852
    %893 = vst [vmem:[#allocation3 + $0x38] sm:$0xff] %v854
    %894 = vst [vmem:[#allocation3 + $0x40] sm:$0xff] %v785
    %895 = vst [vmem:[#allocation3 + $0x48] sm:$0xff] %v787
    %896 = vst [vmem:[#allocation3 + $0x50] sm:$0xff] %v858
    %897 = vst [vmem:[#allocation3 + $0x58] sm:$0xff] %v860
    %898 = vst [vmem:[#allocation3 + $0x60] sm:$0xff] %v789
    %899 = vst [vmem:[#allocation3 + $0x68] sm:$0xff] %v791
    %900 = vst [vmem:[#allocation3 + $0x70] sm:$0xff] %v862
    %901 = vst [vmem:[#allocation3 + $0x78] sm:$0xff] %v864
    %902 = vst [vmem:[#allocation3 + $0x80] sm:$0xff] %v795
    %903 = vst [vmem:[#allocation3 + $0x88] sm:$0xff] %v797
    %904 = vst [vmem:[#allocation3 + $0x90] sm:$0xff] %v868
    %905 = vst [vmem:[#allocation3 + $0x98] sm:$0xff] %v870
    %906 = vst [vmem:[#allocation3 + $0xa0] sm:$0xff] %v799
    %907 = vst [vmem:[#allocation3 + $0xa8] sm:$0xff] %v801
    %908 = vst [vmem:[#allocation3 + $0xb0] sm:$0xff] %v872
    %909 = vst [vmem:[#allocation3 + $0xb8] sm:$0xff] %v874
    %910 = vst [vmem:[#allocation3 + $0xc0] sm:$0xff] %v805
    %911 = vst [vmem:[#allocation3 + $0xc8] sm:$0xff] %v807
    %912 = vst [vmem:[#allocation3 + $0xd0] sm:$0xff] %v878
    %913 = vst [vmem:[#allocation3 + $0xd8] sm:$0xff] %v880
    %914 = vst [vmem:[#allocation3 + $0xe0] sm:$0xff] %v809
    %915 = vst [vmem:[#allocation3 + $0xe8] sm:$0xff] %v811
    %916 = vst [vmem:[#allocation3 + $0xf0] sm:$0xff] %v882
    %917 = vst [vmem:[#allocation3 + $0xf8] sm:$0xff] %v884
    %v918 = vld [vmem:[%s1] sm:$0xff]
    %v919 = vsub.s32 %v918, 1
    %v920 = vpack.c.bf16 0.0, 0.0
    %v921 = vld [vmem:[#allocation10] sm:$0xff]
    %v922 = vld [vmem:[#allocation10 + $0x8] sm:$0xff]
    %v923 = vld [vmem:[#allocation10 + $0x10] sm:$0xff]
    %v924 = vld [vmem:[#allocation10 + $0x18] sm:$0xff]
    %v925 = vld [vmem:[#allocation10 + $0x20] sm:$0xff]
    %v926 = vld [vmem:[#allocation10 + $0x28] sm:$0xff]
    %v927 = vld [vmem:[#allocation10 + $0x30] sm:$0xff]
    %v928 = vld [vmem:[#allocation10 + $0x38] sm:$0xff]
    %v929 = vld [vmem:[#allocation10 + $0x40] sm:$0xff]
    %v930 = vld [vmem:[#allocation10 + $0x48] sm:$0xff]
    %v931 = vld [vmem:[#allocation10 + $0x50] sm:$0xff]
    %v932 = vld [vmem:[#allocation10 + $0x58] sm:$0xff]
    %v933 = vld [vmem:[#allocation10 + $0x60] sm:$0xff]
    %v934 = vld [vmem:[#allocation10 + $0x68] sm:$0xff]
    %v935 = vld [vmem:[#allocation10 + $0x70] sm:$0xff]
    %v936 = vld [vmem:[#allocation10 + $0x78] sm:$0xff]
    %v937 = vld [vmem:[#allocation10 + $0x80] sm:$0xff]
    %v938 = vld [vmem:[#allocation10 + $0x88] sm:$0xff]
    %v939 = vld [vmem:[#allocation10 + $0x90] sm:$0xff]
    %v940 = vld [vmem:[#allocation10 + $0x98] sm:$0xff]
    %v941 = vld [vmem:[#allocation10 + $0xa0] sm:$0xff]
    %v942 = vld [vmem:[#allocation10 + $0xa8] sm:$0xff]
    %v943 = vld [vmem:[#allocation10 + $0xb0] sm:$0xff]
    %v944 = vld [vmem:[#allocation10 + $0xb8] sm:$0xff]
    %v945 = vld [vmem:[#allocation10 + $0xc0] sm:$0xff]
    %v946 = vld [vmem:[#allocation10 + $0xc8] sm:$0xff]
    %v947 = vld [vmem:[#allocation10 + $0xd0] sm:$0xff]
    %v948 = vld [vmem:[#allocation10 + $0xd8] sm:$0xff]
    %v949 = vld [vmem:[#allocation10 + $0xe0] sm:$0xff]
    %v950 = vld [vmem:[#allocation10 + $0xe8] sm:$0xff]
    %v951 = vld [vmem:[#allocation10 + $0xf0] sm:$0xff]
    %v952 = vld [vmem:[#allocation10 + $0xf8] sm:$0xff]
    %v953 = vld [vmem:[#allocation10 + $0x100] sm:$0xff]
    %v954 = vld [vmem:[#allocation10 + $0x108] sm:$0xff]
    %v955 = vld [vmem:[#allocation10 + $0x110] sm:$0xff]
    %v956 = vld [vmem:[#allocation10 + $0x118] sm:$0xff]
    %v957 = vld [vmem:[#allocation10 + $0x120] sm:$0xff]
    %v958 = vld [vmem:[#allocation10 + $0x128] sm:$0xff]
    %v959 = vld [vmem:[#allocation10 + $0x130] sm:$0xff]
    %v960 = vld [vmem:[#allocation10 + $0x138] sm:$0xff]
    %v961 = vld [vmem:[#allocation10 + $0x140] sm:$0xff]
    %v962 = vld [vmem:[#allocation10 + $0x148] sm:$0xff]
    %v963 = vld [vmem:[#allocation10 + $0x150] sm:$0xff]
    %v964 = vld [vmem:[#allocation10 + $0x158] sm:$0xff]
    %v965 = vld [vmem:[#allocation10 + $0x160] sm:$0xff]
    %v966 = vld [vmem:[#allocation10 + $0x168] sm:$0xff]
    %v967 = vld [vmem:[#allocation10 + $0x170] sm:$0xff]
    %v968 = vld [vmem:[#allocation10 + $0x178] sm:$0xff]
    %v969 = vld [vmem:[#allocation10 + $0x180] sm:$0xff]
    %v970 = vld [vmem:[#allocation10 + $0x188] sm:$0xff]
    %v971 = vld [vmem:[#allocation10 + $0x190] sm:$0xff]
    %v972 = vld [vmem:[#allocation10 + $0x198] sm:$0xff]
    %v973 = vld [vmem:[#allocation10 + $0x1a0] sm:$0xff]
    %v974 = vld [vmem:[#allocation10 + $0x1a8] sm:$0xff]
    %v975 = vld [vmem:[#allocation10 + $0x1b0] sm:$0xff]
    %v976 = vld [vmem:[#allocation10 + $0x1b8] sm:$0xff]
    %v977 = vld [vmem:[#allocation10 + $0x1c0] sm:$0xff]
    %v978 = vld [vmem:[#allocation10 + $0x1c8] sm:$0xff]
    %v979 = vld [vmem:[#allocation10 + $0x1d0] sm:$0xff]
    %v980 = vld [vmem:[#allocation10 + $0x1d8] sm:$0xff]
    %v981 = vld [vmem:[#allocation10 + $0x1e0] sm:$0xff]
    %v982 = vld [vmem:[#allocation10 + $0x1e8] sm:$0xff]
    %v983 = vld [vmem:[#allocation10 + $0x1f0] sm:$0xff]
    %v984 = vld [vmem:[#allocation10 + $0x1f8] sm:$0xff]
    %v985 = vld [vmem:[#allocation10 + $0x200] sm:$0xff]
    %v986 = vld [vmem:[#allocation10 + $0x208] sm:$0xff]
    %v987 = vld [vmem:[#allocation10 + $0x210] sm:$0xff]
    %v988 = vld [vmem:[#allocation10 + $0x218] sm:$0xff]
    %v989 = vld [vmem:[#allocation10 + $0x220] sm:$0xff]
    %v990 = vld [vmem:[#allocation10 + $0x228] sm:$0xff]
    %v991 = vld [vmem:[#allocation10 + $0x230] sm:$0xff]
    %v992 = vld [vmem:[#allocation10 + $0x238] sm:$0xff]
    %v993 = vld [vmem:[#allocation10 + $0x240] sm:$0xff]
    %v994 = vld [vmem:[#allocation10 + $0x248] sm:$0xff]
    %v995 = vld [vmem:[#allocation10 + $0x250] sm:$0xff]
    %v996 = vld [vmem:[#allocation10 + $0x258] sm:$0xff]
    %v997 = vld [vmem:[#allocation10 + $0x260] sm:$0xff]
    %v998 = vld [vmem:[#allocation10 + $0x268] sm:$0xff]
    %v999 = vld [vmem:[#allocation10 + $0x270] sm:$0xff]
    %v1000 = vld [vmem:[#allocation10 + $0x278] sm:$0xff]
    %v1001 = vld [vmem:[#allocation10 + $0x280] sm:$0xff]
    %v1002 = vld [vmem:[#allocation10 + $0x288] sm:$0xff]
    %v1003 = vld [vmem:[#allocation10 + $0x290] sm:$0xff]
    %v1004 = vld [vmem:[#allocation10 + $0x298] sm:$0xff]
    %v1005 = vld [vmem:[#allocation10 + $0x2a0] sm:$0xff]
    %v1006 = vld [vmem:[#allocation10 + $0x2a8] sm:$0xff]
    %v1007 = vld [vmem:[#allocation10 + $0x2b0] sm:$0xff]
    %v1008 = vld [vmem:[#allocation10 + $0x2b8] sm:$0xff]
    %v1009 = vld [vmem:[#allocation10 + $0x2c0] sm:$0xff]
    %v1010 = vld [vmem:[#allocation10 + $0x2c8] sm:$0xff]
    %v1011 = vld [vmem:[#allocation10 + $0x2d0] sm:$0xff]
    %v1012 = vld [vmem:[#allocation10 + $0x2d8] sm:$0xff]
    %v1013 = vld [vmem:[#allocation10 + $0x2e0] sm:$0xff]
    %v1014 = vld [vmem:[#allocation10 + $0x2e8] sm:$0xff]
    %v1015 = vld [vmem:[#allocation10 + $0x2f0] sm:$0xff]
    %v1016 = vld [vmem:[#allocation10 + $0x2f8] sm:$0xff]
    %v1017 = vld [vmem:[#allocation10 + $0x300] sm:$0xff]
    %v1018 = vld [vmem:[#allocation10 + $0x308] sm:$0xff]
    %v1019 = vld [vmem:[#allocation10 + $0x310] sm:$0xff]
    %v1020 = vld [vmem:[#allocation10 + $0x318] sm:$0xff]
    %v1021 = vld [vmem:[#allocation10 + $0x320] sm:$0xff]
    %v1022 = vld [vmem:[#allocation10 + $0x328] sm:$0xff]
    %v1023 = vld [vmem:[#allocation10 + $0x330] sm:$0xff]
    %v1024 = vld [vmem:[#allocation10 + $0x338] sm:$0xff]
    %v1025 = vld [vmem:[#allocation10 + $0x340] sm:$0xff]
    %v1026 = vld [vmem:[#allocation10 + $0x348] sm:$0xff]
    %v1027 = vld [vmem:[#allocation10 + $0x350] sm:$0xff]
    %v1028 = vld [vmem:[#allocation10 + $0x358] sm:$0xff]
    %v1029 = vld [vmem:[#allocation10 + $0x360] sm:$0xff]
    %v1030 = vld [vmem:[#allocation10 + $0x368] sm:$0xff]
    %v1031 = vld [vmem:[#allocation10 + $0x370] sm:$0xff]
    %v1032 = vld [vmem:[#allocation10 + $0x378] sm:$0xff]
    %v1033 = vld [vmem:[#allocation10 + $0x380] sm:$0xff]
    %v1034 = vld [vmem:[#allocation10 + $0x388] sm:$0xff]
    %v1035 = vld [vmem:[#allocation10 + $0x390] sm:$0xff]
    %v1036 = vld [vmem:[#allocation10 + $0x398] sm:$0xff]
    %v1037 = vld [vmem:[#allocation10 + $0x3a0] sm:$0xff]
    %v1038 = vld [vmem:[#allocation10 + $0x3a8] sm:$0xff]
    %v1039 = vld [vmem:[#allocation10 + $0x3b0] sm:$0xff]
    %v1040 = vld [vmem:[#allocation10 + $0x3b8] sm:$0xff]
    %v1041 = vld [vmem:[#allocation10 + $0x3c0] sm:$0xff]
    %v1042 = vld [vmem:[#allocation10 + $0x3c8] sm:$0xff]
    %v1043 = vld [vmem:[#allocation10 + $0x3d0] sm:$0xff]
    %v1044 = vld [vmem:[#allocation10 + $0x3d8] sm:$0xff]
    %v1045 = vld [vmem:[#allocation10 + $0x3e0] sm:$0xff]
    %v1046 = vld [vmem:[#allocation10 + $0x3e8] sm:$0xff]
    %v1047 = vld [vmem:[#allocation10 + $0x3f0] sm:$0xff]
    %v1048 = vld [vmem:[#allocation10 + $0x3f8] sm:$0xff]
    %v1177 = vunpack.c.l.b16 %v921
    %v1178 = vunpack.c.h.b16 %v921
    %v1179 = vunpack.c.l.b16 %v922
    %v1180 = vunpack.c.h.b16 %v922
    %v1181 = vunpack.c.l.b16 %v923
    %v1182 = vunpack.c.h.b16 %v923
    %v1183 = vunpack.c.l.b16 %v924
    %v1184 = vunpack.c.h.b16 %v924
    %v1185 = vunpack.c.l.b16 %v925
    %v1186 = vunpack.c.h.b16 %v925
    %v1187 = vunpack.c.l.b16 %v926
    %v1188 = vunpack.c.h.b16 %v926
    %v1189 = vunpack.c.l.b16 %v927
    %v1190 = vunpack.c.h.b16 %v927
    %v1191 = vunpack.c.l.b16 %v928
    %v1192 = vunpack.c.h.b16 %v928
    %v1193 = vunpack.c.l.b16 %v929
    %v1194 = vunpack.c.h.b16 %v929
    %v1195 = vunpack.c.l.b16 %v930
    %v1196 = vunpack.c.h.b16 %v930
    %v1197 = vunpack.c.l.b16 %v931
    %v1198 = vunpack.c.h.b16 %v931
    %v1199 = vunpack.c.l.b16 %v932
    %v1200 = vunpack.c.h.b16 %v932
    %v1201 = vunpack.c.l.b16 %v933
    %v1202 = vunpack.c.h.b16 %v933
    %v1203 = vunpack.c.l.b16 %v934
    %v1204 = vunpack.c.h.b16 %v934
    %v1205 = vunpack.c.l.b16 %v935
    %v1206 = vunpack.c.h.b16 %v935
    %v1207 = vunpack.c.l.b16 %v936
    %v1208 = vunpack.c.h.b16 %v936
    %v1209 = vunpack.c.l.b16 %v937
    %v1210 = vunpack.c.h.b16 %v937
    %v1211 = vunpack.c.l.b16 %v938
    %v1212 = vunpack.c.h.b16 %v938
    %v1213 = vunpack.c.l.b16 %v939
    %v1214 = vunpack.c.h.b16 %v939
    %v1215 = vunpack.c.l.b16 %v940
    %v1216 = vunpack.c.h.b16 %v940
    %v1217 = vunpack.c.l.b16 %v941
    %v1218 = vunpack.c.h.b16 %v941
    %v1219 = vunpack.c.l.b16 %v942
    %v1220 = vunpack.c.h.b16 %v942
    %v1221 = vunpack.c.l.b16 %v943
    %v1222 = vunpack.c.h.b16 %v943
    %v1223 = vunpack.c.l.b16 %v944
    %v1224 = vunpack.c.h.b16 %v944
    %v1225 = vunpack.c.l.b16 %v945
    %v1226 = vunpack.c.h.b16 %v945
    %v1227 = vunpack.c.l.b16 %v946
    %v1228 = vunpack.c.h.b16 %v946
    %v1229 = vunpack.c.l.b16 %v947
    %v1230 = vunpack.c.h.b16 %v947
    %v1231 = vunpack.c.l.b16 %v948
    %v1232 = vunpack.c.h.b16 %v948
    %v1233 = vunpack.c.l.b16 %v949
    %v1234 = vunpack.c.h.b16 %v949
    %v1235 = vunpack.c.l.b16 %v950
    %v1236 = vunpack.c.h.b16 %v950
    %v1237 = vunpack.c.l.b16 %v951
    %v1238 = vunpack.c.h.b16 %v951
    %v1239 = vunpack.c.l.b16 %v952
    %v1240 = vunpack.c.h.b16 %v952
    %v1241 = vunpack.c.l.b16 %v953
    %v1242 = vunpack.c.h.b16 %v953
    %v1243 = vunpack.c.l.b16 %v954
    %v1244 = vunpack.c.h.b16 %v954
    %v1245 = vunpack.c.l.b16 %v955
    %v1246 = vunpack.c.h.b16 %v955
    %v1247 = vunpack.c.l.b16 %v956
    %v1248 = vunpack.c.h.b16 %v956
    %v1249 = vunpack.c.l.b16 %v957
    %v1250 = vunpack.c.h.b16 %v957
    %v1251 = vunpack.c.l.b16 %v958
    %v1252 = vunpack.c.h.b16 %v958
    %v1253 = vunpack.c.l.b16 %v959
    %v1254 = vunpack.c.h.b16 %v959
    %v1255 = vunpack.c.l.b16 %v960
    %v1256 = vunpack.c.h.b16 %v960
    %v1257 = vunpack.c.l.b16 %v961
    %v1258 = vunpack.c.h.b16 %v961
    %v1259 = vunpack.c.l.b16 %v962
    %v1260 = vunpack.c.h.b16 %v962
    %v1261 = vunpack.c.l.b16 %v963
    %v1262 = vunpack.c.h.b16 %v963
    %v1263 = vunpack.c.l.b16 %v964
    %v1264 = vunpack.c.h.b16 %v964
    %v1265 = vunpack.c.l.b16 %v965
    %v1266 = vunpack.c.h.b16 %v965
    %v1267 = vunpack.c.l.b16 %v966
    %v1268 = vunpack.c.h.b16 %v966
    %v1269 = vunpack.c.l.b16 %v967
    %v1270 = vunpack.c.h.b16 %v967
    %v1271 = vunpack.c.l.b16 %v968
    %v1272 = vunpack.c.h.b16 %v968
    %v1273 = vunpack.c.l.b16 %v969
    %v1274 = vunpack.c.h.b16 %v969
    %v1275 = vunpack.c.l.b16 %v970
    %v1276 = vunpack.c.h.b16 %v970
    %v1277 = vunpack.c.l.b16 %v971
    %v1278 = vunpack.c.h.b16 %v971
    %v1279 = vunpack.c.l.b16 %v972
    %v1280 = vunpack.c.h.b16 %v972
    %v1281 = vunpack.c.l.b16 %v973
    %v1282 = vunpack.c.h.b16 %v973
    %v1283 = vunpack.c.l.b16 %v974
    %v1284 = vunpack.c.h.b16 %v974
    %v1285 = vunpack.c.l.b16 %v975
    %v1286 = vunpack.c.h.b16 %v975
    %v1287 = vunpack.c.l.b16 %v976
    %v1288 = vunpack.c.h.b16 %v976
    %v1289 = vunpack.c.l.b16 %v977
    %v1290 = vunpack.c.h.b16 %v977
    %v1291 = vunpack.c.l.b16 %v978
    %v1292 = vunpack.c.h.b16 %v978
    %v1293 = vunpack.c.l.b16 %v979
    %v1294 = vunpack.c.h.b16 %v979
    %v1295 = vunpack.c.l.b16 %v980
    %v1296 = vunpack.c.h.b16 %v980
    %v1297 = vunpack.c.l.b16 %v981
    %v1298 = vunpack.c.h.b16 %v981
    %v1299 = vunpack.c.l.b16 %v982
    %v1300 = vunpack.c.h.b16 %v982
    %v1301 = vunpack.c.l.b16 %v983
    %v1302 = vunpack.c.h.b16 %v983
    %v1303 = vunpack.c.l.b16 %v984
    %v1304 = vunpack.c.h.b16 %v984
    %v1305 = vunpack.c.l.b16 %v985
    %v1306 = vunpack.c.h.b16 %v985
    %v1307 = vunpack.c.l.b16 %v986
    %v1308 = vunpack.c.h.b16 %v986
    %v1309 = vunpack.c.l.b16 %v987
    %v1310 = vunpack.c.h.b16 %v987
    %v1311 = vunpack.c.l.b16 %v988
    %v1312 = vunpack.c.h.b16 %v988
    %v1313 = vunpack.c.l.b16 %v989
    %v1314 = vunpack.c.h.b16 %v989
    %v1315 = vunpack.c.l.b16 %v990
    %v1316 = vunpack.c.h.b16 %v990
    %v1317 = vunpack.c.l.b16 %v991
    %v1318 = vunpack.c.h.b16 %v991
    %v1319 = vunpack.c.l.b16 %v992
    %v1320 = vunpack.c.h.b16 %v992
    %v1321 = vunpack.c.l.b16 %v993
    %v1322 = vunpack.c.h.b16 %v993
    %v1323 = vunpack.c.l.b16 %v994
    %v1324 = vunpack.c.h.b16 %v994
    %v1325 = vunpack.c.l.b16 %v995
    %v1326 = vunpack.c.h.b16 %v995
    %v1327 = vunpack.c.l.b16 %v996
    %v1328 = vunpack.c.h.b16 %v996
    %v1329 = vunpack.c.l.b16 %v997
    %v1330 = vunpack.c.h.b16 %v997
    %v1331 = vunpack.c.l.b16 %v998
    %v1332 = vunpack.c.h.b16 %v998
    %v1333 = vunpack.c.l.b16 %v999
    %v1334 = vunpack.c.h.b16 %v999
    %v1335 = vunpack.c.l.b16 %v1000
    %v1336 = vunpack.c.h.b16 %v1000
    %v1337 = vunpack.c.l.b16 %v1001
    %v1338 = vunpack.c.h.b16 %v1001
    %v1339 = vunpack.c.l.b16 %v1002
    %v1340 = vunpack.c.h.b16 %v1002
    %v1341 = vunpack.c.l.b16 %v1003
    %v1342 = vunpack.c.h.b16 %v1003
    %v1343 = vunpack.c.l.b16 %v1004
    %v1344 = vunpack.c.h.b16 %v1004
    %v1345 = vunpack.c.l.b16 %v1005
    %v1346 = vunpack.c.h.b16 %v1005
    %v1347 = vunpack.c.l.b16 %v1006
    %v1348 = vunpack.c.h.b16 %v1006
    %v1349 = vunpack.c.l.b16 %v1007
    %v1350 = vunpack.c.h.b16 %v1007
    %v1351 = vunpack.c.l.b16 %v1008
    %v1352 = vunpack.c.h.b16 %v1008
    %v1353 = vunpack.c.l.b16 %v1009
    %v1354 = vunpack.c.h.b16 %v1009
    %v1355 = vunpack.c.l.b16 %v1010
    %v1356 = vunpack.c.h.b16 %v1010
    %v1357 = vunpack.c.l.b16 %v1011
    %v1358 = vunpack.c.h.b16 %v1011
    %v1359 = vunpack.c.l.b16 %v1012
    %v1360 = vunpack.c.h.b16 %v1012
    %v1361 = vunpack.c.l.b16 %v1013
    %v1362 = vunpack.c.h.b16 %v1013
    %v1363 = vunpack.c.l.b16 %v1014
    %v1364 = vunpack.c.h.b16 %v1014
    %v1365 = vunpack.c.l.b16 %v1015
    %v1366 = vunpack.c.h.b16 %v1015
    %v1367 = vunpack.c.l.b16 %v1016
    %v1368 = vunpack.c.h.b16 %v1016
    %v1369 = vunpack.c.l.b16 %v1017
    %v1370 = vunpack.c.h.b16 %v1017
    %v1371 = vunpack.c.l.b16 %v1018
    %v1372 = vunpack.c.h.b16 %v1018
    %v1373 = vunpack.c.l.b16 %v1019
    %v1374 = vunpack.c.h.b16 %v1019
    %v1375 = vunpack.c.l.b16 %v1020
    %v1376 = vunpack.c.h.b16 %v1020
    %v1377 = vunpack.c.l.b16 %v1021
    %v1378 = vunpack.c.h.b16 %v1021
    %v1379 = vunpack.c.l.b16 %v1022
    %v1380 = vunpack.c.h.b16 %v1022
    %v1381 = vunpack.c.l.b16 %v1023
    %v1382 = vunpack.c.h.b16 %v1023
    %v1383 = vunpack.c.l.b16 %v1024
    %v1384 = vunpack.c.h.b16 %v1024
    %v1385 = vunpack.c.l.b16 %v1025
    %v1386 = vunpack.c.h.b16 %v1025
    %v1387 = vunpack.c.l.b16 %v1026
    %v1388 = vunpack.c.h.b16 %v1026
    %v1389 = vunpack.c.l.b16 %v1027
    %v1390 = vunpack.c.h.b16 %v1027
    %v1391 = vunpack.c.l.b16 %v1028
    %v1392 = vunpack.c.h.b16 %v1028
    %v1393 = vunpack.c.l.b16 %v1029
    %v1394 = vunpack.c.h.b16 %v1029
    %v1395 = vunpack.c.l.b16 %v1030
    %v1396 = vunpack.c.h.b16 %v1030
    %v1397 = vunpack.c.l.b16 %v1031
    %v1398 = vunpack.c.h.b16 %v1031
    %v1399 = vunpack.c.l.b16 %v1032
    %v1400 = vunpack.c.h.b16 %v1032
    %v1401 = vunpack.c.l.b16 %v1033
    %v1402 = vunpack.c.h.b16 %v1033
    %v1403 = vunpack.c.l.b16 %v1034
    %v1404 = vunpack.c.h.b16 %v1034
    %v1405 = vunpack.c.l.b16 %v1035
    %v1406 = vunpack.c.h.b16 %v1035
    %v1407 = vunpack.c.l.b16 %v1036
    %v1408 = vunpack.c.h.b16 %v1036
    %v1409 = vunpack.c.l.b16 %v1037
    %v1410 = vunpack.c.h.b16 %v1037
    %v1411 = vunpack.c.l.b16 %v1038
    %v1412 = vunpack.c.h.b16 %v1038
    %v1413 = vunpack.c.l.b16 %v1039
    %v1414 = vunpack.c.h.b16 %v1039
    %v1415 = vunpack.c.l.b16 %v1040
    %v1416 = vunpack.c.h.b16 %v1040
    %v1417 = vunpack.c.l.b16 %v1041
    %v1418 = vunpack.c.h.b16 %v1041
    %v1419 = vunpack.c.l.b16 %v1042
    %v1420 = vunpack.c.h.b16 %v1042
    %v1421 = vunpack.c.l.b16 %v1043
    %v1422 = vunpack.c.h.b16 %v1043
    %v1423 = vunpack.c.l.b16 %v1044
    %v1424 = vunpack.c.h.b16 %v1044
    %v1425 = vunpack.c.l.b16 %v1045
    %v1426 = vunpack.c.h.b16 %v1045
    %v1427 = vunpack.c.l.b16 %v1046
    %v1428 = vunpack.c.h.b16 %v1046
    %v1429 = vunpack.c.l.b16 %v1047
    %v1430 = vunpack.c.h.b16 %v1047
    %v1431 = vunpack.c.l.b16 %v1048
    %v1432 = vunpack.c.h.b16 %v1048
    %v1433 = vpack.c.b16 %v1185, %v1177
    %v1434 = vpack.c.b16 %v1186, %v1178
    %v1435 = vpack.c.b16 %v1187, %v1179
    %v1436 = vpack.c.b16 %v1188, %v1180
    %v1437 = vpack.c.b16 %v1189, %v1181
    %v1438 = vpack.c.b16 %v1190, %v1182
    %v1439 = vpack.c.b16 %v1191, %v1183
    %v1440 = vpack.c.b16 %v1192, %v1184
    %v1441 = vpack.c.b16 %v1201, %v1193
    %v1442 = vpack.c.b16 %v1202, %v1194
    %v1443 = vpack.c.b16 %v1203, %v1195
    %v1444 = vpack.c.b16 %v1204, %v1196
    %v1445 = vpack.c.b16 %v1205, %v1197
    %v1446 = vpack.c.b16 %v1206, %v1198
    %v1447 = vpack.c.b16 %v1207, %v1199
    %v1448 = vpack.c.b16 %v1208, %v1200
    %v1449 = vpack.c.b16 %v1217, %v1209
    %v1450 = vpack.c.b16 %v1218, %v1210
    %v1451 = vpack.c.b16 %v1219, %v1211
    %v1452 = vpack.c.b16 %v1220, %v1212
    %v1453 = vpack.c.b16 %v1221, %v1213
    %v1454 = vpack.c.b16 %v1222, %v1214
    %v1455 = vpack.c.b16 %v1223, %v1215
    %v1456 = vpack.c.b16 %v1224, %v1216
    %v1457 = vpack.c.b16 %v1233, %v1225
    %v1458 = vpack.c.b16 %v1234, %v1226
    %v1459 = vpack.c.b16 %v1235, %v1227
    %v1460 = vpack.c.b16 %v1236, %v1228
    %v1461 = vpack.c.b16 %v1237, %v1229
    %v1462 = vpack.c.b16 %v1238, %v1230
    %v1463 = vpack.c.b16 %v1239, %v1231
    %v1464 = vpack.c.b16 %v1240, %v1232
    %v1465 = vpack.c.b16 %v1249, %v1241
    %v1466 = vpack.c.b16 %v1250, %v1242
    %v1467 = vpack.c.b16 %v1251, %v1243
    %v1468 = vpack.c.b16 %v1252, %v1244
    %v1469 = vpack.c.b16 %v1253, %v1245
    %v1470 = vpack.c.b16 %v1254, %v1246
    %v1471 = vpack.c.b16 %v1255, %v1247
    %v1472 = vpack.c.b16 %v1256, %v1248
    %v1473 = vpack.c.b16 %v1265, %v1257
    %v1474 = vpack.c.b16 %v1266, %v1258
    %v1475 = vpack.c.b16 %v1267, %v1259
    %v1476 = vpack.c.b16 %v1268, %v1260
    %v1477 = vpack.c.b16 %v1269, %v1261
    %v1478 = vpack.c.b16 %v1270, %v1262
    %v1479 = vpack.c.b16 %v1271, %v1263
    %v1480 = vpack.c.b16 %v1272, %v1264
    %v1481 = vpack.c.b16 %v1281, %v1273
    %v1482 = vpack.c.b16 %v1282, %v1274
    %v1483 = vpack.c.b16 %v1283, %v1275
    %v1484 = vpack.c.b16 %v1284, %v1276
    %v1485 = vpack.c.b16 %v1285, %v1277
    %v1486 = vpack.c.b16 %v1286, %v1278
    %v1487 = vpack.c.b16 %v1287, %v1279
    %v1488 = vpack.c.b16 %v1288, %v1280
    %v1489 = vpack.c.b16 %v1297, %v1289
    %v1490 = vpack.c.b16 %v1298, %v1290
    %v1491 = vpack.c.b16 %v1299, %v1291
    %v1492 = vpack.c.b16 %v1300, %v1292
    %v1493 = vpack.c.b16 %v1301, %v1293
    %v1494 = vpack.c.b16 %v1302, %v1294
    %v1495 = vpack.c.b16 %v1303, %v1295
    %v1496 = vpack.c.b16 %v1304, %v1296
    %v1497 = vpack.c.b16 %v1313, %v1305
    %v1498 = vpack.c.b16 %v1314, %v1306
    %v1499 = vpack.c.b16 %v1315, %v1307
    %v1500 = vpack.c.b16 %v1316, %v1308
    %v1501 = vpack.c.b16 %v1317, %v1309
    %v1502 = vpack.c.b16 %v1318, %v1310
    %v1503 = vpack.c.b16 %v1319, %v1311
    %v1504 = vpack.c.b16 %v1320, %v1312
    %v1505 = vpack.c.b16 %v1329, %v1321
    %v1506 = vpack.c.b16 %v1330, %v1322
    %v1507 = vpack.c.b16 %v1331, %v1323
    %v1508 = vpack.c.b16 %v1332, %v1324
    %v1509 = vpack.c.b16 %v1333, %v1325
    %v1510 = vpack.c.b16 %v1334, %v1326
    %v1511 = vpack.c.b16 %v1335, %v1327
    %v1512 = vpack.c.b16 %v1336, %v1328
    %v1513 = vpack.c.b16 %v1345, %v1337
    %v1514 = vpack.c.b16 %v1346, %v1338
    %v1515 = vpack.c.b16 %v1347, %v1339
    %v1516 = vpack.c.b16 %v1348, %v1340
    %v1517 = vpack.c.b16 %v1349, %v1341
    %v1518 = vpack.c.b16 %v1350, %v1342
    %v1519 = vpack.c.b16 %v1351, %v1343
    %v1520 = vpack.c.b16 %v1352, %v1344
    %v1521 = vpack.c.b16 %v1361, %v1353
    %v1522 = vpack.c.b16 %v1362, %v1354
    %v1523 = vpack.c.b16 %v1363, %v1355
    %v1524 = vpack.c.b16 %v1364, %v1356
    %v1525 = vpack.c.b16 %v1365, %v1357
    %v1526 = vpack.c.b16 %v1366, %v1358
    %v1527 = vpack.c.b16 %v1367, %v1359
    %v1528 = vpack.c.b16 %v1368, %v1360
    %v1529 = vpack.c.b16 %v1377, %v1369
    %v1530 = vpack.c.b16 %v1378, %v1370
    %v1531 = vpack.c.b16 %v1379, %v1371
    %v1532 = vpack.c.b16 %v1380, %v1372
    %v1533 = vpack.c.b16 %v1381, %v1373
    %v1534 = vpack.c.b16 %v1382, %v1374
    %v1535 = vpack.c.b16 %v1383, %v1375
    %v1536 = vpack.c.b16 %v1384, %v1376
    %v1537 = vpack.c.b16 %v1393, %v1385
    %v1538 = vpack.c.b16 %v1394, %v1386
    %v1539 = vpack.c.b16 %v1395, %v1387
    %v1540 = vpack.c.b16 %v1396, %v1388
    %v1541 = vpack.c.b16 %v1397, %v1389
    %v1542 = vpack.c.b16 %v1398, %v1390
    %v1543 = vpack.c.b16 %v1399, %v1391
    %v1544 = vpack.c.b16 %v1400, %v1392
    %v1545 = vpack.c.b16 %v1409, %v1401
    %v1546 = vpack.c.b16 %v1410, %v1402
    %v1547 = vpack.c.b16 %v1411, %v1403
    %v1548 = vpack.c.b16 %v1412, %v1404
    %v1549 = vpack.c.b16 %v1413, %v1405
    %v1550 = vpack.c.b16 %v1414, %v1406
    %v1551 = vpack.c.b16 %v1415, %v1407
    %v1552 = vpack.c.b16 %v1416, %v1408
    %v1553 = vpack.c.b16 %v1425, %v1417
    %v1554 = vpack.c.b16 %v1426, %v1418
    %v1555 = vpack.c.b16 %v1427, %v1419
    %v1556 = vpack.c.b16 %v1428, %v1420
    %v1557 = vpack.c.b16 %v1429, %v1421
    %v1558 = vpack.c.b16 %v1430, %v1422
    %v1559 = vpack.c.b16 %v1431, %v1423
    %v1560 = vpack.c.b16 %v1432, %v1424
    %1689 = vmatprep.subr.bf16.mxu0 %v1490
    %1690 = vmatpush1.bf16.msra.mxu0 %v1489
    %1691 = vmatprep.subr.bf16.mxu0 %v1482
    %1692 = vmatpush1.bf16.msra.mxu0 %v1481
    %1693 = vmatprep.subr.bf16.mxu0 %v1474
    %1694 = vmatpush1.bf16.msra.mxu0 %v1473
    %1695 = vmatprep.subr.bf16.mxu0 %v1466
    %1696 = vmatpush1.bf16.msra.mxu0 %v1465
    %1697 = vmatprep.subr.bf16.mxu0 %v1458
    %1698 = vmatpush1.bf16.msra.mxu0 %v1457
    %1699 = vmatprep.subr.bf16.mxu0 %v1450
    %1700 = vmatpush1.bf16.msra.mxu0 %v1449
    %1701 = vmatprep.subr.bf16.mxu0 %v1442
    %1702 = vmatpush1.bf16.msra.mxu0 %v1441
    %1703 = vmatprep.subr.bf16.mxu0 %v1434
    %1704 = vmatpush1.bf16.msra.mxu0 %v1433
    %1705 = vmatprep.subr.bf16.mxu0 %v1554
    %1706 = vmatpush2.bf16.msra.mxu0 %v1553
    %1707 = vmatprep.subr.bf16.mxu0 %v1546
    %1708 = vmatpush2.bf16.msra.mxu0 %v1545
    %1709 = vmatprep.subr.bf16.mxu0 %v1538
    %1710 = vmatpush2.bf16.msra.mxu0 %v1537
    %1711 = vmatprep.subr.bf16.mxu0 %v1530
    %1712 = vmatpush2.bf16.msra.mxu0 %v1529
    %1713 = vmatprep.subr.bf16.mxu0 %v1522
    %1714 = vmatpush2.bf16.msra.mxu0 %v1521
    %1715 = vmatprep.subr.bf16.mxu0 %v1514
    %1716 = vmatpush2.bf16.msra.mxu0 %v1513
    %1717 = vmatprep.subr.bf16.mxu0 %v1506
    %1718 = vmatpush2.bf16.msra.mxu0 %v1505
    %1719 = vmatprep.subr.bf16.mxu0 %v1498
    %1720 = vmatpush2.bf16.msra.mxu0 %v1497
    %1721 = vmatprep.mubr.bf16.mxu0 %v920
    %1722 = vmatmul.mubr.bf16.gmra.mxu0 %v920
    %v1723 = vpop.f32.mrf.mxu0
    %v1724 = vadd.f32 0.0, %v1723
    %v1725 = vpop.f32.mrf.mxu0
    %v1726 = vadd.f32 0.0, %v1725
    %v1727 = vpop.f32.mrf.mxu0
    %v1728 = vpop.f32.mrf.mxu0
    %1729 = vdwg.mxu0
    %1730 = vmatprep.subr.bf16.mxu0 %v1492
    %1731 = vmatpush1.bf16.msra.mxu0 %v1491
    %1732 = vmatprep.subr.bf16.mxu0 %v1484
    %1733 = vmatpush1.bf16.msra.mxu0 %v1483
    %1734 = vmatprep.subr.bf16.mxu0 %v1476
    %1735 = vmatpush1.bf16.msra.mxu0 %v1475
    %1736 = vmatprep.subr.bf16.mxu0 %v1468
    %1737 = vmatpush1.bf16.msra.mxu0 %v1467
    %1738 = vmatprep.subr.bf16.mxu0 %v1460
    %1739 = vmatpush1.bf16.msra.mxu0 %v1459
    %1740 = vmatprep.subr.bf16.mxu0 %v1452
    %1741 = vmatpush1.bf16.msra.mxu0 %v1451
    %1742 = vmatprep.subr.bf16.mxu0 %v1444
    %1743 = vmatpush1.bf16.msra.mxu0 %v1443
    %1744 = vmatprep.subr.bf16.mxu0 %v1436
    %1745 = vmatpush1.bf16.msra.mxu0 %v1435
    %1746 = vmatprep.subr.bf16.mxu0 %v1556
    %1747 = vmatpush2.bf16.msra.mxu0 %v1555
    %1748 = vmatprep.subr.bf16.mxu0 %v1548
    %1749 = vmatpush2.bf16.msra.mxu0 %v1547
    %1750 = vmatprep.subr.bf16.mxu0 %v1540
    %1751 = vmatpush2.bf16.msra.mxu0 %v1539
    %1752 = vmatprep.subr.bf16.mxu0 %v1532
    %1753 = vmatpush2.bf16.msra.mxu0 %v1531
    %1754 = vmatprep.subr.bf16.mxu0 %v1524
    %1755 = vmatpush2.bf16.msra.mxu0 %v1523
    %1756 = vmatprep.subr.bf16.mxu0 %v1516
    %1757 = vmatpush2.bf16.msra.mxu0 %v1515
    %1758 = vmatprep.subr.bf16.mxu0 %v1508
    %1759 = vmatpush2.bf16.msra.mxu0 %v1507
    %1760 = vmatprep.subr.bf16.mxu0 %v1500
    %1761 = vmatpush2.bf16.msra.mxu0 %v1499
    %1762 = vmatprep.mubr.bf16.mxu0 %v920
    %1763 = vmatmul.mubr.bf16.gmra.mxu0 %v920
    %v1764 = vpop.f32.mrf.mxu0
    %v1765 = vadd.f32 0.0, %v1764
    %v1766 = vpop.f32.mrf.mxu0
    %v1767 = vadd.f32 0.0, %v1766
    %v1768 = vpop.f32.mrf.mxu0
    %v1769 = vpop.f32.mrf.mxu0
    %1770 = vdwg.mxu0
    %1771 = vmatprep.subr.bf16.mxu0 %v1494
    %1772 = vmatpush1.bf16.msra.mxu0 %v1493
    %1773 = vmatprep.subr.bf16.mxu0 %v1486
    %1774 = vmatpush1.bf16.msra.mxu0 %v1485
    %1775 = vmatprep.subr.bf16.mxu0 %v1478
    %1776 = vmatpush1.bf16.msra.mxu0 %v1477
    %1777 = vmatprep.subr.bf16.mxu0 %v1470
    %1778 = vmatpush1.bf16.msra.mxu0 %v1469
    %1779 = vmatprep.subr.bf16.mxu0 %v1462
    %1780 = vmatpush1.bf16.msra.mxu0 %v1461
    %1781 = vmatprep.subr.bf16.mxu0 %v1454
    %1782 = vmatpush1.bf16.msra.mxu0 %v1453
    %1783 = vmatprep.subr.bf16.mxu0 %v1446
    %1784 = vmatpush1.bf16.msra.mxu0 %v1445
    %1785 = vmatprep.subr.bf16.mxu0 %v1438
    %1786 = vmatpush1.bf16.msra.mxu0 %v1437
    %1787 = vmatprep.subr.bf16.mxu0 %v1558
    %1788 = vmatpush2.bf16.msra.mxu0 %v1557
    %1789 = vmatprep.subr.bf16.mxu0 %v1550
    %1790 = vmatpush2.bf16.msra.mxu0 %v1549
    %1791 = vmatprep.subr.bf16.mxu0 %v1542
    %1792 = vmatpush2.bf16.msra.mxu0 %v1541
    %1793 = vmatprep.subr.bf16.mxu0 %v1534
    %1794 = vmatpush2.bf16.msra.mxu0 %v1533
    %1795 = vmatprep.subr.bf16.mxu0 %v1526
    %1796 = vmatpush2.bf16.msra.mxu0 %v1525
    %1797 = vmatprep.subr.bf16.mxu0 %v1518
    %1798 = vmatpush2.bf16.msra.mxu0 %v1517
    %1799 = vmatprep.subr.bf16.mxu0 %v1510
    %1800 = vmatpush2.bf16.msra.mxu0 %v1509
    %1801 = vmatprep.subr.bf16.mxu0 %v1502
    %1802 = vmatpush2.bf16.msra.mxu0 %v1501
    %1803 = vmatprep.mubr.bf16.mxu0 %v920
    %1804 = vmatmul.mubr.bf16.gmra.mxu0 %v920
    %v1805 = vpop.f32.mrf.mxu0
    %v1806 = vadd.f32 0.0, %v1805
    %v1807 = vpop.f32.mrf.mxu0
    %v1808 = vadd.f32 0.0, %v1807
    %v1809 = vpop.f32.mrf.mxu0
    %v1810 = vpop.f32.mrf.mxu0
    %1811 = vdwg.mxu0
    %1812 = vmatprep.subr.bf16.mxu0 %v1496
    %1813 = vmatpush1.bf16.msra.mxu0 %v1495
    %1814 = vmatprep.subr.bf16.mxu0 %v1488
    %1815 = vmatpush1.bf16.msra.mxu0 %v1487
    %1816 = vmatprep.subr.bf16.mxu0 %v1480
    %1817 = vmatpush1.bf16.msra.mxu0 %v1479
    %1818 = vmatprep.subr.bf16.mxu0 %v1472
    %1819 = vmatpush1.bf16.msra.mxu0 %v1471
    %1820 = vmatprep.subr.bf16.mxu0 %v1464
    %1821 = vmatpush1.bf16.msra.mxu0 %v1463
    %1822 = vmatprep.subr.bf16.mxu0 %v1456
    %1823 = vmatpush1.bf16.msra.mxu0 %v1455
    %1824 = vmatprep.subr.bf16.mxu0 %v1448
    %1825 = vmatpush1.bf16.msra.mxu0 %v1447
    %1826 = vmatprep.subr.bf16.mxu0 %v1440
    %1827 = vmatpush1.bf16.msra.mxu0 %v1439
    %1828 = vmatprep.subr.bf16.mxu0 %v1560
    %1829 = vmatpush2.bf16.msra.mxu0 %v1559
    %1830 = vmatprep.subr.bf16.mxu0 %v1552
    %1831 = vmatpush2.bf16.msra.mxu0 %v1551
    %1832 = vmatprep.subr.bf16.mxu0 %v1544
    %1833 = vmatpush2.bf16.msra.mxu0 %v1543
    %1834 = vmatprep.subr.bf16.mxu0 %v1536
    %1835 = vmatpush2.bf16.msra.mxu0 %v1535
    %1836 = vmatprep.subr.bf16.mxu0 %v1528
    %1837 = vmatpush2.bf16.msra.mxu0 %v1527
    %1838 = vmatprep.subr.bf16.mxu0 %v1520
    %1839 = vmatpush2.bf16.msra.mxu0 %v1519
    %1840 = vmatprep.subr.bf16.mxu0 %v1512
    %1841 = vmatpush2.bf16.msra.mxu0 %v1511
    %1842 = vmatprep.subr.bf16.mxu0 %v1504
    %1843 = vmatpush2.bf16.msra.mxu0 %v1503
    %1844 = vmatprep.mubr.bf16.mxu0 %v920
    %1845 = vmatmul.mubr.bf16.gmra.mxu0 %v920
    %v1846 = vpop.f32.mrf.mxu0
    %v1847 = vadd.f32 0.0, %v1846
    %v1848 = vpop.f32.mrf.mxu0
    %v1849 = vadd.f32 0.0, %v1848
    %v1850 = vpop.f32.mrf.mxu0
    %v1851 = vpop.f32.mrf.mxu0
    %1852 = vdwg.mxu0
    %s1853 = smul.u32 0, 4
    %s1854 = smul.addr %s1853, 8
    %s1855 = scalar_lea.vmem [#allocation2], %s1854
    %v1856 = vld [vmem:[%s1855] sm:$0xff]
    %v1857 = vld [vmem:[%s1855 + $0x8] sm:$0xff]
    %v1858 = vld [vmem:[%s1855 + $0x10] sm:$0xff]
    %v1859 = vld [vmem:[%s1855 + $0x18] sm:$0xff]
    %v1860 = vadd.f32 %v1856, %v1724
    %v1861 = vadd.f32 %v1857, %v1726
    %v1862 = vadd.f32 %v1858, %v1765
    %v1863 = vadd.f32 %v1859, %v1767
    %s1864 = smul.u32 7, 4
    %s1865 = smul.addr %s1864, 8
    %s1866 = scalar_lea.vmem [#allocation3], %s1865
    %v1867 = vld [vmem:[%s1866] sm:$0xff]
    %v1868 = vld [vmem:[%s1866 + $0x8] sm:$0xff]
    %v1869 = vld [vmem:[%s1866 + $0x10] sm:$0xff]
    %v1870 = vld [vmem:[%s1866 + $0x18] sm:$0xff]
    %v1871 = vadd.f32 %v1867, %v1806
    %v1872 = vadd.f32 %v1868, %v1808
    %v1873 = vadd.f32 %v1869, %v1847
    %v1874 = vadd.f32 %v1870, %v1849
    %v1875 = vxor.u32 %v1860, 2147483648
    %v1876 = vmul.f32 %v1875, 1.442695
    %v1877 = vpow.pop %v1876
    %v1878 = vadd.f32 %v1877, 1.0
    %v1879 = vrcp.pop %v1878
    %v1880 = vmul.f32 1.0, %v1879
    %v1881 = vxor.u32 %v1861, 2147483648
    %v1882 = vmul.f32 %v1881, 1.442695
    %v1883 = vpow.pop %v1882
    %v1884 = vadd.f32 %v1883, 1.0
    %v1885 = vrcp.pop %v1884
    %v1886 = vmul.f32 1.0, %v1885
    %v1887 = vtanh.pop %v1862
    %v1888 = vxor.u32 %v1863, 2147483648
    %v1889 = vmul.f32 %v1888, 1.442695
    %v1890 = vpow.pop %v1889
    %v1891 = vadd.f32 %v1890, 1.0
    %v1892 = vrcp.pop %v1891
    %v1893 = vmul.f32 1.0, %v1892
    %v1894 = vmul.f32 %v1886, 0.0
    %v1895 = vmul.f32 %v1880, %v1887
    %v1896 = vadd.f32 %v1894, %v1895
    %v1897 = vtanh.pop %v1896
    %v1898 = vmul.f32 %v1893, %v1897
    %v1899 = vxor.u32 %v1871, 2147483648
    %v1900 = vmul.f32 %v1899, 1.442695
    %v1901 = vpow.pop %v1900
    %v1902 = vadd.f32 %v1901, 1.0
    %v1903 = vrcp.pop %v1902
    %v1904 = vmul.f32 1.0, %v1903
    %v1905 = vxor.u32 %v1872, 2147483648
    %v1906 = vmul.f32 %v1905, 1.442695
    %v1907 = vpow.pop %v1906
    %v1908 = vadd.f32 %v1907, 1.0
    %v1909 = vrcp.pop %v1908
    %v1910 = vmul.f32 1.0, %v1909
    %v1911 = vtanh.pop %v1873
    %v1912 = vxor.u32 %v1874, 2147483648
    %v1913 = vmul.f32 %v1912, 1.442695
    %v1914 = vpow.pop %v1913
    %v1915 = vadd.f32 %v1914, 1.0
    %v1916 = vrcp.pop %v1915
    %v1917 = vmul.f32 1.0, %v1916
    %v1918 = vmul.f32 %v1910, 0.0
    %v1919 = vmul.f32 %v1904, %v1911
    %v1920 = vadd.f32 %v1918, %v1919
    %v1921 = vtanh.pop %v1920
    %v1922 = vmul.f32 %v1917, %v1921
    %vm1923 = vcmp.eq.s32.totalorder %v919, 0
    %v1924 = vsel %vm1923, 1, 0
    %1925 = vset.pattern.permute.xlu0 0
    %1926 = vperm.xlu0 %1925, %v1924
    %v1927 = vpop.permute.xlu0 %1926
    %vm1928 = vcmp.eq.s32.totalorder %v1927, 1
    %v1929 = vsel %vm1928, %v1898, 0.0
    %v1930 = vpack.c.bf16 %v1898, %v1898
    %v1931 = vpack.c.bf16 %v1922, %v1922
    %1932 = vmatprep.subr.bf16.mxu0 %v1490
    %1933 = vmatpush1.bf16.msra.mxu0 %v1489
    %1934 = vmatprep.subr.bf16.mxu0 %v1482
    %1935 = vmatpush1.bf16.msra.mxu0 %v1481
    %1936 = vmatprep.subr.bf16.mxu0 %v1474
    %1937 = vmatpush1.bf16.msra.mxu0 %v1473
    %1938 = vmatprep.subr.bf16.mxu0 %v1466
    %1939 = vmatpush1.bf16.msra.mxu0 %v1465
    %1940 = vmatprep.subr.bf16.mxu0 %v1458
    %1941 = vmatpush1.bf16.msra.mxu0 %v1457
    %1942 = vmatprep.subr.bf16.mxu0 %v1450
    %1943 = vmatpush1.bf16.msra.mxu0 %v1449
    %1944 = vmatprep.subr.bf16.mxu0 %v1442
    %1945 = vmatpush1.bf16.msra.mxu0 %v1441
    %1946 = vmatprep.subr.bf16.mxu0 %v1434
    %1947 = vmatpush1.bf16.msra.mxu0 %v1433
    %1948 = vmatprep.subr.bf16.mxu0 %v1554
    %1949 = vmatpush2.bf16.msra.mxu0 %v1553
    %1950 = vmatprep.subr.bf16.mxu0 %v1546
    %1951 = vmatpush2.bf16.msra.mxu0 %v1545
    %1952 = vmatprep.subr.bf16.mxu0 %v1538
    %1953 = vmatpush2.bf16.msra.mxu0 %v1537
    %1954 = vmatprep.subr.bf16.mxu0 %v1530
    %1955 = vmatpush2.bf16.msra.mxu0 %v1529
    %1956 = vmatprep.subr.bf16.mxu0 %v1522
    %1957 = vmatpush2.bf16.msra.mxu0 %v1521
    %1958 = vmatprep.subr.bf16.mxu0 %v1514
    %1959 = vmatpush2.bf16.msra.mxu0 %v1513
    %1960 = vmatprep.subr.bf16.mxu0 %v1506
    %1961 = vmatpush2.bf16.msra.mxu0 %v1505
    %1962 = vmatprep.subr.bf16.mxu0 %v1498
    %1963 = vmatpush2.bf16.msra.mxu0 %v1497
    %1964 = vmatprep.mubr.bf16.mxu0 %v1931
    %1965 = vmatmul.mubr.bf16.gmra.mxu0 %v1930
    %v1966 = vpop.f32.mrf.mxu0
    %v1967 = vadd.f32 0.0, %v1966
    %v1968 = vpop.f32.mrf.mxu0
    %v1969 = vadd.f32 0.0, %v1968
    %v1970 = vpop.f32.mrf.mxu0
    %v1971 = vpop.f32.mrf.mxu0
    %1972 = vdwg.mxu0
    %1973 = vmatprep.subr.bf16.mxu0 %v1492
    %1974 = vmatpush1.bf16.msra.mxu0 %v1491
    %1975 = vmatprep.subr.bf16.mxu0 %v1484
    %1976 = vmatpush1.bf16.msra.mxu0 %v1483
    %1977 = vmatprep.subr.bf16.mxu0 %v1476
    %1978 = vmatpush1.bf16.msra.mxu0 %v1475
    %1979 = vmatprep.subr.bf16.mxu0 %v1468
    %1980 = vmatpush1.bf16.msra.mxu0 %v1467
    %1981 = vmatprep.subr.bf16.mxu0 %v1460
    %1982 = vmatpush1.bf16.msra.mxu0 %v1459
    %1983 = vmatprep.subr.bf16.mxu0 %v1452
    %1984 = vmatpush1.bf16.msra.mxu0 %v1451
    %1985 = vmatprep.subr.bf16.mxu0 %v1444
    %1986 = vmatpush1.bf16.msra.mxu0 %v1443
    %1987 = vmatprep.subr.bf16.mxu0 %v1436
    %1988 = vmatpush1.bf16.msra.mxu0 %v1435
    %1989 = vmatprep.subr.bf16.mxu0 %v1556
    %1990 = vmatpush2.bf16.msra.mxu0 %v1555
    %1991 = vmatprep.subr.bf16.mxu0 %v1548
    %1992 = vmatpush2.bf16.msra.mxu0 %v1547
    %1993 = vmatprep.subr.bf16.mxu0 %v1540
    %1994 = vmatpush2.bf16.msra.mxu0 %v1539
    %1995 = vmatprep.subr.bf16.mxu0 %v1532
    %1996 = vmatpush2.bf16.msra.mxu0 %v1531
    %1997 = vmatprep.subr.bf16.mxu0 %v1524
    %1998 = vmatpush2.bf16.msra.mxu0 %v1523
    %1999 = vmatprep.subr.bf16.mxu0 %v1516
    %2000 = vmatpush2.bf16.msra.mxu0 %v1515
    %2001 = vmatprep.subr.bf16.mxu0 %v1508
    %2002 = vmatpush2.bf16.msra.mxu0 %v1507
    %2003 = vmatprep.subr.bf16.mxu0 %v1500
    %2004 = vmatpush2.bf16.msra.mxu0 %v1499
    %2005 = vmatprep.mubr.bf16.mxu0 %v1931
    %2006 = vmatmul.mubr.bf16.gmra.mxu0 %v1930
    %v2007 = vpop.f32.mrf.mxu0
    %v2008 = vadd.f32 0.0, %v2007
    %v2009 = vpop.f32.mrf.mxu0
    %v2010 = vadd.f32 0.0, %v2009
    %v2011 = vpop.f32.mrf.mxu0
    %v2012 = vpop.f32.mrf.mxu0
    %2013 = vdwg.mxu0
    %2014 = vmatprep.subr.bf16.mxu0 %v1494
    %2015 = vmatpush1.bf16.msra.mxu0 %v1493
    %2016 = vmatprep.subr.bf16.mxu0 %v1486
    %2017 = vmatpush1.bf16.msra.mxu0 %v1485
    %2018 = vmatprep.subr.bf16.mxu0 %v1478
    %2019 = vmatpush1.bf16.msra.mxu0 %v1477
    %2020 = vmatprep.subr.bf16.mxu0 %v1470
    %2021 = vmatpush1.bf16.msra.mxu0 %v1469
    %2022 = vmatprep.subr.bf16.mxu0 %v1462
    %2023 = vmatpush1.bf16.msra.mxu0 %v1461
    %2024 = vmatprep.subr.bf16.mxu0 %v1454
    %2025 = vmatpush1.bf16.msra.mxu0 %v1453
    %2026 = vmatprep.subr.bf16.mxu0 %v1446
    %2027 = vmatpush1.bf16.msra.mxu0 %v1445
    %2028 = vmatprep.subr.bf16.mxu0 %v1438
    %2029 = vmatpush1.bf16.msra.mxu0 %v1437
    %2030 = vmatprep.subr.bf16.mxu0 %v1558
    %2031 = vmatpush2.bf16.msra.mxu0 %v1557
    %2032 = vmatprep.subr.bf16.mxu0 %v1550
    %2033 = vmatpush2.bf16.msra.mxu0 %v1549
    %2034 = vmatprep.subr.bf16.mxu0 %v1542
    %2035 = vmatpush2.bf16.msra.mxu0 %v1541
    %2036 = vmatprep.subr.bf16.mxu0 %v1534
    %2037 = vmatpush2.bf16.msra.mxu0 %v1533
    %2038 = vmatprep.subr.bf16.mxu0 %v1526
    %2039 = vmatpush2.bf16.msra.mxu0 %v1525
    %2040 = vmatprep.subr.bf16.mxu0 %v1518
    %2041 = vmatpush2.bf16.msra.mxu0 %v1517
    %2042 = vmatprep.subr.bf16.mxu0 %v1510
    %2043 = vmatpush2.bf16.msra.mxu0 %v1509
    %2044 = vmatprep.subr.bf16.mxu0 %v1502
    %2045 = vmatpush2.bf16.msra.mxu0 %v1501
    %2046 = vmatprep.mubr.bf16.mxu0 %v1931
    %2047 = vmatmul.mubr.bf16.gmra.mxu0 %v1930
    %v2048 = vpop.f32.mrf.mxu0
    %v2049 = vadd.f32 0.0, %v2048
    %v2050 = vpop.f32.mrf.mxu0
    %v2051 = vadd.f32 0.0, %v2050
    %v2052 = vpop.f32.mrf.mxu0
    %v2053 = vpop.f32.mrf.mxu0
    %2054 = vdwg.mxu0
    %2055 = vmatprep.subr.bf16.mxu0 %v1496
    %2056 = vmatpush1.bf16.msra.mxu0 %v1495
    %2057 = vmatprep.subr.bf16.mxu0 %v1488
    %2058 = vmatpush1.bf16.msra.mxu0 %v1487
    %2059 = vmatprep.subr.bf16.mxu0 %v1480
    %2060 = vmatpush1.bf16.msra.mxu0 %v1479
    %2061 = vmatprep.subr.bf16.mxu0 %v1472
    %2062 = vmatpush1.bf16.msra.mxu0 %v1471
    %2063 = vmatprep.subr.bf16.mxu0 %v1464
    %2064 = vmatpush1.bf16.msra.mxu0 %v1463
    %2065 = vmatprep.subr.bf16.mxu0 %v1456
    %2066 = vmatpush1.bf16.msra.mxu0 %v1455
    %2067 = vmatprep.subr.bf16.mxu0 %v1448
    %2068 = vmatpush1.bf16.msra.mxu0 %v1447
    %2069 = vmatprep.subr.bf16.mxu0 %v1440
    %2070 = vmatpush1.bf16.msra.mxu0 %v1439
    %2071 = vmatprep.subr.bf16.mxu0 %v1560
    %2072 = vmatpush2.bf16.msra.mxu0 %v1559
    %2073 = vmatprep.subr.bf16.mxu0 %v1552
    %2074 = vmatpush2.bf16.msra.mxu0 %v1551
    %2075 = vmatprep.subr.bf16.mxu0 %v1544
    %2076 = vmatpush2.bf16.msra.mxu0 %v1543
    %2077 = vmatprep.subr.bf16.mxu0 %v1536
    %2078 = vmatpush2.bf16.msra.mxu0 %v1535
    %2079 = vmatprep.subr.bf16.mxu0 %v1528
    %2080 = vmatpush2.bf16.msra.mxu0 %v1527
    %2081 = vmatprep.subr.bf16.mxu0 %v1520
    %2082 = vmatpush2.bf16.msra.mxu0 %v1519
    %2083 = vmatprep.subr.bf16.mxu0 %v1512
    %2084 = vmatpush2.bf16.msra.mxu0 %v1511
    %2085 = vmatprep.subr.bf16.mxu0 %v1504
    %2086 = vmatpush2.bf16.msra.mxu0 %v1503
    %2087 = vmatprep.mubr.bf16.mxu0 %v1931
    %2088 = vmatmul.mubr.bf16.gmra.mxu0 %v1930
    %v2089 = vpop.f32.mrf.mxu0
    %v2090 = vadd.f32 0.0, %v2089
    %v2091 = vpop.f32.mrf.mxu0
    %v2092 = vadd.f32 0.0, %v2091
    %v2093 = vpop.f32.mrf.mxu0
    %v2094 = vpop.f32.mrf.mxu0
    %2095 = vdwg.mxu0
    %s2096 = smul.u32 1, 4
    %s2097 = smul.addr %s2096, 8
    %s2098 = scalar_lea.vmem [#allocation2], %s2097
    %v2099 = vld [vmem:[%s2098] sm:$0xff]
    %v2100 = vld [vmem:[%s2098 + $0x8] sm:$0xff]
    %v2101 = vld [vmem:[%s2098 + $0x10] sm:$0xff]
    %v2102 = vld [vmem:[%s2098 + $0x18] sm:$0xff]
    %v2103 = vadd.f32 %v2099, %v1967
    %v2104 = vadd.f32 %v2100, %v1969
    %v2105 = vadd.f32 %v2101, %v2008
    %v2106 = vadd.f32 %v2102, %v2010
    %s2107 = smul.u32 6, 4
    %s2108 = smul.addr %s2107, 8
    %s2109 = scalar_lea.vmem [#allocation3], %s2108
    %v2110 = vld [vmem:[%s2109] sm:$0xff]
    %v2111 = vld [vmem:[%s2109 + $0x8] sm:$0xff]
    %v2112 = vld [vmem:[%s2109 + $0x10] sm:$0xff]
    %v2113 = vld [vmem:[%s2109 + $0x18] sm:$0xff]
    %v2114 = vadd.f32 %v2110, %v2049
    %v2115 = vadd.f32 %v2111, %v2051
    %v2116 = vadd.f32 %v2112, %v2090
    %v2117 = vadd.f32 %v2113, %v2092
    %v2118 = vxor.u32 %v2103, 2147483648
    %v2119 = vmul.f32 %v2118, 1.442695
    %v2120 = vpow.pop %v2119
    %v2121 = vadd.f32 %v2120, 1.0
    %v2122 = vrcp.pop %v2121
    %v2123 = vmul.f32 1.0, %v2122
    %v2124 = vxor.u32 %v2104, 2147483648
    %v2125 = vmul.f32 %v2124, 1.442695
    %v2126 = vpow.pop %v2125
    %v2127 = vadd.f32 %v2126, 1.0
    %v2128 = vrcp.pop %v2127
    %v2129 = vmul.f32 1.0, %v2128
    %v2130 = vtanh.pop %v2105
    %v2131 = vxor.u32 %v2106, 2147483648
    %v2132 = vmul.f32 %v2131, 1.442695
    %v2133 = vpow.pop %v2132
    %v2134 = vadd.f32 %v2133, 1.0
    %v2135 = vrcp.pop %v2134
    %v2136 = vmul.f32 1.0, %v2135
    %v2137 = vmul.f32 %v2129, %v1896
    %v2138 = vmul.f32 %v2123, %v2130
    %v2139 = vadd.f32 %v2137, %v2138
    %v2140 = vtanh.pop %v2139
    %v2141 = vmul.f32 %v2136, %v2140
    %v2142 = vxor.u32 %v2114, 2147483648
    %v2143 = vmul.f32 %v2142, 1.442695
    %v2144 = vpow.pop %v2143
    %v2145 = vadd.f32 %v2144, 1.0
    %v2146 = vrcp.pop %v2145
    %v2147 = vmul.f32 1.0, %v2146
    %v2148 = vxor.u32 %v2115, 2147483648
    %v2149 = vmul.f32 %v2148, 1.442695
    %v2150 = vpow.pop %v2149
    %v2151 = vadd.f32 %v2150, 1.0
    %v2152 = vrcp.pop %v2151
    %v2153 = vmul.f32 1.0, %v2152
    %v2154 = vtanh.pop %v2116
    %v2155 = vxor.u32 %v2117, 2147483648
    %v2156 = vmul.f32 %v2155, 1.442695
    %v2157 = vpow.pop %v2156
    %v2158 = vadd.f32 %v2157, 1.0
    %v2159 = vrcp.pop %v2158
    %v2160 = vmul.f32 1.0, %v2159
    %v2161 = vmul.f32 %v2153, %v1920
    %v2162 = vmul.f32 %v2147, %v2154
    %v2163 = vadd.f32 %v2161, %v2162
    %v2164 = vtanh.pop %v2163
    %v2165 = vmul.f32 %v2160, %v2164
    %vm2166 = vcmp.eq.s32.totalorder %v919, 1
    %v2167 = vsel %vm2166, 1, 0
    %2168 = vset.pattern.permute.xlu0 0
    %2169 = vperm.xlu0 %2168, %v2167
    %v2170 = vpop.permute.xlu0 %2169
    %vm2171 = vcmp.eq.s32.totalorder %v2170, 1
    %v2172 = vsel %vm2171, %v2141, %v1929
    %v2173 = vpack.c.bf16 %v2141, %v2141
    %v2174 = vpack.c.bf16 %v2165, %v2165
    %2175 = vmatprep.subr.bf16.mxu0 %v1490
    %2176 = vmatpush1.bf16.msra.mxu0 %v1489
    %2177 = vmatprep.subr.bf16.mxu0 %v1482
    %2178 = vmatpush1.bf16.msra.mxu0 %v1481
    %2179 = vmatprep.subr.bf16.mxu0 %v1474
    %2180 = vmatpush1.bf16.msra.mxu0 %v1473
    %2181 = vmatprep.subr.bf16.mxu0 %v1466
    %2182 = vmatpush1.bf16.msra.mxu0 %v1465
    %2183 = vmatprep.subr.bf16.mxu0 %v1458
    %2184 = vmatpush1.bf16.msra.mxu0 %v1457
    %2185 = vmatprep.subr.bf16.mxu0 %v1450
    %2186 = vmatpush1.bf16.msra.mxu0 %v1449
    %2187 = vmatprep.subr.bf16.mxu0 %v1442
    %2188 = vmatpush1.bf16.msra.mxu0 %v1441
    %2189 = vmatprep.subr.bf16.mxu0 %v1434
    %2190 = vmatpush1.bf16.msra.mxu0 %v1433
    %2191 = vmatprep.subr.bf16.mxu0 %v1554
    %2192 = vmatpush2.bf16.msra.mxu0 %v1553
    %2193 = vmatprep.subr.bf16.mxu0 %v1546
    %2194 = vmatpush2.bf16.msra.mxu0 %v1545
    %2195 = vmatprep.subr.bf16.mxu0 %v1538
    %2196 = vmatpush2.bf16.msra.mxu0 %v1537
    %2197 = vmatprep.subr.bf16.mxu0 %v1530
    %2198 = vmatpush2.bf16.msra.mxu0 %v1529
    %2199 = vmatprep.subr.bf16.mxu0 %v1522
    %2200 = vmatpush2.bf16.msra.mxu0 %v1521
    %2201 = vmatprep.subr.bf16.mxu0 %v1514
    %2202 = vmatpush2.bf16.msra.mxu0 %v1513
    %2203 = vmatprep.subr.bf16.mxu0 %v1506
    %2204 = vmatpush2.bf16.msra.mxu0 %v1505
    %2205 = vmatprep.subr.bf16.mxu0 %v1498
    %2206 = vmatpush2.bf16.msra.mxu0 %v1497
    %2207 = vmatprep.mubr.bf16.mxu0 %v2174
    %2208 = vmatmul.mubr.bf16.gmra.mxu0 %v2173
    %v2209 = vpop.f32.mrf.mxu0
    %v2210 = vadd.f32 0.0, %v2209
    %v2211 = vpop.f32.mrf.mxu0
    %v2212 = vadd.f32 0.0, %v2211
    %v2213 = vpop.f32.mrf.mxu0
    %v2214 = vpop.f32.mrf.mxu0
    %2215 = vdwg.mxu0
    %2216 = vmatprep.subr.bf16.mxu0 %v1492
    %2217 = vmatpush1.bf16.msra.mxu0 %v1491
    %2218 = vmatprep.subr.bf16.mxu0 %v1484
    %2219 = vmatpush1.bf16.msra.mxu0 %v1483
    %2220 = vmatprep.subr.bf16.mxu0 %v1476
    %2221 = vmatpush1.bf16.msra.mxu0 %v1475
    %2222 = vmatprep.subr.bf16.mxu0 %v1468
    %2223 = vmatpush1.bf16.msra.mxu0 %v1467
    %2224 = vmatprep.subr.bf16.mxu0 %v1460
    %2225 = vmatpush1.bf16.msra.mxu0 %v1459
    %2226 = vmatprep.subr.bf16.mxu0 %v1452
    %2227 = vmatpush1.bf16.msra.mxu0 %v1451
    %2228 = vmatprep.subr.bf16.mxu0 %v1444
    %2229 = vmatpush1.bf16.msra.mxu0 %v1443
    %2230 = vmatprep.subr.bf16.mxu0 %v1436
    %2231 = vmatpush1.bf16.msra.mxu0 %v1435
    %2232 = vmatprep.subr.bf16.mxu0 %v1556
    %2233 = vmatpush2.bf16.msra.mxu0 %v1555
    %2234 = vmatprep.subr.bf16.mxu0 %v1548
    %2235 = vmatpush2.bf16.msra.mxu0 %v1547
    %2236 = vmatprep.subr.bf16.mxu0 %v1540
    %2237 = vmatpush2.bf16.msra.mxu0 %v1539
    %2238 = vmatprep.subr.bf16.mxu0 %v1532
    %2239 = vmatpush2.bf16.msra.mxu0 %v1531
    %2240 = vmatprep.subr.bf16.mxu0 %v1524
    %2241 = vmatpush2.bf16.msra.mxu0 %v1523
    %2242 = vmatprep.subr.bf16.mxu0 %v1516
    %2243 = vmatpush2.bf16.msra.mxu0 %v1515
    %2244 = vmatprep.subr.bf16.mxu0 %v1508
    %2245 = vmatpush2.bf16.msra.mxu0 %v1507
    %2246 = vmatprep.subr.bf16.mxu0 %v1500
    %2247 = vmatpush2.bf16.msra.mxu0 %v1499
    %2248 = vmatprep.mubr.bf16.mxu0 %v2174
    %2249 = vmatmul.mubr.bf16.gmra.mxu0 %v2173
    %v2250 = vpop.f32.mrf.mxu0
    %v2251 = vadd.f32 0.0, %v2250
    %v2252 = vpop.f32.mrf.mxu0
    %v2253 = vadd.f32 0.0, %v2252
    %v2254 = vpop.f32.mrf.mxu0
    %v2255 = vpop.f32.mrf.mxu0
    %2256 = vdwg.mxu0
    %2257 = vmatprep.subr.bf16.mxu0 %v1494
    %2258 = vmatpush1.bf16.msra.mxu0 %v1493
    %2259 = vmatprep.subr.bf16.mxu0 %v1486
    %2260 = vmatpush1.bf16.msra.mxu0 %v1485
    %2261 = vmatprep.subr.bf16.mxu0 %v1478
    %2262 = vmatpush1.bf16.msra.mxu0 %v1477
    %2263 = vmatprep.subr.bf16.mxu0 %v1470
    %2264 = vmatpush1.bf16.msra.mxu0 %v1469
    %2265 = vmatprep.subr.bf16.mxu0 %v1462
    %2266 = vmatpush1.bf16.msra.mxu0 %v1461
    %2267 = vmatprep.subr.bf16.mxu0 %v1454
    %2268 = vmatpush1.bf16.msra.mxu0 %v1453
    %2269 = vmatprep.subr.bf16.mxu0 %v1446
    %2270 = vmatpush1.bf16.msra.mxu0 %v1445
    %2271 = vmatprep.subr.bf16.mxu0 %v1438
    %2272 = vmatpush1.bf16.msra.mxu0 %v1437
    %2273 = vmatprep.subr.bf16.mxu0 %v1558
    %2274 = vmatpush2.bf16.msra.mxu0 %v1557
    %2275 = vmatprep.subr.bf16.mxu0 %v1550
    %2276 = vmatpush2.bf16.msra.mxu0 %v1549
    %2277 = vmatprep.subr.bf16.mxu0 %v1542
    %2278 = vmatpush2.bf16.msra.mxu0 %v1541
    %2279 = vmatprep.subr.bf16.mxu0 %v1534
    %2280 = vmatpush2.bf16.msra.mxu0 %v1533
    %2281 = vmatprep.subr.bf16.mxu0 %v1526
    %2282 = vmatpush2.bf16.msra.mxu0 %v1525
    %2283 = vmatprep.subr.bf16.mxu0 %v1518
    %2284 = vmatpush2.bf16.msra.mxu0 %v1517
    %2285 = vmatprep.subr.bf16.mxu0 %v1510
    %2286 = vmatpush2.bf16.msra.mxu0 %v1509
    %2287 = vmatprep.subr.bf16.mxu0 %v1502
    %2288 = vmatpush2.bf16.msra.mxu0 %v1501
    %2289 = vmatprep.mubr.bf16.mxu0 %v2174
    %2290 = vmatmul.mubr.bf16.gmra.mxu0 %v2173
    %v2291 = vpop.f32.mrf.mxu0
    %v2292 = vadd.f32 0.0, %v2291
    %v2293 = vpop.f32.mrf.mxu0
    %v2294 = vadd.f32 0.0, %v2293
    %v2295 = vpop.f32.mrf.mxu0
    %v2296 = vpop.f32.mrf.mxu0
    %2297 = vdwg.mxu0
    %2298 = vmatprep.subr.bf16.mxu0 %v1496
    %2299 = vmatpush1.bf16.msra.mxu0 %v1495
    %2300 = vmatprep.subr.bf16.mxu0 %v1488
    %2301 = vmatpush1.bf16.msra.mxu0 %v1487
    %2302 = vmatprep.subr.bf16.mxu0 %v1480
    %2303 = vmatpush1.bf16.msra.mxu0 %v1479
    %2304 = vmatprep.subr.bf16.mxu0 %v1472
    %2305 = vmatpush1.bf16.msra.mxu0 %v1471
    %2306 = vmatprep.subr.bf16.mxu0 %v1464
    %2307 = vmatpush1.bf16.msra.mxu0 %v1463
    %2308 = vmatprep.subr.bf16.mxu0 %v1456
    %2309 = vmatpush1.bf16.msra.mxu0 %v1455
    %2310 = vmatprep.subr.bf16.mxu0 %v1448
    %2311 = vmatpush1.bf16.msra.mxu0 %v1447
    %2312 = vmatprep.subr.bf16.mxu0 %v1440
    %2313 = vmatpush1.bf16.msra.mxu0 %v1439
    %2314 = vmatprep.subr.bf16.mxu0 %v1560
    %2315 = vmatpush2.bf16.msra.mxu0 %v1559
    %2316 = vmatprep.subr.bf16.mxu0 %v1552
    %2317 = vmatpush2.bf16.msra.mxu0 %v1551
    %2318 = vmatprep.subr.bf16.mxu0 %v1544
    %2319 = vmatpush2.bf16.msra.mxu0 %v1543
    %2320 = vmatprep.subr.bf16.mxu0 %v1536
    %2321 = vmatpush2.bf16.msra.mxu0 %v1535
    %2322 = vmatprep.subr.bf16.mxu0 %v1528
    %2323 = vmatpush2.bf16.msra.mxu0 %v1527
    %2324 = vmatprep.subr.bf16.mxu0 %v1520
    %2325 = vmatpush2.bf16.msra.mxu0 %v1519
    %2326 = vmatprep.subr.bf16.mxu0 %v1512
    %2327 = vmatpush2.bf16.msra.mxu0 %v1511
    %2328 = vmatprep.subr.bf16.mxu0 %v1504
    %2329 = vmatpush2.bf16.msra.mxu0 %v1503
    %2330 = vmatprep.mubr.bf16.mxu0 %v2174
    %2331 = vmatmul.mubr.bf16.gmra.mxu0 %v2173
    %v2332 = vpop.f32.mrf.mxu0
    %v2333 = vadd.f32 0.0, %v2332
    %v2334 = vpop.f32.mrf.mxu0
    %v2335 = vadd.f32 0.0, %v2334
    %v2336 = vpop.f32.mrf.mxu0
    %v2337 = vpop.f32.mrf.mxu0
    %2338 = vdwg.mxu0
    %s2339 = smul.u32 2, 4
    %s2340 = smul.addr %s2339, 8
    %s2341 = scalar_lea.vmem [#allocation2], %s2340
    %v2342 = vld [vmem:[%s2341] sm:$0xff]
    %v2343 = vld [vmem:[%s2341 + $0x8] sm:$0xff]
    %v2344 = vld [vmem:[%s2341 + $0x10] sm:$0xff]
    %v2345 = vld [vmem:[%s2341 + $0x18] sm:$0xff]
    %v2346 = vadd.f32 %v2342, %v2210
    %v2347 = vadd.f32 %v2343, %v2212
    %v2348 = vadd.f32 %v2344, %v2251
    %v2349 = vadd.f32 %v2345, %v2253
    %s2350 = smul.u32 5, 4
    %s2351 = smul.addr %s2350, 8
    %s2352 = scalar_lea.vmem [#allocation3], %s2351
    %v2353 = vld [vmem:[%s2352] sm:$0xff]
    %v2354 = vld [vmem:[%s2352 + $0x8] sm:$0xff]
    %v2355 = vld [vmem:[%s2352 + $0x10] sm:$0xff]
    %v2356 = vld [vmem:[%s2352 + $0x18] sm:$0xff]
    %v2357 = vadd.f32 %v2353, %v2292
    %v2358 = vadd.f32 %v2354, %v2294
    %v2359 = vadd.f32 %v2355, %v2333
    %v2360 = vadd.f32 %v2356, %v2335
    %v2361 = vxor.u32 %v2346, 2147483648
    %v2362 = vmul.f32 %v2361, 1.442695
    %v2363 = vpow.pop %v2362
    %v2364 = vadd.f32 %v2363, 1.0
    %v2365 = vrcp.pop %v2364
    %v2366 = vmul.f32 1.0, %v2365
    %v2367 = vxor.u32 %v2347, 2147483648
    %v2368 = vmul.f32 %v2367, 1.442695
    %v2369 = vpow.pop %v2368
    %v2370 = vadd.f32 %v2369, 1.0
    %v2371 = vrcp.pop %v2370
    %v2372 = vmul.f32 1.0, %v2371
    %v2373 = vtanh.pop %v2348
    %v2374 = vxor.u32 %v2349, 2147483648
    %v2375 = vmul.f32 %v2374, 1.442695
    %v2376 = vpow.pop %v2375
    %v2377 = vadd.f32 %v2376, 1.0
    %v2378 = vrcp.pop %v2377
    %v2379 = vmul.f32 1.0, %v2378
    %v2380 = vmul.f32 %v2372, %v2139
    %v2381 = vmul.f32 %v2366, %v2373
    %v2382 = vadd.f32 %v2380, %v2381
    %v2383 = vtanh.pop %v2382
    %v2384 = vmul.f32 %v2379, %v2383
    %v2385 = vxor.u32 %v2357, 2147483648
    %v2386 = vmul.f32 %v2385, 1.442695
    %v2387 = vpow.pop %v2386
    %v2388 = vadd.f32 %v2387, 1.0
    %v2389 = vrcp.pop %v2388
    %v2390 = vmul.f32 1.0, %v2389
    %v2391 = vxor.u32 %v2358, 2147483648
    %v2392 = vmul.f32 %v2391, 1.442695
    %v2393 = vpow.pop %v2392
    %v2394 = vadd.f32 %v2393, 1.0
    %v2395 = vrcp.pop %v2394
    %v2396 = vmul.f32 1.0, %v2395
    %v2397 = vtanh.pop %v2359
    %v2398 = vxor.u32 %v2360, 2147483648
    %v2399 = vmul.f32 %v2398, 1.442695
    %v2400 = vpow.pop %v2399
    %v2401 = vadd.f32 %v2400, 1.0
    %v2402 = vrcp.pop %v2401
    %v2403 = vmul.f32 1.0, %v2402
    %v2404 = vmul.f32 %v2396, %v2163
    %v2405 = vmul.f32 %v2390, %v2397
    %v2406 = vadd.f32 %v2404, %v2405
    %v2407 = vtanh.pop %v2406
    %v2408 = vmul.f32 %v2403, %v2407
    %vm2409 = vcmp.eq.s32.totalorder %v919, 2
    %v2410 = vsel %vm2409, 1, 0
    %2411 = vset.pattern.permute.xlu0 0
    %2412 = vperm.xlu0 %2411, %v2410
    %v2413 = vpop.permute.xlu0 %2412
    %vm2414 = vcmp.eq.s32.totalorder %v2413, 1
    %v2415 = vsel %vm2414, %v2384, %v2172
    %v2416 = vpack.c.bf16 %v2384, %v2384
    %v2417 = vpack.c.bf16 %v2408, %v2408
    %2418 = vmatprep.subr.bf16.mxu0 %v1490
    %2419 = vmatpush1.bf16.msra.mxu0 %v1489
    %2420 = vmatprep.subr.bf16.mxu0 %v1482
    %2421 = vmatpush1.bf16.msra.mxu0 %v1481
    %2422 = vmatprep.subr.bf16.mxu0 %v1474
    %2423 = vmatpush1.bf16.msra.mxu0 %v1473
    %2424 = vmatprep.subr.bf16.mxu0 %v1466
    %2425 = vmatpush1.bf16.msra.mxu0 %v1465
    %2426 = vmatprep.subr.bf16.mxu0 %v1458
    %2427 = vmatpush1.bf16.msra.mxu0 %v1457
    %2428 = vmatprep.subr.bf16.mxu0 %v1450
    %2429 = vmatpush1.bf16.msra.mxu0 %v1449
    %2430 = vmatprep.subr.bf16.mxu0 %v1442
    %2431 = vmatpush1.bf16.msra.mxu0 %v1441
    %2432 = vmatprep.subr.bf16.mxu0 %v1434
    %2433 = vmatpush1.bf16.msra.mxu0 %v1433
    %2434 = vmatprep.subr.bf16.mxu0 %v1554
    %2435 = vmatpush2.bf16.msra.mxu0 %v1553
    %2436 = vmatprep.subr.bf16.mxu0 %v1546
    %2437 = vmatpush2.bf16.msra.mxu0 %v1545
    %2438 = vmatprep.subr.bf16.mxu0 %v1538
    %2439 = vmatpush2.bf16.msra.mxu0 %v1537
    %2440 = vmatprep.subr.bf16.mxu0 %v1530
    %2441 = vmatpush2.bf16.msra.mxu0 %v1529
    %2442 = vmatprep.subr.bf16.mxu0 %v1522
    %2443 = vmatpush2.bf16.msra.mxu0 %v1521
    %2444 = vmatprep.subr.bf16.mxu0 %v1514
    %2445 = vmatpush2.bf16.msra.mxu0 %v1513
    %2446 = vmatprep.subr.bf16.mxu0 %v1506
    %2447 = vmatpush2.bf16.msra.mxu0 %v1505
    %2448 = vmatprep.subr.bf16.mxu0 %v1498
    %2449 = vmatpush2.bf16.msra.mxu0 %v1497
    %2450 = vmatprep.mubr.bf16.mxu0 %v2417
    %2451 = vmatmul.mubr.bf16.gmra.mxu0 %v2416
    %v2452 = vpop.f32.mrf.mxu0
    %v2453 = vadd.f32 0.0, %v2452
    %v2454 = vpop.f32.mrf.mxu0
    %v2455 = vadd.f32 0.0, %v2454
    %v2456 = vpop.f32.mrf.mxu0
    %v2457 = vpop.f32.mrf.mxu0
    %2458 = vdwg.mxu0
    %2459 = vmatprep.subr.bf16.mxu0 %v1492
    %2460 = vmatpush1.bf16.msra.mxu0 %v1491
    %2461 = vmatprep.subr.bf16.mxu0 %v1484
    %2462 = vmatpush1.bf16.msra.mxu0 %v1483
    %2463 = vmatprep.subr.bf16.mxu0 %v1476
    %2464 = vmatpush1.bf16.msra.mxu0 %v1475
    %2465 = vmatprep.subr.bf16.mxu0 %v1468
    %2466 = vmatpush1.bf16.msra.mxu0 %v1467
    %2467 = vmatprep.subr.bf16.mxu0 %v1460
    %2468 = vmatpush1.bf16.msra.mxu0 %v1459
    %2469 = vmatprep.subr.bf16.mxu0 %v1452
    %2470 = vmatpush1.bf16.msra.mxu0 %v1451
    %2471 = vmatprep.subr.bf16.mxu0 %v1444
    %2472 = vmatpush1.bf16.msra.mxu0 %v1443
    %2473 = vmatprep.subr.bf16.mxu0 %v1436
    %2474 = vmatpush1.bf16.msra.mxu0 %v1435
    %2475 = vmatprep.subr.bf16.mxu0 %v1556
    %2476 = vmatpush2.bf16.msra.mxu0 %v1555
    %2477 = vmatprep.subr.bf16.mxu0 %v1548
    %2478 = vmatpush2.bf16.msra.mxu0 %v1547
    %2479 = vmatprep.subr.bf16.mxu0 %v1540
    %2480 = vmatpush2.bf16.msra.mxu0 %v1539
    %2481 = vmatprep.subr.bf16.mxu0 %v1532
    %2482 = vmatpush2.bf16.msra.mxu0 %v1531
    %2483 = vmatprep.subr.bf16.mxu0 %v1524
    %2484 = vmatpush2.bf16.msra.mxu0 %v1523
    %2485 = vmatprep.subr.bf16.mxu0 %v1516
    %2486 = vmatpush2.bf16.msra.mxu0 %v1515
    %2487 = vmatprep.subr.bf16.mxu0 %v1508
    %2488 = vmatpush2.bf16.msra.mxu0 %v1507
    %2489 = vmatprep.subr.bf16.mxu0 %v1500
    %2490 = vmatpush2.bf16.msra.mxu0 %v1499
    %2491 = vmatprep.mubr.bf16.mxu0 %v2417
    %2492 = vmatmul.mubr.bf16.gmra.mxu0 %v2416
    %v2493 = vpop.f32.mrf.mxu0
    %v2494 = vadd.f32 0.0, %v2493
    %v2495 = vpop.f32.mrf.mxu0
    %v2496 = vadd.f32 0.0, %v2495
    %v2497 = vpop.f32.mrf.mxu0
    %v2498 = vpop.f32.mrf.mxu0
    %2499 = vdwg.mxu0
    %2500 = vmatprep.subr.bf16.mxu0 %v1494
    %2501 = vmatpush1.bf16.msra.mxu0 %v1493
    %2502 = vmatprep.subr.bf16.mxu0 %v1486
    %2503 = vmatpush1.bf16.msra.mxu0 %v1485
    %2504 = vmatprep.subr.bf16.mxu0 %v1478
    %2505 = vmatpush1.bf16.msra.mxu0 %v1477
    %2506 = vmatprep.subr.bf16.mxu0 %v1470
    %2507 = vmatpush1.bf16.msra.mxu0 %v1469
    %2508 = vmatprep.subr.bf16.mxu0 %v1462
    %2509 = vmatpush1.bf16.msra.mxu0 %v1461
    %2510 = vmatprep.subr.bf16.mxu0 %v1454
    %2511 = vmatpush1.bf16.msra.mxu0 %v1453
    %2512 = vmatprep.subr.bf16.mxu0 %v1446
    %2513 = vmatpush1.bf16.msra.mxu0 %v1445
    %2514 = vmatprep.subr.bf16.mxu0 %v1438
    %2515 = vmatpush1.bf16.msra.mxu0 %v1437
    %2516 = vmatprep.subr.bf16.mxu0 %v1558
    %2517 = vmatpush2.bf16.msra.mxu0 %v1557
    %2518 = vmatprep.subr.bf16.mxu0 %v1550
    %2519 = vmatpush2.bf16.msra.mxu0 %v1549
    %2520 = vmatprep.subr.bf16.mxu0 %v1542
    %2521 = vmatpush2.bf16.msra.mxu0 %v1541
    %2522 = vmatprep.subr.bf16.mxu0 %v1534
    %2523 = vmatpush2.bf16.msra.mxu0 %v1533
    %2524 = vmatprep.subr.bf16.mxu0 %v1526
    %2525 = vmatpush2.bf16.msra.mxu0 %v1525
    %2526 = vmatprep.subr.bf16.mxu0 %v1518
    %2527 = vmatpush2.bf16.msra.mxu0 %v1517
    %2528 = vmatprep.subr.bf16.mxu0 %v1510
    %2529 = vmatpush2.bf16.msra.mxu0 %v1509
    %2530 = vmatprep.subr.bf16.mxu0 %v1502
    %2531 = vmatpush2.bf16.msra.mxu0 %v1501
    %2532 = vmatprep.mubr.bf16.mxu0 %v2417
    %2533 = vmatmul.mubr.bf16.gmra.mxu0 %v2416
    %v2534 = vpop.f32.mrf.mxu0
    %v2535 = vadd.f32 0.0, %v2534
    %v2536 = vpop.f32.mrf.mxu0
    %v2537 = vadd.f32 0.0, %v2536
    %v2538 = vpop.f32.mrf.mxu0
    %v2539 = vpop.f32.mrf.mxu0
    %2540 = vdwg.mxu0
    %2541 = vmatprep.subr.bf16.mxu0 %v1496
    %2542 = vmatpush1.bf16.msra.mxu0 %v1495
    %2543 = vmatprep.subr.bf16.mxu0 %v1488
    %2544 = vmatpush1.bf16.msra.mxu0 %v1487
    %2545 = vmatprep.subr.bf16.mxu0 %v1480
    %2546 = vmatpush1.bf16.msra.mxu0 %v1479
    %2547 = vmatprep.subr.bf16.mxu0 %v1472
    %2548 = vmatpush1.bf16.msra.mxu0 %v1471
    %2549 = vmatprep.subr.bf16.mxu0 %v1464
    %2550 = vmatpush1.bf16.msra.mxu0 %v1463
    %2551 = vmatprep.subr.bf16.mxu0 %v1456
    %2552 = vmatpush1.bf16.msra.mxu0 %v1455
    %2553 = vmatprep.subr.bf16.mxu0 %v1448
    %2554 = vmatpush1.bf16.msra.mxu0 %v1447
    %2555 = vmatprep.subr.bf16.mxu0 %v1440
    %2556 = vmatpush1.bf16.msra.mxu0 %v1439
    %2557 = vmatprep.subr.bf16.mxu0 %v1560
    %2558 = vmatpush2.bf16.msra.mxu0 %v1559
    %2559 = vmatprep.subr.bf16.mxu0 %v1552
    %2560 = vmatpush2.bf16.msra.mxu0 %v1551
    %2561 = vmatprep.subr.bf16.mxu0 %v1544
    %2562 = vmatpush2.bf16.msra.mxu0 %v1543
    %2563 = vmatprep.subr.bf16.mxu0 %v1536
    %2564 = vmatpush2.bf16.msra.mxu0 %v1535
    %2565 = vmatprep.subr.bf16.mxu0 %v1528
    %2566 = vmatpush2.bf16.msra.mxu0 %v1527
    %2567 = vmatprep.subr.bf16.mxu0 %v1520
    %2568 = vmatpush2.bf16.msra.mxu0 %v1519
    %2569 = vmatprep.subr.bf16.mxu0 %v1512
    %2570 = vmatpush2.bf16.msra.mxu0 %v1511
    %2571 = vmatprep.subr.bf16.mxu0 %v1504
    %2572 = vmatpush2.bf16.msra.mxu0 %v1503
    %2573 = vmatprep.mubr.bf16.mxu0 %v2417
    %2574 = vmatmul.mubr.bf16.gmra.mxu0 %v2416
    %v2575 = vpop.f32.mrf.mxu0
    %v2576 = vadd.f32 0.0, %v2575
    %v2577 = vpop.f32.mrf.mxu0
    %v2578 = vadd.f32 0.0, %v2577
    %v2579 = vpop.f32.mrf.mxu0
    %v2580 = vpop.f32.mrf.mxu0
    %2581 = vdwg.mxu0
    %s2582 = smul.u32 3, 4
    %s2583 = smul.addr %s2582, 8
    %s2584 = scalar_lea.vmem [#allocation2], %s2583
    %v2585 = vld [vmem:[%s2584] sm:$0xff]
    %v2586 = vld [vmem:[%s2584 + $0x8] sm:$0xff]
    %v2587 = vld [vmem:[%s2584 + $0x10] sm:$0xff]
    %v2588 = vld [vmem:[%s2584 + $0x18] sm:$0xff]
    %v2589 = vadd.f32 %v2585, %v2453
    %v2590 = vadd.f32 %v2586, %v2455
    %v2591 = vadd.f32 %v2587, %v2494
    %v2592 = vadd.f32 %v2588, %v2496
    %s2593 = smul.u32 4, 4
    %s2594 = smul.addr %s2593, 8
    %s2595 = scalar_lea.vmem [#allocation3], %s2594
    %v2596 = vld [vmem:[%s2595] sm:$0xff]
    %v2597 = vld [vmem:[%s2595 + $0x8] sm:$0xff]
    %v2598 = vld [vmem:[%s2595 + $0x10] sm:$0xff]
    %v2599 = vld [vmem:[%s2595 + $0x18] sm:$0xff]
    %v2600 = vadd.f32 %v2596, %v2535
    %v2601 = vadd.f32 %v2597, %v2537
    %v2602 = vadd.f32 %v2598, %v2576
    %v2603 = vadd.f32 %v2599, %v2578
    %v2604 = vxor.u32 %v2589, 2147483648
    %v2605 = vmul.f32 %v2604, 1.442695
    %v2606 = vpow.pop %v2605
    %v2607 = vadd.f32 %v2606, 1.0
    %v2608 = vrcp.pop %v2607
    %v2609 = vmul.f32 1.0, %v2608
    %v2610 = vxor.u32 %v2590, 2147483648
    %v2611 = vmul.f32 %v2610, 1.442695
    %v2612 = vpow.pop %v2611
    %v2613 = vadd.f32 %v2612, 1.0
    %v2614 = vrcp.pop %v2613
    %v2615 = vmul.f32 1.0, %v2614
    %v2616 = vtanh.pop %v2591
    %v2617 = vxor.u32 %v2592, 2147483648
    %v2618 = vmul.f32 %v2617, 1.442695
    %v2619 = vpow.pop %v2618
    %v2620 = vadd.f32 %v2619, 1.0
    %v2621 = vrcp.pop %v2620
    %v2622 = vmul.f32 1.0, %v2621
    %v2623 = vmul.f32 %v2615, %v2382
    %v2624 = vmul.f32 %v2609, %v2616
    %v2625 = vadd.f32 %v2623, %v2624
    %v2626 = vtanh.pop %v2625
    %v2627 = vmul.f32 %v2622, %v2626
    %v2628 = vxor.u32 %v2600, 2147483648
    %v2629 = vmul.f32 %v2628, 1.442695
    %v2630 = vpow.pop %v2629
    %v2631 = vadd.f32 %v2630, 1.0
    %v2632 = vrcp.pop %v2631
    %v2633 = vmul.f32 1.0, %v2632
    %v2634 = vxor.u32 %v2601, 2147483648
    %v2635 = vmul.f32 %v2634, 1.442695
    %v2636 = vpow.pop %v2635
    %v2637 = vadd.f32 %v2636, 1.0
    %v2638 = vrcp.pop %v2637
    %v2639 = vmul.f32 1.0, %v2638
    %v2640 = vtanh.pop %v2602
    %v2641 = vxor.u32 %v2603, 2147483648
    %v2642 = vmul.f32 %v2641, 1.442695
    %v2643 = vpow.pop %v2642
    %v2644 = vadd.f32 %v2643, 1.0
    %v2645 = vrcp.pop %v2644
    %v2646 = vmul.f32 1.0, %v2645
    %v2647 = vmul.f32 %v2639, %v2406
    %v2648 = vmul.f32 %v2633, %v2640
    %v2649 = vadd.f32 %v2647, %v2648
    %v2650 = vtanh.pop %v2649
    %v2651 = vmul.f32 %v2646, %v2650
    %vm2652 = vcmp.eq.s32.totalorder %v919, 3
    %v2653 = vsel %vm2652, 1, 0
    %2654 = vset.pattern.permute.xlu0 0
    %2655 = vperm.xlu0 %2654, %v2653
    %v2656 = vpop.permute.xlu0 %2655
    %vm2657 = vcmp.eq.s32.totalorder %v2656, 1
    %v2658 = vsel %vm2657, %v2627, %v2415
    %v2659 = vpack.c.bf16 %v2627, %v2627
    %v2660 = vpack.c.bf16 %v2651, %v2651
    %2661 = vmatprep.subr.bf16.mxu0 %v1490
    %2662 = vmatpush1.bf16.msra.mxu0 %v1489
    %2663 = vmatprep.subr.bf16.mxu0 %v1482
    %2664 = vmatpush1.bf16.msra.mxu0 %v1481
    %2665 = vmatprep.subr.bf16.mxu0 %v1474
    %2666 = vmatpush1.bf16.msra.mxu0 %v1473
    %2667 = vmatprep.subr.bf16.mxu0 %v1466
    %2668 = vmatpush1.bf16.msra.mxu0 %v1465
    %2669 = vmatprep.subr.bf16.mxu0 %v1458
    %2670 = vmatpush1.bf16.msra.mxu0 %v1457
    %2671 = vmatprep.subr.bf16.mxu0 %v1450
    %2672 = vmatpush1.bf16.msra.mxu0 %v1449
    %2673 = vmatprep.subr.bf16.mxu0 %v1442
    %2674 = vmatpush1.bf16.msra.mxu0 %v1441
    %2675 = vmatprep.subr.bf16.mxu0 %v1434
    %2676 = vmatpush1.bf16.msra.mxu0 %v1433
    %2677 = vmatprep.subr.bf16.mxu0 %v1554
    %2678 = vmatpush2.bf16.msra.mxu0 %v1553
    %2679 = vmatprep.subr.bf16.mxu0 %v1546
    %2680 = vmatpush2.bf16.msra.mxu0 %v1545
    %2681 = vmatprep.subr.bf16.mxu0 %v1538
    %2682 = vmatpush2.bf16.msra.mxu0 %v1537
    %2683 = vmatprep.subr.bf16.mxu0 %v1530
    %2684 = vmatpush2.bf16.msra.mxu0 %v1529
    %2685 = vmatprep.subr.bf16.mxu0 %v1522
    %2686 = vmatpush2.bf16.msra.mxu0 %v1521
    %2687 = vmatprep.subr.bf16.mxu0 %v1514
    %2688 = vmatpush2.bf16.msra.mxu0 %v1513
    %2689 = vmatprep.subr.bf16.mxu0 %v1506
    %2690 = vmatpush2.bf16.msra.mxu0 %v1505
    %2691 = vmatprep.subr.bf16.mxu0 %v1498
    %2692 = vmatpush2.bf16.msra.mxu0 %v1497
    %2693 = vmatprep.mubr.bf16.mxu0 %v2660
    %2694 = vmatmul.mubr.bf16.gmra.mxu0 %v2659
    %v2695 = vpop.f32.mrf.mxu0
    %v2696 = vadd.f32 0.0, %v2695
    %v2697 = vpop.f32.mrf.mxu0
    %v2698 = vadd.f32 0.0, %v2697
    %v2699 = vpop.f32.mrf.mxu0
    %v2700 = vpop.f32.mrf.mxu0
    %2701 = vdwg.mxu0
    %2702 = vmatprep.subr.bf16.mxu0 %v1492
    %2703 = vmatpush1.bf16.msra.mxu0 %v1491
    %2704 = vmatprep.subr.bf16.mxu0 %v1484
    %2705 = vmatpush1.bf16.msra.mxu0 %v1483
    %2706 = vmatprep.subr.bf16.mxu0 %v1476
    %2707 = vmatpush1.bf16.msra.mxu0 %v1475
    %2708 = vmatprep.subr.bf16.mxu0 %v1468
    %2709 = vmatpush1.bf16.msra.mxu0 %v1467
    %2710 = vmatprep.subr.bf16.mxu0 %v1460
    %2711 = vmatpush1.bf16.msra.mxu0 %v1459
    %2712 = vmatprep.subr.bf16.mxu0 %v1452
    %2713 = vmatpush1.bf16.msra.mxu0 %v1451
    %2714 = vmatprep.subr.bf16.mxu0 %v1444
    %2715 = vmatpush1.bf16.msra.mxu0 %v1443
    %2716 = vmatprep.subr.bf16.mxu0 %v1436
    %2717 = vmatpush1.bf16.msra.mxu0 %v1435
    %2718 = vmatprep.subr.bf16.mxu0 %v1556
    %2719 = vmatpush2.bf16.msra.mxu0 %v1555
    %2720 = vmatprep.subr.bf16.mxu0 %v1548
    %2721 = vmatpush2.bf16.msra.mxu0 %v1547
    %2722 = vmatprep.subr.bf16.mxu0 %v1540
    %2723 = vmatpush2.bf16.msra.mxu0 %v1539
    %2724 = vmatprep.subr.bf16.mxu0 %v1532
    %2725 = vmatpush2.bf16.msra.mxu0 %v1531
    %2726 = vmatprep.subr.bf16.mxu0 %v1524
    %2727 = vmatpush2.bf16.msra.mxu0 %v1523
    %2728 = vmatprep.subr.bf16.mxu0 %v1516
    %2729 = vmatpush2.bf16.msra.mxu0 %v1515
    %2730 = vmatprep.subr.bf16.mxu0 %v1508
    %2731 = vmatpush2.bf16.msra.mxu0 %v1507
    %2732 = vmatprep.subr.bf16.mxu0 %v1500
    %2733 = vmatpush2.bf16.msra.mxu0 %v1499
    %2734 = vmatprep.mubr.bf16.mxu0 %v2660
    %2735 = vmatmul.mubr.bf16.gmra.mxu0 %v2659
    %v2736 = vpop.f32.mrf.mxu0
    %v2737 = vadd.f32 0.0, %v2736
    %v2738 = vpop.f32.mrf.mxu0
    %v2739 = vadd.f32 0.0, %v2738
    %v2740 = vpop.f32.mrf.mxu0
    %v2741 = vpop.f32.mrf.mxu0
    %2742 = vdwg.mxu0
    %2743 = vmatprep.subr.bf16.mxu0 %v1494
    %2744 = vmatpush1.bf16.msra.mxu0 %v1493
    %2745 = vmatprep.subr.bf16.mxu0 %v1486
    %2746 = vmatpush1.bf16.msra.mxu0 %v1485
    %2747 = vmatprep.subr.bf16.mxu0 %v1478
    %2748 = vmatpush1.bf16.msra.mxu0 %v1477
    %2749 = vmatprep.subr.bf16.mxu0 %v1470
    %2750 = vmatpush1.bf16.msra.mxu0 %v1469
    %2751 = vmatprep.subr.bf16.mxu0 %v1462
    %2752 = vmatpush1.bf16.msra.mxu0 %v1461
    %2753 = vmatprep.subr.bf16.mxu0 %v1454
    %2754 = vmatpush1.bf16.msra.mxu0 %v1453
    %2755 = vmatprep.subr.bf16.mxu0 %v1446
    %2756 = vmatpush1.bf16.msra.mxu0 %v1445
    %2757 = vmatprep.subr.bf16.mxu0 %v1438
    %2758 = vmatpush1.bf16.msra.mxu0 %v1437
    %2759 = vmatprep.subr.bf16.mxu0 %v1558
    %2760 = vmatpush2.bf16.msra.mxu0 %v1557
    %2761 = vmatprep.subr.bf16.mxu0 %v1550
    %2762 = vmatpush2.bf16.msra.mxu0 %v1549
    %2763 = vmatprep.subr.bf16.mxu0 %v1542
    %2764 = vmatpush2.bf16.msra.mxu0 %v1541
    %2765 = vmatprep.subr.bf16.mxu0 %v1534
    %2766 = vmatpush2.bf16.msra.mxu0 %v1533
    %2767 = vmatprep.subr.bf16.mxu0 %v1526
    %2768 = vmatpush2.bf16.msra.mxu0 %v1525
    %2769 = vmatprep.subr.bf16.mxu0 %v1518
    %2770 = vmatpush2.bf16.msra.mxu0 %v1517
    %2771 = vmatprep.subr.bf16.mxu0 %v1510
    %2772 = vmatpush2.bf16.msra.mxu0 %v1509
    %2773 = vmatprep.subr.bf16.mxu0 %v1502
    %2774 = vmatpush2.bf16.msra.mxu0 %v1501
    %2775 = vmatprep.mubr.bf16.mxu0 %v2660
    %2776 = vmatmul.mubr.bf16.gmra.mxu0 %v2659
    %v2777 = vpop.f32.mrf.mxu0
    %v2778 = vadd.f32 0.0, %v2777
    %v2779 = vpop.f32.mrf.mxu0
    %v2780 = vadd.f32 0.0, %v2779
    %v2781 = vpop.f32.mrf.mxu0
    %v2782 = vpop.f32.mrf.mxu0
    %2783 = vdwg.mxu0
    %2784 = vmatprep.subr.bf16.mxu0 %v1496
    %2785 = vmatpush1.bf16.msra.mxu0 %v1495
    %2786 = vmatprep.subr.bf16.mxu0 %v1488
    %2787 = vmatpush1.bf16.msra.mxu0 %v1487
    %2788 = vmatprep.subr.bf16.mxu0 %v1480
    %2789 = vmatpush1.bf16.msra.mxu0 %v1479
    %2790 = vmatprep.subr.bf16.mxu0 %v1472
    %2791 = vmatpush1.bf16.msra.mxu0 %v1471
    %2792 = vmatprep.subr.bf16.mxu0 %v1464
    %2793 = vmatpush1.bf16.msra.mxu0 %v1463
    %2794 = vmatprep.subr.bf16.mxu0 %v1456
    %2795 = vmatpush1.bf16.msra.mxu0 %v1455
    %2796 = vmatprep.subr.bf16.mxu0 %v1448
    %2797 = vmatpush1.bf16.msra.mxu0 %v1447
    %2798 = vmatprep.subr.bf16.mxu0 %v1440
    %2799 = vmatpush1.bf16.msra.mxu0 %v1439
    %2800 = vmatprep.subr.bf16.mxu0 %v1560
    %2801 = vmatpush2.bf16.msra.mxu0 %v1559
    %2802 = vmatprep.subr.bf16.mxu0 %v1552
    %2803 = vmatpush2.bf16.msra.mxu0 %v1551
    %2804 = vmatprep.subr.bf16.mxu0 %v1544
    %2805 = vmatpush2.bf16.msra.mxu0 %v1543
    %2806 = vmatprep.subr.bf16.mxu0 %v1536
    %2807 = vmatpush2.bf16.msra.mxu0 %v1535
    %2808 = vmatprep.subr.bf16.mxu0 %v1528
    %2809 = vmatpush2.bf16.msra.mxu0 %v1527
    %2810 = vmatprep.subr.bf16.mxu0 %v1520
    %2811 = vmatpush2.bf16.msra.mxu0 %v1519
    %2812 = vmatprep.subr.bf16.mxu0 %v1512
    %2813 = vmatpush2.bf16.msra.mxu0 %v1511
    %2814 = vmatprep.subr.bf16.mxu0 %v1504
    %2815 = vmatpush2.bf16.msra.mxu0 %v1503
    %2816 = vmatprep.mubr.bf16.mxu0 %v2660
    %2817 = vmatmul.mubr.bf16.gmra.mxu0 %v2659
    %v2818 = vpop.f32.mrf.mxu0
    %v2819 = vadd.f32 0.0, %v2818
    %v2820 = vpop.f32.mrf.mxu0
    %v2821 = vadd.f32 0.0, %v2820
    %v2822 = vpop.f32.mrf.mxu0
    %v2823 = vpop.f32.mrf.mxu0
    %2824 = vdwg.mxu0
    %s2825 = smul.addr %s2593, 8
    %s2826 = scalar_lea.vmem [#allocation2], %s2825
    %v2827 = vld [vmem:[%s2826] sm:$0xff]
    %v2828 = vld [vmem:[%s2826 + $0x8] sm:$0xff]
    %v2829 = vld [vmem:[%s2826 + $0x10] sm:$0xff]
    %v2830 = vld [vmem:[%s2826 + $0x18] sm:$0xff]
    %v2831 = vadd.f32 %v2827, %v2696
    %v2832 = vadd.f32 %v2828, %v2698
    %v2833 = vadd.f32 %v2829, %v2737
    %v2834 = vadd.f32 %v2830, %v2739
    %s2835 = smul.addr %s2582, 8
    %s2836 = scalar_lea.vmem [#allocation3], %s2835
    %v2837 = vld [vmem:[%s2836] sm:$0xff]
    %v2838 = vld [vmem:[%s2836 + $0x8] sm:$0xff]
    %v2839 = vld [vmem:[%s2836 + $0x10] sm:$0xff]
    %v2840 = vld [vmem:[%s2836 + $0x18] sm:$0xff]
    %v2841 = vadd.f32 %v2837, %v2778
    %v2842 = vadd.f32 %v2838, %v2780
    %v2843 = vadd.f32 %v2839, %v2819
    %v2844 = vadd.f32 %v2840, %v2821
    %v2845 = vxor.u32 %v2831, 2147483648
    %v2846 = vmul.f32 %v2845, 1.442695
    %v2847 = vpow.pop %v2846
    %v2848 = vadd.f32 %v2847, 1.0
    %v2849 = vrcp.pop %v2848
    %v2850 = vmul.f32 1.0, %v2849
    %v2851 = vxor.u32 %v2832, 2147483648
    %v2852 = vmul.f32 %v2851, 1.442695
    %v2853 = vpow.pop %v2852
    %v2854 = vadd.f32 %v2853, 1.0
    %v2855 = vrcp.pop %v2854
    %v2856 = vmul.f32 1.0, %v2855
    %v2857 = vtanh.pop %v2833
    %v2858 = vxor.u32 %v2834, 2147483648
    %v2859 = vmul.f32 %v2858, 1.442695
    %v2860 = vpow.pop %v2859
    %v2861 = vadd.f32 %v2860, 1.0
    %v2862 = vrcp.pop %v2861
    %v2863 = vmul.f32 1.0, %v2862
    %v2864 = vmul.f32 %v2856, %v2625
    %v2865 = vmul.f32 %v2850, %v2857
    %v2866 = vadd.f32 %v2864, %v2865
    %v2867 = vtanh.pop %v2866
    %v2868 = vmul.f32 %v2863, %v2867
    %v2869 = vxor.u32 %v2841, 2147483648
    %v2870 = vmul.f32 %v2869, 1.442695
    %v2871 = vpow.pop %v2870
    %v2872 = vadd.f32 %v2871, 1.0
    %v2873 = vrcp.pop %v2872
    %v2874 = vmul.f32 1.0, %v2873
    %v2875 = vxor.u32 %v2842, 2147483648
    %v2876 = vmul.f32 %v2875, 1.442695
    %v2877 = vpow.pop %v2876
    %v2878 = vadd.f32 %v2877, 1.0
    %v2879 = vrcp.pop %v2878
    %v2880 = vmul.f32 1.0, %v2879
    %v2881 = vtanh.pop %v2843
    %v2882 = vxor.u32 %v2844, 2147483648
    %v2883 = vmul.f32 %v2882, 1.442695
    %v2884 = vpow.pop %v2883
    %v2885 = vadd.f32 %v2884, 1.0
    %v2886 = vrcp.pop %v2885
    %v2887 = vmul.f32 1.0, %v2886
    %v2888 = vmul.f32 %v2880, %v2649
    %v2889 = vmul.f32 %v2874, %v2881
    %v2890 = vadd.f32 %v2888, %v2889
    %v2891 = vtanh.pop %v2890
    %v2892 = vmul.f32 %v2887, %v2891
    %vm2893 = vcmp.eq.s32.totalorder %v919, 4
    %v2894 = vsel %vm2893, 1, 0
    %2895 = vset.pattern.permute.xlu0 0
    %2896 = vperm.xlu0 %2895, %v2894
    %v2897 = vpop.permute.xlu0 %2896
    %vm2898 = vcmp.eq.s32.totalorder %v2897, 1
    %v2899 = vsel %vm2898, %v2868, %v2658
    %v2900 = vpack.c.bf16 %v2868, %v2868
    %v2901 = vpack.c.bf16 %v2892, %v2892
    %2902 = vmatprep.subr.bf16.mxu0 %v1490
    %2903 = vmatpush1.bf16.msra.mxu0 %v1489
    %2904 = vmatprep.subr.bf16.mxu0 %v1482
    %2905 = vmatpush1.bf16.msra.mxu0 %v1481
    %2906 = vmatprep.subr.bf16.mxu0 %v1474
    %2907 = vmatpush1.bf16.msra.mxu0 %v1473
    %2908 = vmatprep.subr.bf16.mxu0 %v1466
    %2909 = vmatpush1.bf16.msra.mxu0 %v1465
    %2910 = vmatprep.subr.bf16.mxu0 %v1458
    %2911 = vmatpush1.bf16.msra.mxu0 %v1457
    %2912 = vmatprep.subr.bf16.mxu0 %v1450
    %2913 = vmatpush1.bf16.msra.mxu0 %v1449
    %2914 = vmatprep.subr.bf16.mxu0 %v1442
    %2915 = vmatpush1.bf16.msra.mxu0 %v1441
    %2916 = vmatprep.subr.bf16.mxu0 %v1434
    %2917 = vmatpush1.bf16.msra.mxu0 %v1433
    %2918 = vmatprep.subr.bf16.mxu0 %v1554
    %2919 = vmatpush2.bf16.msra.mxu0 %v1553
    %2920 = vmatprep.subr.bf16.mxu0 %v1546
    %2921 = vmatpush2.bf16.msra.mxu0 %v1545
    %2922 = vmatprep.subr.bf16.mxu0 %v1538
    %2923 = vmatpush2.bf16.msra.mxu0 %v1537
    %2924 = vmatprep.subr.bf16.mxu0 %v1530
    %2925 = vmatpush2.bf16.msra.mxu0 %v1529
    %2926 = vmatprep.subr.bf16.mxu0 %v1522
    %2927 = vmatpush2.bf16.msra.mxu0 %v1521
    %2928 = vmatprep.subr.bf16.mxu0 %v1514
    %2929 = vmatpush2.bf16.msra.mxu0 %v1513
    %2930 = vmatprep.subr.bf16.mxu0 %v1506
    %2931 = vmatpush2.bf16.msra.mxu0 %v1505
    %2932 = vmatprep.subr.bf16.mxu0 %v1498
    %2933 = vmatpush2.bf16.msra.mxu0 %v1497
    %2934 = vmatprep.mubr.bf16.mxu0 %v2901
    %2935 = vmatmul.mubr.bf16.gmra.mxu0 %v2900
    %v2936 = vpop.f32.mrf.mxu0
    %v2937 = vadd.f32 0.0, %v2936
    %v2938 = vpop.f32.mrf.mxu0
    %v2939 = vadd.f32 0.0, %v2938
    %v2940 = vpop.f32.mrf.mxu0
    %v2941 = vpop.f32.mrf.mxu0
    %2942 = vdwg.mxu0
    %2943 = vmatprep.subr.bf16.mxu0 %v1492
    %2944 = vmatpush1.bf16.msra.mxu0 %v1491
    %2945 = vmatprep.subr.bf16.mxu0 %v1484
    %2946 = vmatpush1.bf16.msra.mxu0 %v1483
    %2947 = vmatprep.subr.bf16.mxu0 %v1476
    %2948 = vmatpush1.bf16.msra.mxu0 %v1475
    %2949 = vmatprep.subr.bf16.mxu0 %v1468
    %2950 = vmatpush1.bf16.msra.mxu0 %v1467
    %2951 = vmatprep.subr.bf16.mxu0 %v1460
    %2952 = vmatpush1.bf16.msra.mxu0 %v1459
    %2953 = vmatprep.subr.bf16.mxu0 %v1452
    %2954 = vmatpush1.bf16.msra.mxu0 %v1451
    %2955 = vmatprep.subr.bf16.mxu0 %v1444
    %2956 = vmatpush1.bf16.msra.mxu0 %v1443
    %2957 = vmatprep.subr.bf16.mxu0 %v1436
    %2958 = vmatpush1.bf16.msra.mxu0 %v1435
    %2959 = vmatprep.subr.bf16.mxu0 %v1556
    %2960 = vmatpush2.bf16.msra.mxu0 %v1555
    %2961 = vmatprep.subr.bf16.mxu0 %v1548
    %2962 = vmatpush2.bf16.msra.mxu0 %v1547
    %2963 = vmatprep.subr.bf16.mxu0 %v1540
    %2964 = vmatpush2.bf16.msra.mxu0 %v1539
    %2965 = vmatprep.subr.bf16.mxu0 %v1532
    %2966 = vmatpush2.bf16.msra.mxu0 %v1531
    %2967 = vmatprep.subr.bf16.mxu0 %v1524
    %2968 = vmatpush2.bf16.msra.mxu0 %v1523
    %2969 = vmatprep.subr.bf16.mxu0 %v1516
    %2970 = vmatpush2.bf16.msra.mxu0 %v1515
    %2971 = vmatprep.subr.bf16.mxu0 %v1508
    %2972 = vmatpush2.bf16.msra.mxu0 %v1507
    %2973 = vmatprep.subr.bf16.mxu0 %v1500
    %2974 = vmatpush2.bf16.msra.mxu0 %v1499
    %2975 = vmatprep.mubr.bf16.mxu0 %v2901
    %2976 = vmatmul.mubr.bf16.gmra.mxu0 %v2900
    %v2977 = vpop.f32.mrf.mxu0
    %v2978 = vadd.f32 0.0, %v2977
    %v2979 = vpop.f32.mrf.mxu0
    %v2980 = vadd.f32 0.0, %v2979
    %v2981 = vpop.f32.mrf.mxu0
    %v2982 = vpop.f32.mrf.mxu0
    %2983 = vdwg.mxu0
    %2984 = vmatprep.subr.bf16.mxu0 %v1494
    %2985 = vmatpush1.bf16.msra.mxu0 %v1493
    %2986 = vmatprep.subr.bf16.mxu0 %v1486
    %2987 = vmatpush1.bf16.msra.mxu0 %v1485
    %2988 = vmatprep.subr.bf16.mxu0 %v1478
    %2989 = vmatpush1.bf16.msra.mxu0 %v1477
    %2990 = vmatprep.subr.bf16.mxu0 %v1470
    %2991 = vmatpush1.bf16.msra.mxu0 %v1469
    %2992 = vmatprep.subr.bf16.mxu0 %v1462
    %2993 = vmatpush1.bf16.msra.mxu0 %v1461
    %2994 = vmatprep.subr.bf16.mxu0 %v1454
    %2995 = vmatpush1.bf16.msra.mxu0 %v1453
    %2996 = vmatprep.subr.bf16.mxu0 %v1446
    %2997 = vmatpush1.bf16.msra.mxu0 %v1445
    %2998 = vmatprep.subr.bf16.mxu0 %v1438
    %2999 = vmatpush1.bf16.msra.mxu0 %v1437
    %3000 = vmatprep.subr.bf16.mxu0 %v1558
    %3001 = vmatpush2.bf16.msra.mxu0 %v1557
    %3002 = vmatprep.subr.bf16.mxu0 %v1550
    %3003 = vmatpush2.bf16.msra.mxu0 %v1549
    %3004 = vmatprep.subr.bf16.mxu0 %v1542
    %3005 = vmatpush2.bf16.msra.mxu0 %v1541
    %3006 = vmatprep.subr.bf16.mxu0 %v1534
    %3007 = vmatpush2.bf16.msra.mxu0 %v1533
    %3008 = vmatprep.subr.bf16.mxu0 %v1526
    %3009 = vmatpush2.bf16.msra.mxu0 %v1525
    %3010 = vmatprep.subr.bf16.mxu0 %v1518
    %3011 = vmatpush2.bf16.msra.mxu0 %v1517
    %3012 = vmatprep.subr.bf16.mxu0 %v1510
    %3013 = vmatpush2.bf16.msra.mxu0 %v1509
    %3014 = vmatprep.subr.bf16.mxu0 %v1502
    %3015 = vmatpush2.bf16.msra.mxu0 %v1501
    %3016 = vmatprep.mubr.bf16.mxu0 %v2901
    %3017 = vmatmul.mubr.bf16.gmra.mxu0 %v2900
    %v3018 = vpop.f32.mrf.mxu0
    %v3019 = vadd.f32 0.0, %v3018
    %v3020 = vpop.f32.mrf.mxu0
    %v3021 = vadd.f32 0.0, %v3020
    %v3022 = vpop.f32.mrf.mxu0
    %v3023 = vpop.f32.mrf.mxu0
    %3024 = vdwg.mxu0
    %3025 = vmatprep.subr.bf16.mxu0 %v1496
    %3026 = vmatpush1.bf16.msra.mxu0 %v1495
    %3027 = vmatprep.subr.bf16.mxu0 %v1488
    %3028 = vmatpush1.bf16.msra.mxu0 %v1487
    %3029 = vmatprep.subr.bf16.mxu0 %v1480
    %3030 = vmatpush1.bf16.msra.mxu0 %v1479
    %3031 = vmatprep.subr.bf16.mxu0 %v1472
    %3032 = vmatpush1.bf16.msra.mxu0 %v1471
    %3033 = vmatprep.subr.bf16.mxu0 %v1464
    %3034 = vmatpush1.bf16.msra.mxu0 %v1463
    %3035 = vmatprep.subr.bf16.mxu0 %v1456
    %3036 = vmatpush1.bf16.msra.mxu0 %v1455
    %3037 = vmatprep.subr.bf16.mxu0 %v1448
    %3038 = vmatpush1.bf16.msra.mxu0 %v1447
    %3039 = vmatprep.subr.bf16.mxu0 %v1440
    %3040 = vmatpush1.bf16.msra.mxu0 %v1439
    %3041 = vmatprep.subr.bf16.mxu0 %v1560
    %3042 = vmatpush2.bf16.msra.mxu0 %v1559
    %3043 = vmatprep.subr.bf16.mxu0 %v1552
    %3044 = vmatpush2.bf16.msra.mxu0 %v1551
    %3045 = vmatprep.subr.bf16.mxu0 %v1544
    %3046 = vmatpush2.bf16.msra.mxu0 %v1543
    %3047 = vmatprep.subr.bf16.mxu0 %v1536
    %3048 = vmatpush2.bf16.msra.mxu0 %v1535
    %3049 = vmatprep.subr.bf16.mxu0 %v1528
    %3050 = vmatpush2.bf16.msra.mxu0 %v1527
    %3051 = vmatprep.subr.bf16.mxu0 %v1520
    %3052 = vmatpush2.bf16.msra.mxu0 %v1519
    %3053 = vmatprep.subr.bf16.mxu0 %v1512
    %3054 = vmatpush2.bf16.msra.mxu0 %v1511
    %3055 = vmatprep.subr.bf16.mxu0 %v1504
    %3056 = vmatpush2.bf16.msra.mxu0 %v1503
    %3057 = vmatprep.mubr.bf16.mxu0 %v2901
    %3058 = vmatmul.mubr.bf16.gmra.mxu0 %v2900
    %v3059 = vpop.f32.mrf.mxu0
    %v3060 = vadd.f32 0.0, %v3059
    %v3061 = vpop.f32.mrf.mxu0
    %v3062 = vadd.f32 0.0, %v3061
    %v3063 = vpop.f32.mrf.mxu0
    %v3064 = vpop.f32.mrf.mxu0
    %3065 = vdwg.mxu0
    %s3066 = smul.addr %s2350, 8
    %s3067 = scalar_lea.vmem [#allocation2], %s3066
    %v3068 = vld [vmem:[%s3067] sm:$0xff]
    %v3069 = vld [vmem:[%s3067 + $0x8] sm:$0xff]
    %v3070 = vld [vmem:[%s3067 + $0x10] sm:$0xff]
    %v3071 = vld [vmem:[%s3067 + $0x18] sm:$0xff]
    %v3072 = vadd.f32 %v3068, %v2937
    %v3073 = vadd.f32 %v3069, %v2939
    %v3074 = vadd.f32 %v3070, %v2978
    %v3075 = vadd.f32 %v3071, %v2980
    %s3076 = smul.addr %s2339, 8
    %s3077 = scalar_lea.vmem [#allocation3], %s3076
    %v3078 = vld [vmem:[%s3077] sm:$0xff]
    %v3079 = vld [vmem:[%s3077 + $0x8] sm:$0xff]
    %v3080 = vld [vmem:[%s3077 + $0x10] sm:$0xff]
    %v3081 = vld [vmem:[%s3077 + $0x18] sm:$0xff]
    %v3082 = vadd.f32 %v3078, %v3019
    %v3083 = vadd.f32 %v3079, %v3021
    %v3084 = vadd.f32 %v3080, %v3060
    %v3085 = vadd.f32 %v3081, %v3062
    %v3086 = vxor.u32 %v3072, 2147483648
    %v3087 = vmul.f32 %v3086, 1.442695
    %v3088 = vpow.pop %v3087
    %v3089 = vadd.f32 %v3088, 1.0
    %v3090 = vrcp.pop %v3089
    %v3091 = vmul.f32 1.0, %v3090
    %v3092 = vxor.u32 %v3073, 2147483648
    %v3093 = vmul.f32 %v3092, 1.442695
    %v3094 = vpow.pop %v3093
    %v3095 = vadd.f32 %v3094, 1.0
    %v3096 = vrcp.pop %v3095
    %v3097 = vmul.f32 1.0, %v3096
    %v3098 = vtanh.pop %v3074
    %v3099 = vxor.u32 %v3075, 2147483648
    %v3100 = vmul.f32 %v3099, 1.442695
    %v3101 = vpow.pop %v3100
    %v3102 = vadd.f32 %v3101, 1.0
    %v3103 = vrcp.pop %v3102
    %v3104 = vmul.f32 1.0, %v3103
    %v3105 = vmul.f32 %v3097, %v2866
    %v3106 = vmul.f32 %v3091, %v3098
    %v3107 = vadd.f32 %v3105, %v3106
    %v3108 = vtanh.pop %v3107
    %v3109 = vmul.f32 %v3104, %v3108
    %v3110 = vxor.u32 %v3082, 2147483648
    %v3111 = vmul.f32 %v3110, 1.442695
    %v3112 = vpow.pop %v3111
    %v3113 = vadd.f32 %v3112, 1.0
    %v3114 = vrcp.pop %v3113
    %v3115 = vmul.f32 1.0, %v3114
    %v3116 = vxor.u32 %v3083, 2147483648
    %v3117 = vmul.f32 %v3116, 1.442695
    %v3118 = vpow.pop %v3117
    %v3119 = vadd.f32 %v3118, 1.0
    %v3120 = vrcp.pop %v3119
    %v3121 = vmul.f32 1.0, %v3120
    %v3122 = vtanh.pop %v3084
    %v3123 = vxor.u32 %v3085, 2147483648
    %v3124 = vmul.f32 %v3123, 1.442695
    %v3125 = vpow.pop %v3124
    %v3126 = vadd.f32 %v3125, 1.0
    %v3127 = vrcp.pop %v3126
    %v3128 = vmul.f32 1.0, %v3127
    %v3129 = vmul.f32 %v3121, %v2890
    %v3130 = vmul.f32 %v3115, %v3122
    %v3131 = vadd.f32 %v3129, %v3130
    %v3132 = vtanh.pop %v3131
    %v3133 = vmul.f32 %v3128, %v3132
    %vm3134 = vcmp.eq.s32.totalorder %v919, 5
    %v3135 = vsel %vm3134, 1, 0
    %3136 = vset.pattern.permute.xlu0 0
    %3137 = vperm.xlu0 %3136, %v3135
    %v3138 = vpop.permute.xlu0 %3137
    %vm3139 = vcmp.eq.s32.totalorder %v3138, 1
    %v3140 = vsel %vm3139, %v3109, %v2899
    %v3141 = vpack.c.bf16 %v3109, %v3109
    %v3142 = vpack.c.bf16 %v3133, %v3133
    %3143 = vmatprep.subr.bf16.mxu0 %v1490
    %3144 = vmatpush1.bf16.msra.mxu0 %v1489
    %3145 = vmatprep.subr.bf16.mxu0 %v1482
    %3146 = vmatpush1.bf16.msra.mxu0 %v1481
    %3147 = vmatprep.subr.bf16.mxu0 %v1474
    %3148 = vmatpush1.bf16.msra.mxu0 %v1473
    %3149 = vmatprep.subr.bf16.mxu0 %v1466
    %3150 = vmatpush1.bf16.msra.mxu0 %v1465
    %3151 = vmatprep.subr.bf16.mxu0 %v1458
    %3152 = vmatpush1.bf16.msra.mxu0 %v1457
    %3153 = vmatprep.subr.bf16.mxu0 %v1450
    %3154 = vmatpush1.bf16.msra.mxu0 %v1449
    %3155 = vmatprep.subr.bf16.mxu0 %v1442
    %3156 = vmatpush1.bf16.msra.mxu0 %v1441
    %3157 = vmatprep.subr.bf16.mxu0 %v1434
    %3158 = vmatpush1.bf16.msra.mxu0 %v1433
    %3159 = vmatprep.subr.bf16.mxu0 %v1554
    %3160 = vmatpush2.bf16.msra.mxu0 %v1553
    %3161 = vmatprep.subr.bf16.mxu0 %v1546
    %3162 = vmatpush2.bf16.msra.mxu0 %v1545
    %3163 = vmatprep.subr.bf16.mxu0 %v1538
    %3164 = vmatpush2.bf16.msra.mxu0 %v1537
    %3165 = vmatprep.subr.bf16.mxu0 %v1530
    %3166 = vmatpush2.bf16.msra.mxu0 %v1529
    %3167 = vmatprep.subr.bf16.mxu0 %v1522
    %3168 = vmatpush2.bf16.msra.mxu0 %v1521
    %3169 = vmatprep.subr.bf16.mxu0 %v1514
    %3170 = vmatpush2.bf16.msra.mxu0 %v1513
    %3171 = vmatprep.subr.bf16.mxu0 %v1506
    %3172 = vmatpush2.bf16.msra.mxu0 %v1505
    %3173 = vmatprep.subr.bf16.mxu0 %v1498
    %3174 = vmatpush2.bf16.msra.mxu0 %v1497
    %3175 = vmatprep.mubr.bf16.mxu0 %v3142
    %3176 = vmatmul.mubr.bf16.gmra.mxu0 %v3141
    %v3177 = vpop.f32.mrf.mxu0
    %v3178 = vadd.f32 0.0, %v3177
    %v3179 = vpop.f32.mrf.mxu0
    %v3180 = vadd.f32 0.0, %v3179
    %v3181 = vpop.f32.mrf.mxu0
    %v3182 = vpop.f32.mrf.mxu0
    %3183 = vdwg.mxu0
    %3184 = vmatprep.subr.bf16.mxu0 %v1492
    %3185 = vmatpush1.bf16.msra.mxu0 %v1491
    %3186 = vmatprep.subr.bf16.mxu0 %v1484
    %3187 = vmatpush1.bf16.msra.mxu0 %v1483
    %3188 = vmatprep.subr.bf16.mxu0 %v1476
    %3189 = vmatpush1.bf16.msra.mxu0 %v1475
    %3190 = vmatprep.subr.bf16.mxu0 %v1468
    %3191 = vmatpush1.bf16.msra.mxu0 %v1467
    %3192 = vmatprep.subr.bf16.mxu0 %v1460
    %3193 = vmatpush1.bf16.msra.mxu0 %v1459
    %3194 = vmatprep.subr.bf16.mxu0 %v1452
    %3195 = vmatpush1.bf16.msra.mxu0 %v1451
    %3196 = vmatprep.subr.bf16.mxu0 %v1444
    %3197 = vmatpush1.bf16.msra.mxu0 %v1443
    %3198 = vmatprep.subr.bf16.mxu0 %v1436
    %3199 = vmatpush1.bf16.msra.mxu0 %v1435
    %3200 = vmatprep.subr.bf16.mxu0 %v1556
    %3201 = vmatpush2.bf16.msra.mxu0 %v1555
    %3202 = vmatprep.subr.bf16.mxu0 %v1548
    %3203 = vmatpush2.bf16.msra.mxu0 %v1547
    %3204 = vmatprep.subr.bf16.mxu0 %v1540
    %3205 = vmatpush2.bf16.msra.mxu0 %v1539
    %3206 = vmatprep.subr.bf16.mxu0 %v1532
    %3207 = vmatpush2.bf16.msra.mxu0 %v1531
    %3208 = vmatprep.subr.bf16.mxu0 %v1524
    %3209 = vmatpush2.bf16.msra.mxu0 %v1523
    %3210 = vmatprep.subr.bf16.mxu0 %v1516
    %3211 = vmatpush2.bf16.msra.mxu0 %v1515
    %3212 = vmatprep.subr.bf16.mxu0 %v1508
    %3213 = vmatpush2.bf16.msra.mxu0 %v1507
    %3214 = vmatprep.subr.bf16.mxu0 %v1500
    %3215 = vmatpush2.bf16.msra.mxu0 %v1499
    %3216 = vmatprep.mubr.bf16.mxu0 %v3142
    %3217 = vmatmul.mubr.bf16.gmra.mxu0 %v3141
    %v3218 = vpop.f32.mrf.mxu0
    %v3219 = vadd.f32 0.0, %v3218
    %v3220 = vpop.f32.mrf.mxu0
    %v3221 = vadd.f32 0.0, %v3220
    %v3222 = vpop.f32.mrf.mxu0
    %v3223 = vpop.f32.mrf.mxu0
    %3224 = vdwg.mxu0
    %3225 = vmatprep.subr.bf16.mxu0 %v1494
    %3226 = vmatpush1.bf16.msra.mxu0 %v1493
    %3227 = vmatprep.subr.bf16.mxu0 %v1486
    %3228 = vmatpush1.bf16.msra.mxu0 %v1485
    %3229 = vmatprep.subr.bf16.mxu0 %v1478
    %3230 = vmatpush1.bf16.msra.mxu0 %v1477
    %3231 = vmatprep.subr.bf16.mxu0 %v1470
    %3232 = vmatpush1.bf16.msra.mxu0 %v1469
    %3233 = vmatprep.subr.bf16.mxu0 %v1462
    %3234 = vmatpush1.bf16.msra.mxu0 %v1461
    %3235 = vmatprep.subr.bf16.mxu0 %v1454
    %3236 = vmatpush1.bf16.msra.mxu0 %v1453
    %3237 = vmatprep.subr.bf16.mxu0 %v1446
    %3238 = vmatpush1.bf16.msra.mxu0 %v1445
    %3239 = vmatprep.subr.bf16.mxu0 %v1438
    %3240 = vmatpush1.bf16.msra.mxu0 %v1437
    %3241 = vmatprep.subr.bf16.mxu0 %v1558
    %3242 = vmatpush2.bf16.msra.mxu0 %v1557
    %3243 = vmatprep.subr.bf16.mxu0 %v1550
    %3244 = vmatpush2.bf16.msra.mxu0 %v1549
    %3245 = vmatprep.subr.bf16.mxu0 %v1542
    %3246 = vmatpush2.bf16.msra.mxu0 %v1541
    %3247 = vmatprep.subr.bf16.mxu0 %v1534
    %3248 = vmatpush2.bf16.msra.mxu0 %v1533
    %3249 = vmatprep.subr.bf16.mxu0 %v1526
    %3250 = vmatpush2.bf16.msra.mxu0 %v1525
    %3251 = vmatprep.subr.bf16.mxu0 %v1518
    %3252 = vmatpush2.bf16.msra.mxu0 %v1517
    %3253 = vmatprep.subr.bf16.mxu0 %v1510
    %3254 = vmatpush2.bf16.msra.mxu0 %v1509
    %3255 = vmatprep.subr.bf16.mxu0 %v1502
    %3256 = vmatpush2.bf16.msra.mxu0 %v1501
    %3257 = vmatprep.mubr.bf16.mxu0 %v3142
    %3258 = vmatmul.mubr.bf16.gmra.mxu0 %v3141
    %v3259 = vpop.f32.mrf.mxu0
    %v3260 = vadd.f32 0.0, %v3259
    %v3261 = vpop.f32.mrf.mxu0
    %v3262 = vadd.f32 0.0, %v3261
    %v3263 = vpop.f32.mrf.mxu0
    %v3264 = vpop.f32.mrf.mxu0
    %3265 = vdwg.mxu0
    %3266 = vmatprep.subr.bf16.mxu0 %v1496
    %3267 = vmatpush1.bf16.msra.mxu0 %v1495
    %3268 = vmatprep.subr.bf16.mxu0 %v1488
    %3269 = vmatpush1.bf16.msra.mxu0 %v1487
    %3270 = vmatprep.subr.bf16.mxu0 %v1480
    %3271 = vmatpush1.bf16.msra.mxu0 %v1479
    %3272 = vmatprep.subr.bf16.mxu0 %v1472
    %3273 = vmatpush1.bf16.msra.mxu0 %v1471
    %3274 = vmatprep.subr.bf16.mxu0 %v1464
    %3275 = vmatpush1.bf16.msra.mxu0 %v1463
    %3276 = vmatprep.subr.bf16.mxu0 %v1456
    %3277 = vmatpush1.bf16.msra.mxu0 %v1455
    %3278 = vmatprep.subr.bf16.mxu0 %v1448
    %3279 = vmatpush1.bf16.msra.mxu0 %v1447
    %3280 = vmatprep.subr.bf16.mxu0 %v1440
    %3281 = vmatpush1.bf16.msra.mxu0 %v1439
    %3282 = vmatprep.subr.bf16.mxu0 %v1560
    %3283 = vmatpush2.bf16.msra.mxu0 %v1559
    %3284 = vmatprep.subr.bf16.mxu0 %v1552
    %3285 = vmatpush2.bf16.msra.mxu0 %v1551
    %3286 = vmatprep.subr.bf16.mxu0 %v1544
    %3287 = vmatpush2.bf16.msra.mxu0 %v1543
    %3288 = vmatprep.subr.bf16.mxu0 %v1536
    %3289 = vmatpush2.bf16.msra.mxu0 %v1535
    %3290 = vmatprep.subr.bf16.mxu0 %v1528
    %3291 = vmatpush2.bf16.msra.mxu0 %v1527
    %3292 = vmatprep.subr.bf16.mxu0 %v1520
    %3293 = vmatpush2.bf16.msra.mxu0 %v1519
    %3294 = vmatprep.subr.bf16.mxu0 %v1512
    %3295 = vmatpush2.bf16.msra.mxu0 %v1511
    %3296 = vmatprep.subr.bf16.mxu0 %v1504
    %3297 = vmatpush2.bf16.msra.mxu0 %v1503
    %3298 = vmatprep.mubr.bf16.mxu0 %v3142
    %3299 = vmatmul.mubr.bf16.gmra.mxu0 %v3141
    %v3300 = vpop.f32.mrf.mxu0
    %v3301 = vadd.f32 0.0, %v3300
    %v3302 = vpop.f32.mrf.mxu0
    %v3303 = vadd.f32 0.0, %v3302
    %v3304 = vpop.f32.mrf.mxu0
    %v3305 = vpop.f32.mrf.mxu0
    %3306 = vdwg.mxu0
    %s3307 = smul.addr %s2107, 8
    %s3308 = scalar_lea.vmem [#allocation2], %s3307
    %v3309 = vld [vmem:[%s3308] sm:$0xff]
    %v3310 = vld [vmem:[%s3308 + $0x8] sm:$0xff]
    %v3311 = vld [vmem:[%s3308 + $0x10] sm:$0xff]
    %v3312 = vld [vmem:[%s3308 + $0x18] sm:$0xff]
    %v3313 = vadd.f32 %v3309, %v3178
    %v3314 = vadd.f32 %v3310, %v3180
    %v3315 = vadd.f32 %v3311, %v3219
    %v3316 = vadd.f32 %v3312, %v3221
    %s3317 = smul.addr %s2096, 8
    %s3318 = scalar_lea.vmem [#allocation3], %s3317
    %v3319 = vld [vmem:[%s3318] sm:$0xff]
    %v3320 = vld [vmem:[%s3318 + $0x8] sm:$0xff]
    %v3321 = vld [vmem:[%s3318 + $0x10] sm:$0xff]
    %v3322 = vld [vmem:[%s3318 + $0x18] sm:$0xff]
    %v3323 = vadd.f32 %v3319, %v3260
    %v3324 = vadd.f32 %v3320, %v3262
    %v3325 = vadd.f32 %v3321, %v3301
    %v3326 = vadd.f32 %v3322, %v3303
    %v3327 = vxor.u32 %v3313, 2147483648
    %v3328 = vmul.f32 %v3327, 1.442695
    %v3329 = vpow.pop %v3328
    %v3330 = vadd.f32 %v3329, 1.0
    %v3331 = vrcp.pop %v3330
    %v3332 = vmul.f32 1.0, %v3331
    %v3333 = vxor.u32 %v3314, 2147483648
    %v3334 = vmul.f32 %v3333, 1.442695
    %v3335 = vpow.pop %v3334
    %v3336 = vadd.f32 %v3335, 1.0
    %v3337 = vrcp.pop %v3336
    %v3338 = vmul.f32 1.0, %v3337
    %v3339 = vtanh.pop %v3315
    %v3340 = vxor.u32 %v3316, 2147483648
    %v3341 = vmul.f32 %v3340, 1.442695
    %v3342 = vpow.pop %v3341
    %v3343 = vadd.f32 %v3342, 1.0
    %v3344 = vrcp.pop %v3343
    %v3345 = vmul.f32 1.0, %v3344
    %v3346 = vmul.f32 %v3338, %v3107
    %v3347 = vmul.f32 %v3332, %v3339
    %v3348 = vadd.f32 %v3346, %v3347
    %v3349 = vtanh.pop %v3348
    %v3350 = vmul.f32 %v3345, %v3349
    %v3351 = vxor.u32 %v3323, 2147483648
    %v3352 = vmul.f32 %v3351, 1.442695
    %v3353 = vpow.pop %v3352
    %v3354 = vadd.f32 %v3353, 1.0
    %v3355 = vrcp.pop %v3354
    %v3356 = vmul.f32 1.0, %v3355
    %v3357 = vxor.u32 %v3324, 2147483648
    %v3358 = vmul.f32 %v3357, 1.442695
    %v3359 = vpow.pop %v3358
    %v3360 = vadd.f32 %v3359, 1.0
    %v3361 = vrcp.pop %v3360
    %v3362 = vmul.f32 1.0, %v3361
    %v3363 = vtanh.pop %v3325
    %v3364 = vxor.u32 %v3326, 2147483648
    %v3365 = vmul.f32 %v3364, 1.442695
    %v3366 = vpow.pop %v3365
    %v3367 = vadd.f32 %v3366, 1.0
    %v3368 = vrcp.pop %v3367
    %v3369 = vmul.f32 1.0, %v3368
    %v3370 = vmul.f32 %v3362, %v3131
    %v3371 = vmul.f32 %v3356, %v3363
    %v3372 = vadd.f32 %v3370, %v3371
    %v3373 = vtanh.pop %v3372
    %v3374 = vmul.f32 %v3369, %v3373
    %vm3375 = vcmp.eq.s32.totalorder %v919, 6
    %v3376 = vsel %vm3375, 1, 0
    %3377 = vset.pattern.permute.xlu0 0
    %3378 = vperm.xlu0 %3377, %v3376
    %v3379 = vpop.permute.xlu0 %3378
    %vm3380 = vcmp.eq.s32.totalorder %v3379, 1
    %v3381 = vsel %vm3380, %v3350, %v3140
    %v3382 = vpack.c.bf16 %v3350, %v3350
    %v3383 = vpack.c.bf16 %v3374, %v3374
    %3384 = vmatprep.subr.bf16.mxu0 %v1490
    %3385 = vmatpush1.bf16.msra.mxu0 %v1489
    %3386 = vmatprep.subr.bf16.mxu0 %v1482
    %3387 = vmatpush1.bf16.msra.mxu0 %v1481
    %3388 = vmatprep.subr.bf16.mxu0 %v1474
    %3389 = vmatpush1.bf16.msra.mxu0 %v1473
    %3390 = vmatprep.subr.bf16.mxu0 %v1466
    %3391 = vmatpush1.bf16.msra.mxu0 %v1465
    %3392 = vmatprep.subr.bf16.mxu0 %v1458
    %3393 = vmatpush1.bf16.msra.mxu0 %v1457
    %3394 = vmatprep.subr.bf16.mxu0 %v1450
    %3395 = vmatpush1.bf16.msra.mxu0 %v1449
    %3396 = vmatprep.subr.bf16.mxu0 %v1442
    %3397 = vmatpush1.bf16.msra.mxu0 %v1441
    %3398 = vmatprep.subr.bf16.mxu0 %v1434
    %3399 = vmatpush1.bf16.msra.mxu0 %v1433
    %3400 = vmatprep.subr.bf16.mxu0 %v1554
    %3401 = vmatpush2.bf16.msra.mxu0 %v1553
    %3402 = vmatprep.subr.bf16.mxu0 %v1546
    %3403 = vmatpush2.bf16.msra.mxu0 %v1545
    %3404 = vmatprep.subr.bf16.mxu0 %v1538
    %3405 = vmatpush2.bf16.msra.mxu0 %v1537
    %3406 = vmatprep.subr.bf16.mxu0 %v1530
    %3407 = vmatpush2.bf16.msra.mxu0 %v1529
    %3408 = vmatprep.subr.bf16.mxu0 %v1522
    %3409 = vmatpush2.bf16.msra.mxu0 %v1521
    %3410 = vmatprep.subr.bf16.mxu0 %v1514
    %3411 = vmatpush2.bf16.msra.mxu0 %v1513
    %3412 = vmatprep.subr.bf16.mxu0 %v1506
    %3413 = vmatpush2.bf16.msra.mxu0 %v1505
    %3414 = vmatprep.subr.bf16.mxu0 %v1498
    %3415 = vmatpush2.bf16.msra.mxu0 %v1497
    %3416 = vmatprep.mubr.bf16.mxu0 %v3383
    %3417 = vmatmul.mubr.bf16.gmra.mxu0 %v3382
    %v3418 = vpop.f32.mrf.mxu0
    %v3419 = vadd.f32 0.0, %v3418
    %v3420 = vpop.f32.mrf.mxu0
    %v3421 = vadd.f32 0.0, %v3420
    %v3422 = vpop.f32.mrf.mxu0
    %v3423 = vpop.f32.mrf.mxu0
    %3424 = vdwg.mxu0
    %3425 = vmatprep.subr.bf16.mxu0 %v1492
    %3426 = vmatpush1.bf16.msra.mxu0 %v1491
    %3427 = vmatprep.subr.bf16.mxu0 %v1484
    %3428 = vmatpush1.bf16.msra.mxu0 %v1483
    %3429 = vmatprep.subr.bf16.mxu0 %v1476
    %3430 = vmatpush1.bf16.msra.mxu0 %v1475
    %3431 = vmatprep.subr.bf16.mxu0 %v1468
    %3432 = vmatpush1.bf16.msra.mxu0 %v1467
    %3433 = vmatprep.subr.bf16.mxu0 %v1460
    %3434 = vmatpush1.bf16.msra.mxu0 %v1459
    %3435 = vmatprep.subr.bf16.mxu0 %v1452
    %3436 = vmatpush1.bf16.msra.mxu0 %v1451
    %3437 = vmatprep.subr.bf16.mxu0 %v1444
    %3438 = vmatpush1.bf16.msra.mxu0 %v1443
    %3439 = vmatprep.subr.bf16.mxu0 %v1436
    %3440 = vmatpush1.bf16.msra.mxu0 %v1435
    %3441 = vmatprep.subr.bf16.mxu0 %v1556
    %3442 = vmatpush2.bf16.msra.mxu0 %v1555
    %3443 = vmatprep.subr.bf16.mxu0 %v1548
    %3444 = vmatpush2.bf16.msra.mxu0 %v1547
    %3445 = vmatprep.subr.bf16.mxu0 %v1540
    %3446 = vmatpush2.bf16.msra.mxu0 %v1539
    %3447 = vmatprep.subr.bf16.mxu0 %v1532
    %3448 = vmatpush2.bf16.msra.mxu0 %v1531
    %3449 = vmatprep.subr.bf16.mxu0 %v1524
    %3450 = vmatpush2.bf16.msra.mxu0 %v1523
    %3451 = vmatprep.subr.bf16.mxu0 %v1516
    %3452 = vmatpush2.bf16.msra.mxu0 %v1515
    %3453 = vmatprep.subr.bf16.mxu0 %v1508
    %3454 = vmatpush2.bf16.msra.mxu0 %v1507
    %3455 = vmatprep.subr.bf16.mxu0 %v1500
    %3456 = vmatpush2.bf16.msra.mxu0 %v1499
    %3457 = vmatprep.mubr.bf16.mxu0 %v3383
    %3458 = vmatmul.mubr.bf16.gmra.mxu0 %v3382
    %v3459 = vpop.f32.mrf.mxu0
    %v3460 = vadd.f32 0.0, %v3459
    %v3461 = vpop.f32.mrf.mxu0
    %v3462 = vadd.f32 0.0, %v3461
    %v3463 = vpop.f32.mrf.mxu0
    %v3464 = vpop.f32.mrf.mxu0
    %3465 = vdwg.mxu0
    %3466 = vmatprep.subr.bf16.mxu0 %v1494
    %3467 = vmatpush1.bf16.msra.mxu0 %v1493
    %3468 = vmatprep.subr.bf16.mxu0 %v1486
    %3469 = vmatpush1.bf16.msra.mxu0 %v1485
    %3470 = vmatprep.subr.bf16.mxu0 %v1478
    %3471 = vmatpush1.bf16.msra.mxu0 %v1477
    %3472 = vmatprep.subr.bf16.mxu0 %v1470
    %3473 = vmatpush1.bf16.msra.mxu0 %v1469
    %3474 = vmatprep.subr.bf16.mxu0 %v1462
    %3475 = vmatpush1.bf16.msra.mxu0 %v1461
    %3476 = vmatprep.subr.bf16.mxu0 %v1454
    %3477 = vmatpush1.bf16.msra.mxu0 %v1453
    %3478 = vmatprep.subr.bf16.mxu0 %v1446
    %3479 = vmatpush1.bf16.msra.mxu0 %v1445
    %3480 = vmatprep.subr.bf16.mxu0 %v1438
    %3481 = vmatpush1.bf16.msra.mxu0 %v1437
    %3482 = vmatprep.subr.bf16.mxu0 %v1558
    %3483 = vmatpush2.bf16.msra.mxu0 %v1557
    %3484 = vmatprep.subr.bf16.mxu0 %v1550
    %3485 = vmatpush2.bf16.msra.mxu0 %v1549
    %3486 = vmatprep.subr.bf16.mxu0 %v1542
    %3487 = vmatpush2.bf16.msra.mxu0 %v1541
    %3488 = vmatprep.subr.bf16.mxu0 %v1534
    %3489 = vmatpush2.bf16.msra.mxu0 %v1533
    %3490 = vmatprep.subr.bf16.mxu0 %v1526
    %3491 = vmatpush2.bf16.msra.mxu0 %v1525
    %3492 = vmatprep.subr.bf16.mxu0 %v1518
    %3493 = vmatpush2.bf16.msra.mxu0 %v1517
    %3494 = vmatprep.subr.bf16.mxu0 %v1510
    %3495 = vmatpush2.bf16.msra.mxu0 %v1509
    %3496 = vmatprep.subr.bf16.mxu0 %v1502
    %3497 = vmatpush2.bf16.msra.mxu0 %v1501
    %3498 = vmatprep.mubr.bf16.mxu0 %v3383
    %3499 = vmatmul.mubr.bf16.gmra.mxu0 %v3382
    %v3500 = vpop.f32.mrf.mxu0
    %v3501 = vadd.f32 0.0, %v3500
    %v3502 = vpop.f32.mrf.mxu0
    %v3503 = vadd.f32 0.0, %v3502
    %v3504 = vpop.f32.mrf.mxu0
    %v3505 = vpop.f32.mrf.mxu0
    %3506 = vdwg.mxu0
    %3507 = vmatprep.subr.bf16.mxu0 %v1496
    %3508 = vmatpush1.bf16.msra.mxu0 %v1495
    %3509 = vmatprep.subr.bf16.mxu0 %v1488
    %3510 = vmatpush1.bf16.msra.mxu0 %v1487
    %3511 = vmatprep.subr.bf16.mxu0 %v1480
    %3512 = vmatpush1.bf16.msra.mxu0 %v1479
    %3513 = vmatprep.subr.bf16.mxu0 %v1472
    %3514 = vmatpush1.bf16.msra.mxu0 %v1471
    %3515 = vmatprep.subr.bf16.mxu0 %v1464
    %3516 = vmatpush1.bf16.msra.mxu0 %v1463
    %3517 = vmatprep.subr.bf16.mxu0 %v1456
    %3518 = vmatpush1.bf16.msra.mxu0 %v1455
    %3519 = vmatprep.subr.bf16.mxu0 %v1448
    %3520 = vmatpush1.bf16.msra.mxu0 %v1447
    %3521 = vmatprep.subr.bf16.mxu0 %v1440
    %3522 = vmatpush1.bf16.msra.mxu0 %v1439
    %3523 = vmatprep.subr.bf16.mxu0 %v1560
    %3524 = vmatpush2.bf16.msra.mxu0 %v1559
    %3525 = vmatprep.subr.bf16.mxu0 %v1552
    %3526 = vmatpush2.bf16.msra.mxu0 %v1551
    %3527 = vmatprep.subr.bf16.mxu0 %v1544
    %3528 = vmatpush2.bf16.msra.mxu0 %v1543
    %3529 = vmatprep.subr.bf16.mxu0 %v1536
    %3530 = vmatpush2.bf16.msra.mxu0 %v1535
    %3531 = vmatprep.subr.bf16.mxu0 %v1528
    %3532 = vmatpush2.bf16.msra.mxu0 %v1527
    %3533 = vmatprep.subr.bf16.mxu0 %v1520
    %3534 = vmatpush2.bf16.msra.mxu0 %v1519
    %3535 = vmatprep.subr.bf16.mxu0 %v1512
    %3536 = vmatpush2.bf16.msra.mxu0 %v1511
    %3537 = vmatprep.subr.bf16.mxu0 %v1504
    %3538 = vmatpush2.bf16.msra.mxu0 %v1503
    %3539 = vmatprep.mubr.bf16.mxu0 %v3383
    %3540 = vmatmul.mubr.bf16.gmra.mxu0 %v3382
    %v3541 = vpop.f32.mrf.mxu0
    %v3542 = vadd.f32 0.0, %v3541
    %v3543 = vpop.f32.mrf.mxu0
    %v3544 = vadd.f32 0.0, %v3543
    %v3545 = vpop.f32.mrf.mxu0
    %v3546 = vpop.f32.mrf.mxu0
    %3547 = vdwg.mxu0
    %s3548 = smul.addr %s1864, 8
    %s3549 = scalar_lea.vmem [#allocation2], %s3548
    %v3550 = vld [vmem:[%s3549] sm:$0xff]
    %v3551 = vld [vmem:[%s3549 + $0x8] sm:$0xff]
    %v3552 = vld [vmem:[%s3549 + $0x10] sm:$0xff]
    %v3553 = vld [vmem:[%s3549 + $0x18] sm:$0xff]
    %v3554 = vadd.f32 %v3550, %v3419
    %v3555 = vadd.f32 %v3551, %v3421
    %v3556 = vadd.f32 %v3552, %v3460
    %v3557 = vadd.f32 %v3553, %v3462
    %s3558 = smul.addr %s1853, 8
    %s3559 = scalar_lea.vmem [#allocation3], %s3558
    %v3560 = vld [vmem:[%s3559] sm:$0xff]
    %v3561 = vld [vmem:[%s3559 + $0x8] sm:$0xff]
    %v3562 = vld [vmem:[%s3559 + $0x10] sm:$0xff]
    %v3563 = vld [vmem:[%s3559 + $0x18] sm:$0xff]
    %v3564 = vadd.f32 %v3560, %v3501
    %v3565 = vadd.f32 %v3561, %v3503
    %v3566 = vadd.f32 %v3562, %v3542
    %v3567 = vadd.f32 %v3563, %v3544
    %v3568 = vxor.u32 %v3554, 2147483648
    %v3569 = vmul.f32 %v3568, 1.442695
    %v3570 = vpow.pop %v3569
    %v3571 = vadd.f32 %v3570, 1.0
    %v3572 = vrcp.pop %v3571
    %v3573 = vmul.f32 1.0, %v3572
    %v3574 = vxor.u32 %v3555, 2147483648
    %v3575 = vmul.f32 %v3574, 1.442695
    %v3576 = vpow.pop %v3575
    %v3577 = vadd.f32 %v3576, 1.0
    %v3578 = vrcp.pop %v3577
    %v3579 = vmul.f32 1.0, %v3578
    %v3580 = vtanh.pop %v3556
    %v3581 = vxor.u32 %v3557, 2147483648
    %v3582 = vmul.f32 %v3581, 1.442695
    %v3583 = vpow.pop %v3582
    %v3584 = vadd.f32 %v3583, 1.0
    %v3585 = vrcp.pop %v3584
    %v3586 = vmul.f32 1.0, %v3585
    %v3587 = vmul.f32 %v3579, %v3348
    %v3588 = vmul.f32 %v3573, %v3580
    %v3589 = vadd.f32 %v3587, %v3588
    %v3590 = vtanh.pop %v3589
    %v3591 = vmul.f32 %v3586, %v3590
    %v3592 = vxor.u32 %v3564, 2147483648
    %v3593 = vmul.f32 %v3592, 1.442695
    %v3594 = vpow.pop %v3593
    %v3595 = vadd.f32 %v3594, 1.0
    %v3596 = vrcp.pop %v3595
    %v3597 = vmul.f32 1.0, %v3596
    %v3598 = vxor.u32 %v3565, 2147483648
    %v3599 = vmul.f32 %v3598, 1.442695
    %v3600 = vpow.pop %v3599
    %v3601 = vadd.f32 %v3600, 1.0
    %v3602 = vrcp.pop %v3601
    %v3603 = vmul.f32 1.0, %v3602
    %v3604 = vtanh.pop %v3566
    %v3605 = vxor.u32 %v3567, 2147483648
    %v3606 = vmul.f32 %v3605, 1.442695
    %v3607 = vpow.pop %v3606
    %v3608 = vadd.f32 %v3607, 1.0
    %v3609 = vrcp.pop %v3608
    %v3610 = vmul.f32 1.0, %v3609
    %v3611 = vmul.f32 %v3603, %v3372
    %v3612 = vmul.f32 %v3597, %v3604
    %v3613 = vadd.f32 %v3611, %v3612
    %v3614 = vtanh.pop %v3613
    %v3615 = vmul.f32 %v3610, %v3614
    %vm3616 = vcmp.eq.s32.totalorder %v919, 7
    %v3617 = vsel %vm3616, 1, 0
    %3618 = vset.pattern.permute.xlu0 0
    %3619 = vperm.xlu0 %3618, %v3617
    %v3620 = vpop.permute.xlu0 %3619
    %vm3621 = vcmp.eq.s32.totalorder %v3620, 1
    %v3622 = vsel %vm3621, %v3591, %v3381
    %v3623 = vpack.c.bf16 %v3622, %v3622
    %v3624 = vpack.c.bf16 %v3615, %v3615
    %v3625 = vld [vmem:[#allocation12] sm:$0xf]
    %v3626 = vld [vmem:[#allocation12 + $0x4] sm:$0xf]
    %v3627 = vld [vmem:[#allocation12 + $0x8] sm:$0xf]
    %v3628 = vld [vmem:[#allocation12 + $0xc] sm:$0xf]
    %v3629 = vld [vmem:[#allocation12 + $0x10] sm:$0xf]
    %v3630 = vld [vmem:[#allocation12 + $0x14] sm:$0xf]
    %v3631 = vld [vmem:[#allocation12 + $0x18] sm:$0xf]
    %v3632 = vld [vmem:[#allocation12 + $0x1c] sm:$0xf]
    %v3633 = vld [vmem:[#allocation12 + $0x20] sm:$0xf]
    %v3634 = vld [vmem:[#allocation12 + $0x24] sm:$0xf]
    %v3635 = vld [vmem:[#allocation12 + $0x28] sm:$0xf]
    %v3636 = vld [vmem:[#allocation12 + $0x2c] sm:$0xf]
    %v3637 = vld [vmem:[#allocation12 + $0x30] sm:$0xf]
    %v3638 = vld [vmem:[#allocation12 + $0x34] sm:$0xf]
    %v3639 = vld [vmem:[#allocation12 + $0x38] sm:$0xf]
    %v3640 = vld [vmem:[#allocation12 + $0x3c] sm:$0xf]
    %v3641 = vld [vmem:[#allocation12 + $0x40] sm:$0xf]
    %v3642 = vld [vmem:[#allocation12 + $0x44] sm:$0xf]
    %v3643 = vld [vmem:[#allocation12 + $0x48] sm:$0xf]
    %v3644 = vld [vmem:[#allocation12 + $0x4c] sm:$0xf]
    %v3645 = vld [vmem:[#allocation12 + $0x50] sm:$0xf]
    %v3646 = vld [vmem:[#allocation12 + $0x54] sm:$0xf]
    %v3647 = vld [vmem:[#allocation12 + $0x58] sm:$0xf]
    %v3648 = vld [vmem:[#allocation12 + $0x5c] sm:$0xf]
    %v3649 = vld [vmem:[#allocation12 + $0x60] sm:$0xf]
    %v3650 = vld [vmem:[#allocation12 + $0x64] sm:$0xf]
    %v3651 = vld [vmem:[#allocation12 + $0x68] sm:$0xf]
    %v3652 = vld [vmem:[#allocation12 + $0x6c] sm:$0xf]
    %v3653 = vld [vmem:[#allocation12 + $0x70] sm:$0xf]
    %v3654 = vld [vmem:[#allocation12 + $0x74] sm:$0xf]
    %v3655 = vld [vmem:[#allocation12 + $0x78] sm:$0xf]
    %v3656 = vld [vmem:[#allocation12 + $0x7c] sm:$0xf]
    %v3657 = vld [vmem:[%s8] sm:$0x1]
    %v3659 = vlaneseq
    %v3660 = vshrl.u32 %v3659, 7
    %v3661 = vsub.s32 0, %v3660
    %v3662 = vrot.slane %v3657, %v3661
    %v3696 = vunpack.c.l.b16 %v3625
    %v3697 = vunpack.c.l.b16 %v3626
    %v3698 = vunpack.c.l.b16 %v3627
    %v3699 = vunpack.c.l.b16 %v3628
    %v3700 = vunpack.c.l.b16 %v3629
    %v3701 = vunpack.c.l.b16 %v3630
    %v3702 = vunpack.c.l.b16 %v3631
    %v3703 = vunpack.c.l.b16 %v3632
    %v3704 = vunpack.c.l.b16 %v3633
    %v3705 = vunpack.c.l.b16 %v3634
    %v3706 = vunpack.c.l.b16 %v3635
    %v3707 = vunpack.c.l.b16 %v3636
    %v3708 = vunpack.c.l.b16 %v3637
    %v3709 = vunpack.c.l.b16 %v3638
    %v3710 = vunpack.c.l.b16 %v3639
    %v3711 = vunpack.c.l.b16 %v3640
    %v3712 = vunpack.c.l.b16 %v3641
    %v3713 = vunpack.c.l.b16 %v3642
    %v3714 = vunpack.c.l.b16 %v3643
    %v3715 = vunpack.c.l.b16 %v3644
    %v3716 = vunpack.c.l.b16 %v3645
    %v3717 = vunpack.c.l.b16 %v3646
    %v3718 = vunpack.c.l.b16 %v3647
    %v3719 = vunpack.c.l.b16 %v3648
    %v3720 = vunpack.c.l.b16 %v3649
    %v3721 = vunpack.c.l.b16 %v3650
    %v3722 = vunpack.c.l.b16 %v3651
    %v3723 = vunpack.c.l.b16 %v3652
    %v3724 = vunpack.c.l.b16 %v3653
    %v3725 = vunpack.c.l.b16 %v3654
    %v3726 = vunpack.c.l.b16 %v3655
    %v3727 = vunpack.c.l.b16 %v3656
    %v3728 = vpack.c.b16 %v3697, %v3696
    %v3729 = vpack.c.b16 %v3699, %v3698
    %v3730 = vpack.c.b16 %v3701, %v3700
    %v3731 = vpack.c.b16 %v3703, %v3702
    %v3732 = vpack.c.b16 %v3705, %v3704
    %v3733 = vpack.c.b16 %v3707, %v3706
    %v3734 = vpack.c.b16 %v3709, %v3708
    %v3735 = vpack.c.b16 %v3711, %v3710
    %v3736 = vpack.c.b16 %v3713, %v3712
    %v3737 = vpack.c.b16 %v3715, %v3714
    %v3738 = vpack.c.b16 %v3717, %v3716
    %v3739 = vpack.c.b16 %v3719, %v3718
    %v3740 = vpack.c.b16 %v3721, %v3720
    %v3741 = vpack.c.b16 %v3723, %v3722
    %v3742 = vpack.c.b16 %v3725, %v3724
    %v3743 = vpack.c.b16 %v3727, %v3726
    %3760 = vmatprep.subr.bf16.mxu0 0
    %3761 = vmatpush1.bf16.msra.mxu0 %v3735
    %3762 = vmatprep.subr.bf16.mxu0 0
    %3763 = vmatpush1.bf16.msra.mxu0 %v3734
    %3764 = vmatprep.subr.bf16.mxu0 0
    %3765 = vmatpush1.bf16.msra.mxu0 %v3733
    %3766 = vmatprep.subr.bf16.mxu0 0
    %3767 = vmatpush1.bf16.msra.mxu0 %v3732
    %3768 = vmatprep.subr.bf16.mxu0 0
    %3769 = vmatpush1.bf16.msra.mxu0 %v3731
    %3770 = vmatprep.subr.bf16.mxu0 0
    %3771 = vmatpush1.bf16.msra.mxu0 %v3730
    %3772 = vmatprep.subr.bf16.mxu0 0
    %3773 = vmatpush1.bf16.msra.mxu0 %v3729
    %3774 = vmatprep.subr.bf16.mxu0 0
    %3775 = vmatpush1.bf16.msra.mxu0 %v3728
    %3776 = vmatprep.subr.bf16.mxu0 0
    %3777 = vmatpush2.bf16.msra.mxu0 %v3743
    %3778 = vmatprep.subr.bf16.mxu0 0
    %3779 = vmatpush2.bf16.msra.mxu0 %v3742
    %3780 = vmatprep.subr.bf16.mxu0 0
    %3781 = vmatpush2.bf16.msra.mxu0 %v3741
    %3782 = vmatprep.subr.bf16.mxu0 0
    %3783 = vmatpush2.bf16.msra.mxu0 %v3740
    %3784 = vmatprep.subr.bf16.mxu0 0
    %3785 = vmatpush2.bf16.msra.mxu0 %v3739
    %3786 = vmatprep.subr.bf16.mxu0 0
    %3787 = vmatpush2.bf16.msra.mxu0 %v3738
    %3788 = vmatprep.subr.bf16.mxu0 0
    %3789 = vmatpush2.bf16.msra.mxu0 %v3737
    %3790 = vmatprep.subr.bf16.mxu0 0
    %3791 = vmatpush2.bf16.msra.mxu0 %v3736
    %3792 = vmatprep.mubr.bf16.mxu0 %v3624
    %3793 = vmatmul.mubr.bf16.gmra.mxu0 %v3623
    %v3794 = vpop.f32.mrf.mxu0
    %v3795 = vadd.f32 %v3662, %v3794
    %v3796 = vpop.f32.mrf.mxu0
    %v3797 = vpop.f32.mrf.mxu0
    %v3798 = vpop.f32.mrf.mxu0
    %3799 = vdwg.mxu0
    %v3800 = vlaneseq
    %v3801 = vand.u32 %v3800, 127
    %vm3802 = vcmp.lt.s32.totalorder %v3801, 4
    %v3803 = vsel %vm3802, %v3795, -1e+30
    %3804 = vmax.xlane.f32.xlu0 %v3803
    %v3805 = vpop.xlane.xlu0 %3804
    %v3806 = vsub.f32 %v3803, %v3805
    %v3807 = vmul.f32 %v3806, 1.442695
    %v3808 = vpow.pop %v3807
    %3809 = vadd.xlane.f32.xlu0 %v3808
    %v3810 = vpop.xlane.xlu0 %3809
    %v3811 = vlog2.pop %v3810
    %v3812 = vmul.f32 %v3811, 0.6931472
    %v3813 = vadd.f32 %v3805, %v3812
    %v3814 = vsub.f32 %v3803, %v3813
    %3815 = vst [vmem:[#allocation13] sm:$0xff] %v3814
    // Predicated region
    $region58: #{tpu_custom_call.1} parent=1 // pred_check
      _
    $region59: #{tpu_custom_call.1} parent=1 // pred_check_branch
      %3817 = sbr.rel (0) target = $region61
    $region60: #{tpu_custom_call.1} parent=1 // pred_region
      %s3819 = ssub.s32 128, 128
      %3820 = vsyncadd [#allocation6], %s3819
      %s3822 = sshll.u32 [#allocation13], 4
      %s3823 = int_to_ptr.vmem [resolvable:$true] %s3822
      %3825 = dma.vmem_to_hbm [thread:$0]  %s3823, 128, %s9, [#allocation6]
    $region61: #{tpu_custom_call.1} parent=1 // pred_fallthru
      _
    // Predicated region
    $region62: #{tpu_custom_call.1} parent=1 // pred_check
      _
    $region63: #{tpu_custom_call.1} parent=1 // pred_check_branch
      %3827 = sbr.rel (0) target = $region65
    $region64: #{tpu_custom_call.1} parent=1 // pred_region
      %3828 = dma.done [#allocation6], 128
    $region65: #{tpu_custom_call.1} parent=1 // pred_fallthru
      _
    %3829 = vsyncpa [#allocation5], 1
    %3830 = vsyncpa [#allocation8], 1
    %3831 = vsyncpa [#allocation11], 1
    %3832 = vsyncpa [#allocation6], 1

</llo_original>
